<compile_context>
chip_gen: v7x
topology: tpu7x:2x2x1
jax: 0.10.0
libtpu: 0.0.40
codegen_flags: <defaults>
</compile_context>

<pallas_src>
import jax
import jax.numpy as jnp
from jax.experimental import pallas as pl
from jax.experimental.pallas import tpu as pltpu


# ----------------------------------------------------------------------------------
# Rationalized Lanczos lgamma:  ser(x) = g0 + sum_j c_j/(x+j)  ==  N(x) / Q(x)
# with Q(x) = prod_{j=1..6}(x+j).  Coefficients expanded once at import time.
# ----------------------------------------------------------------------------------
_G0 = 1.000000000190015
_LANCZOS = (76.18009172947146, -86.50532032941677, 24.01409824083091,
            -1.231739572450155, 0.1208650973866179e-2, -0.5395239384953e-5)


def _lanczos_rational():
    def pmul(a, b):
        out = [0.0] * (len(a) + len(b) - 1)
        for i, ai in enumerate(a):
            for j, bj in enumerate(b):
                out[i + j] += ai * bj
        return out

    q = [1.0]
    for j in range(1, 7):
        q = pmul(q, [float(j), 1.0])           # ascending coeffs of (x + j)
    n = [_G0 * c for c in q]
    for j, cj in enumerate(_LANCZOS, start=1):
        part = [1.0]
        for k in range(1, 7):
            if k != j:
                part = pmul(part, [float(k), 1.0])
        for i, c in enumerate(part):
            n[i] += cj * c
    return tuple(n), tuple(q)


_LN_NUM, _LN_DEN = _lanczos_rational()
_SQRT_2PI = 2.5066282746310005


def _poly_horner(coeffs_ascending, x):
    acc = coeffs_ascending[-1]
    for c in reversed(coeffs_ascending[:-1]):
        acc = acc * x + c
    return acc


def _lgamma_pos(x):
    """Lanczos lgamma for x > 0; rational form: 3 EUP logs, no divides (VALU Horner)."""
    num = _poly_horner(_LN_NUM, x)
    den = _poly_horner(_LN_DEN, x) * x
    tmp = x + 5.5
    return (x + 0.5) * jnp.log(tmp) - tmp + jnp.log(_SQRT_2PI * num) - jnp.log(den)


def _softplus(x):
    return jnp.maximum(x, 0.0) + jnp.log(1.0 + jnp.exp(-jnp.abs(x)))


# ----------------------------------------------------------------------------------
# Fused kernel
# ----------------------------------------------------------------------------------
def proteinvi_kernel(
    # data (batch tile)
    y_ref, eps_z_ref, eps_back_ref,
    # encoder (BN folded): body + fused [mean|logvar] head
    w_e1_ref, b_e1_ref, w_e2_ref, b_e2_ref, w_ez_ref, b_ez_ref,
    # decoder: fused hidden [pb|pf|pm] and fused 4-way heads
    w_dh_ref, b_dh_ref, w_hh_ref, w_hz_ref, b_h_ref,
    # per-protein parameter slab (precomputed transcendentals)
    pvec_ref,
    # outputs
    scalars_ref, z_ref,
):
    f32 = jnp.float32
    bb, P = y_ref.shape
    L = eps_z_ref.shape[-1]

    y = y_ref[...]
    y_log = jnp.log(1.0 + y)                                   # log_variational=True

    # ---------------- EncoderProteinVI (eval mode, BN folded) ----------------
    h1 = jnp.maximum(jnp.dot(y_log, w_e1_ref[...], preferred_element_type=f32)
                     + b_e1_ref[...], 0.0)
    h2 = jnp.maximum(jnp.dot(h1, w_e2_ref[...], preferred_element_type=f32)
                     + b_e2_ref[...], 0.0)
    qz = jnp.dot(h2, w_ez_ref[...], preferred_element_type=f32) + b_ez_ref[...]
    qz_m = qz[:, :L]
    qz_v = jnp.exp(qz[:, L:]) + 1e-4
    untran_z = qz_m + jnp.sqrt(qz_v) * eps_z_ref[...]          # Normal(qz_m,sqrt(qz_v)).rsample
    # z_transformation = softmax over latent dim (latent_distribution == 'ln')
    u = untran_z - jnp.max(untran_z, axis=-1, keepdims=True)
    eu = jnp.exp(u)
    z = eu * pl.reciprocal(jnp.sum(eu, axis=-1, keepdims=True), approx=False)
    z_ref[...] = z

    # ---------------- DecoderproteinVI (fused matmuls) ----------------
    # hdec = [pb | pf | pm]  (one (L,3H) matmul instead of three)
    hdec = jnp.maximum(jnp.dot(z, w_dh_ref[...], preferred_element_type=f32)
                       + b_dh_ref[...], 0.0)
    # heads = [back_alpha | log_back_beta | fore_raw | mixing]   (B, 4P = 128 lanes)
    heads = (jnp.dot(hdec, w_hh_ref[...], preferred_element_type=f32)
             + jnp.dot(z, w_hz_ref[...], preferred_element_type=f32)
             + b_h_ref[...])
    back_alpha = heads[:, 0:P]
    log_back_beta = heads[:, P:2 * P]
    back_beta = jnp.exp(log_back_beta)
    fore_raw = heads[:, 2 * P:3 * P]
    mixing = heads[:, 3 * P:4 * P]

    log_pro_back_mean = back_alpha + back_beta * eps_back_ref[...]   # Normal(...).rsample
    rate_back = jnp.exp(log_pro_back_mean)
    fore_scale = jnp.maximum(fore_raw, 0.0) + 1.0 + 1e-8
    rate_fore = rate_back * fore_scale

    # per-protein parameter rows (precomputed in wrapper)
    pv = pvec_ref[...]
    log_theta = pv[0:1, :]          # = py_r
    theta = pv[1:2, :]              # exp(py_r)
    lg_theta = pv[2:3, :]           # lgamma(theta)
    alpha_prior = pv[3:4, :]
    inv_beta_prior = pv[5:6, :]
    log_beta_prior = pv[6:7, :]

    # ---------------- reconstruction loss: -log_mixture_nb ----------------
    eps = 1e-8
    log_theta_mu1 = jnp.log(theta + rate_back + eps)
    log_theta_mu2 = jnp.log(theta + rate_fore + eps)
    log_rate_fore = jnp.log(rate_fore + eps)
    lg_common = _lgamma_pos(y + theta) - lg_theta - _lgamma_pos(y + 1.0)
    a0 = theta * (log_theta - log_theta_mu1) + y * (log_pro_back_mean - log_theta_mu1)
    b0 = theta * (log_theta - log_theta_mu2) + y * (log_rate_fore - log_theta_mu2) - mixing
    m = jnp.maximum(a0, b0)
    lse = m + jnp.log(jnp.exp(a0 - m) + jnp.exp(b0 - m))
    log_mix_nb = lg_common + lse - _softplus(-mixing)
    recon = jnp.sum(-log_mix_nb, axis=-1, keepdims=True)

    # ---------------- KL(q(z|y) || N(0,1)) ----------------
    kl_z = 0.5 * (qz_v + qz_m * qz_m - 1.0 - jnp.log(qz_v))
    klz = jnp.sum(kl_z, axis=-1, keepdims=True)

    # ---------------- KL(Normal(back_alpha, back_beta) || back_mean_prior) ----------------
    r = back_beta * inv_beta_prior
    d = (back_alpha - alpha_prior) * inv_beta_prior
    # 0.5*(var_ratio + t1 - 1 - log(var_ratio)), log(var_ratio)=2*(log_back_beta-log_beta_prior)
    kl_bp = 0.5 * (r * r + d * d - 1.0) - (log_back_beta - log_beta_prior)
    klbp = jnp.sum(kl_bp, axis=-1, keepdims=True)

    # single merged scalar output (one store, one output pipeline)
    scalars_ref[...] = jnp.concatenate(
        [recon, klz, klbp, jnp.zeros((bb, 5), f32)], axis=-1)


# ----------------------------------------------------------------------------------
# Wrapper: fuses parameters (pure algebra, done once) and calls pallas_call
# ----------------------------------------------------------------------------------
def proteinvi_shared_forward(y, eps_z, eps_back, params, *, block_b=128):
    """Returns (reconst_loss_protein[B], kl_div_z[B], kl_div_back_pro[B], z[B,L])."""
    B, P = y.shape
    L = eps_z.shape[1]
    H = params["w1"].shape[1]
    assert B % block_b == 0 and block_b % 8 == 0
    grid = (B // block_b,)
    f32 = jnp.float32

    # ---- fuse weight heads (exact block concatenation) ----
    w_e1, b_e1 = params["w1"], params["b1"]
    w_e2, b_e2 = params["w2"], params["b2"]
    w_ez = jnp.concatenate([params["wzm"], params["wzv"]], axis=1)        # (H, 2L)
    b_ez = jnp.concatenate([params["bzm"], params["bzv"]], axis=1)        # (1, 2L)
    w_dh = jnp.concatenate([params["wb"], params["wf"], params["wmx"]], axis=1)   # (L, 3H)
    b_dh = jnp.concatenate([params["bb"], params["bf"], params["bmx"]], axis=1)   # (1, 3H)
    zHP = jnp.zeros((H, P), f32)
    w_hh = jnp.concatenate([                                              # (3H, 4P)
        jnp.concatenate([params["wba_h"], params["wbb_h"], zHP, zHP], axis=1),
        jnp.concatenate([zHP, zHP, params["wfs_h"], zHP], axis=1),
        jnp.concatenate([zHP, zHP, zHP, params["wm_h"]], axis=1),
    ], axis=0)
    w_hz = jnp.concatenate([params["wba_z"], params["wbb_z"],
                            params["wfs_z"], params["wm_z"]], axis=1)     # (L, 4P)
    b_h = jnp.concatenate([params["bba"], params["bbb"],
                           params["bfs"], params["bm"]], axis=1)          # (1, 4P)

    # ---- precompute parameter-only transcendentals (exact, once) ----
    py_r = params["py_r"]                       # (1, P) = log theta
    theta = jnp.exp(py_r)
    lg_theta = jax.lax.lgamma(theta)
    alpha_prior = params["alpha_prior"]
    log_beta_prior = params["log_beta_prior"]
    beta_prior = jnp.exp(log_beta_prior)
    inv_beta_prior = 1.0 / beta_prior
    pvec = jnp.concatenate([py_r, theta, lg_theta, alpha_prior, beta_prior,
                            inv_beta_prior, log_beta_prior,
                            jnp.zeros_like(py_r)], axis=0)                # (8, P)

    ordered = [w_e1, b_e1, w_e2, b_e2, w_ez, b_ez, w_dh, b_dh, w_hh, w_hz, b_h, pvec]

    def data_spec(feat):
        return pl.BlockSpec((block_b, feat), lambda i: (i, 0))

    def const_spec(arr):
        return pl.BlockSpec(arr.shape, lambda i: (0, 0))

    in_specs = ([data_spec(P), data_spec(L), data_spec(P)]
                + [const_spec(a) for a in ordered])
    out_specs = [data_spec(8), data_spec(L)]
    out_shape = [jax.ShapeDtypeStruct((B, 8), jnp.float32),
                 jax.ShapeDtypeStruct((B, L), jnp.float32)]

    scalars, z = pl.pallas_call(
        proteinvi_kernel,
        grid=grid,
        in_specs=in_specs,
        out_specs=out_specs,
        out_shape=out_shape,
        compiler_params=pltpu.CompilerParams(dimension_semantics=("parallel",)),
    )(y, eps_z, eps_back, *ordered)
    return scalars[:, 0], scalars[:, 1], scalars[:, 2], z


# ----------------------------------------------------------------------------------
# Deterministic synthetic parameters matching the module's __init__ shapes
# ----------------------------------------------------------------------------------
def init_params(key, P, H, L):
    kit = iter(jax.random.split(key, 32))

    def linear(n_in, n_out):
        bound = float(n_in) ** -0.5                 # torch nn.Linear default init
        w = jax.random.uniform(next(kit), (n_in, n_out), jnp.float32, -bound, bound)
        b = jax.random.uniform(next(kit), (n_out,), jnp.float32, -bound, bound)
        return w, b

    def fold_bn(w, b, eps_bn):
        # eval-mode BatchNorm1d with default params (gamma=1, beta=0, rm=0, rv=1)
        n_out = w.shape[1]
        gamma = jnp.ones((n_out,), jnp.float32)
        beta = jnp.zeros((n_out,), jnp.float32)
        rmean = jnp.zeros((n_out,), jnp.float32)
        rvar = jnp.ones((n_out,), jnp.float32)
        s = gamma / jnp.sqrt(rvar + eps_bn)
        return w * s[None, :], (b - rmean) * s + beta

    row = lambda v: v.reshape(1, -1)

    # EncoderProteinVI
    w1, b1 = fold_bn(*linear(P, H), 1e-3)           # FCLayers: Linear+BN(1e-3)+ReLU+Dropout
    w2, b2 = fold_bn(*linear(H, H), 1e-5)           # z_encoder: Linear+BN+ReLU
    wzm, bzm = linear(H, L)                          # z mean head
    wzv, bzv = linear(H, L)                          # z log-var head

    # DecoderproteinVI
    wb, bb = fold_bn(*linear(L, H), 1e-3)            # py_back_decoder
    wba, bba = linear(H + L, P)                      # back mean log alpha
    wbb, bbb = linear(H + L, P)                      # back mean log beta
    wf, bf = fold_bn(*linear(L, H), 1e-3)            # py_fore_decoder
    wfs, bfs = linear(H + L, P)                      # fore scale
    wmx, bmx = fold_bn(*linear(L, H), 1e-3)          # sigmoid_decoder
    wm, bm = linear(H + L, P)                        # py_background_decoder (mixing)

    alpha_prior = jax.random.normal(next(kit), (P,), jnp.float32)          # background_pro_alpha
    log_beta_prior = jnp.clip(jax.random.normal(next(kit), (P,), jnp.float32), -10.0, 1.0)
    py_r = jnp.ones((P,), jnp.float32)                                     # protein dispersion

    return dict(
        w1=w1, b1=row(b1), w2=w2, b2=row(b2),
        wzm=wzm, bzm=row(bzm), wzv=wzv, bzv=row(bzv),
        wb=wb, bb=row(bb),
        wba_h=wba[:H], wba_z=wba[H:], bba=row(bba),
        wbb_h=wbb[:H], wbb_z=wbb[H:], bbb=row(bbb),
        wf=wf, bf=row(bf),
        wfs_h=wfs[:H], wfs_z=wfs[H:], bfs=row(bfs),
        wmx=wmx, bmx=row(bmx),
        wm_h=wm[:H], wm_z=wm[H:], bm=row(bm),
        py_r=row(py_r), alpha_prior=row(alpha_prior), log_beta_prior=row(log_beta_prior),
    )


if __name__ == "__main__":
    # n_input_proteins = n_output_proteins = 32, n_hidden = 32, n_latent = 16
    # batch = 256, block_b = 128 -> grid of 2 "parallel" steps (both TCs used on v7x)
    B, P, H, L = 256, 32, 32, 16
    key = jax.random.PRNGKey(0)
    kp, ky, kz, kb = jax.random.split(key, 4)

    params = init_params(kp, P, H, L)
    # protein counts (non-negative integers stored as float32)
    y = jnp.floor(10.0 * jax.random.uniform(ky, (B, P), jnp.float32))
    eps_z = jax.random.normal(kz, (B, L), jnp.float32)       # encoder reparam noise
    eps_back = jax.random.normal(kb, (B, P), jnp.float32)    # decoder background reparam noise

    recon, kl_z, kl_bp, z = proteinvi_shared_forward(y, eps_z, eps_back, params, block_b=128)
    jax.block_until_ready((recon, kl_z, kl_bp, z))

    assert recon.shape == (B,) and kl_z.shape == (B,) and kl_bp.shape == (B,) and z.shape == (B, L)
    assert bool(jnp.all(jnp.isfinite(recon)))
    assert bool(jnp.all(jnp.isfinite(kl_z)))
    assert bool(jnp.all(jnp.isfinite(kl_bp)))
    assert bool(jnp.all(jnp.isfinite(z)))
    print("KERNEL_OK")
</pallas_src>

<mosaic_0001>
module attributes {stable_mosaic.version = 11 : i64} {
  func.func @proteinvi_kernel(%arg0: i32, %arg1: memref<128x32xf32, #tpu.memory_space<vmem>>, %arg2: memref<128x16xf32, #tpu.memory_space<vmem>>, %arg3: memref<128x32xf32, #tpu.memory_space<vmem>>, %arg4: memref<32x32xf32, #tpu.memory_space<vmem>>, %arg5: memref<1x32xf32, #tpu.memory_space<vmem>>, %arg6: memref<32x32xf32, #tpu.memory_space<vmem>>, %arg7: memref<1x32xf32, #tpu.memory_space<vmem>>, %arg8: memref<32x32xf32, #tpu.memory_space<vmem>>, %arg9: memref<1x32xf32, #tpu.memory_space<vmem>>, %arg10: memref<16x96xf32, #tpu.memory_space<vmem>>, %arg11: memref<1x96xf32, #tpu.memory_space<vmem>>, %arg12: memref<96x128xf32, #tpu.memory_space<vmem>>, %arg13: memref<16x128xf32, #tpu.memory_space<vmem>>, %arg14: memref<1x128xf32, #tpu.memory_space<vmem>>, %arg15: memref<8x32xf32, #tpu.memory_space<vmem>>, %arg16: memref<128x8xf32, #tpu.memory_space<vmem>>, %arg17: memref<128x16xf32, #tpu.memory_space<vmem>>) attributes {dimension_semantics = [#tpu.dimension_semantics<parallel>], iteration_bounds = array<i64: 2>, scalar_prefetch = 0 : i64, scratch_operands = 0 : i64, tpu.core_type = #tpu.core_type<tc>, window_params = [{transform_indices = @transform_0, window_bounds = array<i64: 128, 32>}, {transform_indices = @transform_1, window_bounds = array<i64: 128, 16>}, {transform_indices = @transform_2, window_bounds = array<i64: 128, 32>}, {pipeline_mode = #tpu.pipeline_mode<synchronous>, transform_indices = @transform_3, window_bounds = array<i64: 32, 32>}, {pipeline_mode = #tpu.pipeline_mode<synchronous>, transform_indices = @transform_4, window_bounds = array<i64: 1, 32>}, {pipeline_mode = #tpu.pipeline_mode<synchronous>, transform_indices = @transform_5, window_bounds = array<i64: 32, 32>}, {pipeline_mode = #tpu.pipeline_mode<synchronous>, transform_indices = @transform_6, window_bounds = array<i64: 1, 32>}, {pipeline_mode = #tpu.pipeline_mode<synchronous>, transform_indices = @transform_7, window_bounds = array<i64: 32, 32>}, {pipeline_mode = #tpu.pipeline_mode<synchronous>, transform_indices = @transform_8, window_bounds = array<i64: 1, 32>}, {pipeline_mode = #tpu.pipeline_mode<synchronous>, transform_indices = @transform_9, window_bounds = array<i64: 16, 96>}, {pipeline_mode = #tpu.pipeline_mode<synchronous>, transform_indices = @transform_10, window_bounds = array<i64: 1, 96>}, {pipeline_mode = #tpu.pipeline_mode<synchronous>, transform_indices = @transform_11, window_bounds = array<i64: 96, 128>}, {pipeline_mode = #tpu.pipeline_mode<synchronous>, transform_indices = @transform_12, window_bounds = array<i64: 16, 128>}, {pipeline_mode = #tpu.pipeline_mode<synchronous>, transform_indices = @transform_13, window_bounds = array<i64: 1, 128>}, {pipeline_mode = #tpu.pipeline_mode<synchronous>, transform_indices = @transform_14, window_bounds = array<i64: 8, 32>}, {transform_indices = @transform_15, window_bounds = array<i64: 128, 8>}, {transform_indices = @transform_16, window_bounds = array<i64: 128, 16>}]} {
    %c0 = arith.constant 0 : index
    %c0_0 = arith.constant 0 : index
    %0 = vector.load %arg1[%c0, %c0_0] : memref<128x32xf32, #tpu.memory_space<vmem>>, vector<128x32xf32>
    %cst = arith.constant 1.000000e+00 : f32
    %1 = vector.broadcast %cst : f32 to vector<128x32xf32>
    %2 = arith.addf %1, %0 : vector<128x32xf32>
    %3 = math.log %2 : vector<128x32xf32>
    %c0_1 = arith.constant 0 : index
    %c0_2 = arith.constant 0 : index
    %4 = vector.load %arg4[%c0_1, %c0_2] : memref<32x32xf32, #tpu.memory_space<vmem>>, vector<32x32xf32>
    %cst_3 = arith.constant dense<0.000000e+00> : vector<128x32xf32>
    %5 = tpu.matmul %3, %4, %cst_3 {dimension_numbers = #tpu.dot_dimension_numbers<[1], [0], [0], [1], [0, 0, 1, 1], [], []>} : vector<128x32xf32>, vector<32x32xf32>, vector<128x32xf32> -> vector<128x32xf32>
    %c0_4 = arith.constant 0 : index
    %c0_5 = arith.constant 0 : index
    %6 = vector.load %arg5[%c0_4, %c0_5] : memref<1x32xf32, #tpu.memory_space<vmem>>, vector<1x32xf32>
    %7 = vector.broadcast %6 : vector<1x32xf32> to vector<128x32xf32>
    %8 = arith.addf %5, %7 : vector<128x32xf32>
    %cst_6 = arith.constant 0.000000e+00 : f32
    %9 = vector.broadcast %cst_6 : f32 to vector<128x32xf32>
    %10 = arith.maximumf %8, %9 : vector<128x32xf32>
    %c0_7 = arith.constant 0 : index
    %c0_8 = arith.constant 0 : index
    %11 = vector.load %arg6[%c0_7, %c0_8] : memref<32x32xf32, #tpu.memory_space<vmem>>, vector<32x32xf32>
    %cst_9 = arith.constant dense<0.000000e+00> : vector<128x32xf32>
    %12 = tpu.matmul %10, %11, %cst_9 {dimension_numbers = #tpu.dot_dimension_numbers<[1], [0], [0], [1], [0, 0, 1, 1], [], []>} : vector<128x32xf32>, vector<32x32xf32>, vector<128x32xf32> -> vector<128x32xf32>
    %c0_10 = arith.constant 0 : index
    %c0_11 = arith.constant 0 : index
    %13 = vector.load %arg7[%c0_10, %c0_11] : memref<1x32xf32, #tpu.memory_space<vmem>>, vector<1x32xf32>
    %14 = vector.broadcast %13 : vector<1x32xf32> to vector<128x32xf32>
    %15 = arith.addf %12, %14 : vector<128x32xf32>
    %cst_12 = arith.constant 0.000000e+00 : f32
    %16 = vector.broadcast %cst_12 : f32 to vector<128x32xf32>
    %17 = arith.maximumf %15, %16 : vector<128x32xf32>
    %c0_13 = arith.constant 0 : index
    %c0_14 = arith.constant 0 : index
    %18 = vector.load %arg8[%c0_13, %c0_14] : memref<32x32xf32, #tpu.memory_space<vmem>>, vector<32x32xf32>
    %cst_15 = arith.constant dense<0.000000e+00> : vector<128x32xf32>
    %19 = tpu.matmul %17, %18, %cst_15 {dimension_numbers = #tpu.dot_dimension_numbers<[1], [0], [0], [1], [0, 0, 1, 1], [], []>} : vector<128x32xf32>, vector<32x32xf32>, vector<128x32xf32> -> vector<128x32xf32>
    %c0_16 = arith.constant 0 : index
    %c0_17 = arith.constant 0 : index
    %20 = vector.load %arg9[%c0_16, %c0_17] : memref<1x32xf32, #tpu.memory_space<vmem>>, vector<1x32xf32>
    %21 = vector.broadcast %20 : vector<1x32xf32> to vector<128x32xf32>
    %22 = arith.addf %19, %21 : vector<128x32xf32>
    %23 = vector.extract_strided_slice %22 {offsets = [0, 0], sizes = [128, 16], strides = [1, 1]} : vector<128x32xf32> to vector<128x16xf32>
    %24 = vector.extract_strided_slice %22 {offsets = [0, 16], sizes = [128, 16], strides = [1, 1]} : vector<128x32xf32> to vector<128x16xf32>
    %25 = math.exp %24 : vector<128x16xf32>
    %cst_18 = arith.constant 9.99999974E-5 : f32
    %26 = vector.broadcast %cst_18 : f32 to vector<128x16xf32>
    %27 = arith.addf %25, %26 : vector<128x16xf32>
    %28 = math.sqrt %27 : vector<128x16xf32>
    %c0_19 = arith.constant 0 : index
    %c0_20 = arith.constant 0 : index
    %29 = vector.load %arg2[%c0_19, %c0_20] : memref<128x16xf32, #tpu.memory_space<vmem>>, vector<128x16xf32>
    %30 = arith.mulf %28, %29 : vector<128x16xf32>
    %31 = arith.addf %23, %30 : vector<128x16xf32>
    %cst_21 = arith.constant dense<0xFF800000> : vector<128xf32>
    %32 = vector.multi_reduction <maximumf>, %31, %cst_21 [1] : vector<128x16xf32> to vector<128xf32>
    %33 = vector.shape_cast %32 : vector<128xf32> to vector<128x1xf32>
    %34 = vector.broadcast %33 : vector<128x1xf32> to vector<128x16xf32>
    %35 = arith.subf %31, %34 : vector<128x16xf32>
    %36 = math.exp %35 : vector<128x16xf32>
    %cst_22 = arith.constant dense<0.000000e+00> : vector<128xf32>
    %37 = vector.multi_reduction <add>, %36, %cst_22 [1] : vector<128x16xf32> to vector<128xf32>
    %38 = vector.shape_cast %37 : vector<128xf32> to vector<128x1xf32>
    %39 = tpu.reciprocal %38 : vector<128x1xf32> -> vector<128x1xf32>
    %40 = vector.broadcast %39 : vector<128x1xf32> to vector<128x16xf32>
    %41 = arith.mulf %36, %40 : vector<128x16xf32>
    %c0_23 = arith.constant 0 : index
    %c0_24 = arith.constant 0 : index
    %42 = vector.load %arg17[%c0_23, %c0_24] : memref<128x16xf32, #tpu.memory_space<vmem>>, vector<128x16xf32>
    tpu.vector_store %arg17[%c0_23, %c0_24], %41 {strides = array<i32>} : memref<128x16xf32, #tpu.memory_space<vmem>>, vector<128x16xf32>,
    %c0_25 = arith.constant 0 : index
    %c0_26 = arith.constant 0 : index
    %43 = vector.load %arg10[%c0_25, %c0_26] : memref<16x96xf32, #tpu.memory_space<vmem>>, vector<16x96xf32>
    %cst_27 = arith.constant dense<0.000000e+00> : vector<128x96xf32>
    %44 = tpu.matmul %41, %43, %cst_27 {dimension_numbers = #tpu.dot_dimension_numbers<[1], [0], [0], [1], [0, 0, 1, 1], [], []>} : vector<128x16xf32>, vector<16x96xf32>, vector<128x96xf32> -> vector<128x96xf32>
    %c0_28 = arith.constant 0 : index
    %c0_29 = arith.constant 0 : index
    %45 = vector.load %arg11[%c0_28, %c0_29] : memref<1x96xf32, #tpu.memory_space<vmem>>, vector<1x96xf32>
    %46 = vector.broadcast %45 : vector<1x96xf32> to vector<128x96xf32>
    %47 = arith.addf %44, %46 : vector<128x96xf32>
    %cst_30 = arith.constant 0.000000e+00 : f32
    %48 = vector.broadcast %cst_30 : f32 to vector<128x96xf32>
    %49 = arith.maximumf %47, %48 : vector<128x96xf32>
    %c0_31 = arith.constant 0 : index
    %c0_32 = arith.constant 0 : index
    %50 = vector.load %arg12[%c0_31, %c0_32] : memref<96x128xf32, #tpu.memory_space<vmem>>, vector<96x128xf32>
    %cst_33 = arith.constant dense<0.000000e+00> : vector<128x128xf32>
    %51 = tpu.matmul %49, %50, %cst_33 {dimension_numbers = #tpu.dot_dimension_numbers<[1], [0], [0], [1], [0, 0, 1, 1], [], []>} : vector<128x96xf32>, vector<96x128xf32>, vector<128x128xf32> -> vector<128x128xf32>
    %c0_34 = arith.constant 0 : index
    %c0_35 = arith.constant 0 : index
    %52 = vector.load %arg13[%c0_34, %c0_35] : memref<16x128xf32, #tpu.memory_space<vmem>>, vector<16x128xf32>
    %cst_36 = arith.constant dense<0.000000e+00> : vector<128x128xf32>
    %53 = tpu.matmul %41, %52, %cst_36 {dimension_numbers = #tpu.dot_dimension_numbers<[1], [0], [0], [1], [0, 0, 1, 1], [], []>} : vector<128x16xf32>, vector<16x128xf32>, vector<128x128xf32> -> vector<128x128xf32>
    %54 = arith.addf %51, %53 : vector<128x128xf32>
    %c0_37 = arith.constant 0 : index
    %c0_38 = arith.constant 0 : index
    %55 = vector.load %arg14[%c0_37, %c0_38] : memref<1x128xf32, #tpu.memory_space<vmem>>, vector<1x128xf32>
    %56 = vector.broadcast %55 : vector<1x128xf32> to vector<128x128xf32>
    %57 = arith.addf %54, %56 : vector<128x128xf32>
    %58 = vector.extract_strided_slice %57 {offsets = [0, 0], sizes = [128, 32], strides = [1, 1]} : vector<128x128xf32> to vector<128x32xf32>
    %59 = vector.extract_strided_slice %57 {offsets = [0, 32], sizes = [128, 32], strides = [1, 1]} : vector<128x128xf32> to vector<128x32xf32>
    %60 = math.exp %59 : vector<128x32xf32>
    %61 = vector.extract_strided_slice %57 {offsets = [0, 64], sizes = [128, 32], strides = [1, 1]} : vector<128x128xf32> to vector<128x32xf32>
    %62 = vector.extract_strided_slice %57 {offsets = [0, 96], sizes = [128, 32], strides = [1, 1]} : vector<128x128xf32> to vector<128x32xf32>
    %c0_39 = arith.constant 0 : index
    %c0_40 = arith.constant 0 : index
    %63 = vector.load %arg3[%c0_39, %c0_40] : memref<128x32xf32, #tpu.memory_space<vmem>>, vector<128x32xf32>
    %64 = arith.mulf %60, %63 : vector<128x32xf32>
    %65 = arith.addf %58, %64 : vector<128x32xf32>
    %66 = math.exp %65 : vector<128x32xf32>
    %cst_41 = arith.constant 0.000000e+00 : f32
    %67 = vector.broadcast %cst_41 : f32 to vector<128x32xf32>
    %68 = arith.maximumf %61, %67 : vector<128x32xf32>
    %cst_42 = arith.constant 1.000000e+00 : f32
    %69 = vector.broadcast %cst_42 : f32 to vector<128x32xf32>
    %70 = arith.addf %68, %69 : vector<128x32xf32>
    %cst_43 = arith.constant 9.99999993E-9 : f32
    %71 = vector.broadcast %cst_43 : f32 to vector<128x32xf32>
    %72 = arith.addf %70, %71 : vector<128x32xf32>
    %73 = arith.mulf %66, %72 : vector<128x32xf32>
    %c0_44 = arith.constant 0 : index
    %c0_45 = arith.constant 0 : index
    %74 = vector.load %arg15[%c0_44, %c0_45] : memref<8x32xf32, #tpu.memory_space<vmem>>, vector<8x32xf32>
    %75 = vector.extract_strided_slice %74 {offsets = [0, 0], sizes = [1, 32], strides = [1, 1]} : vector<8x32xf32> to vector<1x32xf32>
    %76 = vector.extract_strided_slice %74 {offsets = [1, 0], sizes = [1, 32], strides = [1, 1]} : vector<8x32xf32> to vector<1x32xf32>
    %77 = vector.extract_strided_slice %74 {offsets = [2, 0], sizes = [1, 32], strides = [1, 1]} : vector<8x32xf32> to vector<1x32xf32>
    %78 = vector.extract_strided_slice %74 {offsets = [3, 0], sizes = [1, 32], strides = [1, 1]} : vector<8x32xf32> to vector<1x32xf32>
    %79 = vector.extract_strided_slice %74 {offsets = [5, 0], sizes = [1, 32], strides = [1, 1]} : vector<8x32xf32> to vector<1x32xf32>
    %80 = vector.extract_strided_slice %74 {offsets = [6, 0], sizes = [1, 32], strides = [1, 1]} : vector<8x32xf32> to vector<1x32xf32>
    %81 = vector.broadcast %76 : vector<1x32xf32> to vector<128x32xf32>
    %82 = arith.addf %81, %66 : vector<128x32xf32>
    %cst_46 = arith.constant 9.99999993E-9 : f32
    %83 = vector.broadcast %cst_46 : f32 to vector<128x32xf32>
    %84 = arith.addf %82, %83 : vector<128x32xf32>
    %85 = math.log %84 : vector<128x32xf32>
    %86 = vector.broadcast %76 : vector<1x32xf32> to vector<128x32xf32>
    %87 = arith.addf %86, %73 : vector<128x32xf32>
    %cst_47 = arith.constant 9.99999993E-9 : f32
    %88 = vector.broadcast %cst_47 : f32 to vector<128x32xf32>
    %89 = arith.addf %87, %88 : vector<128x32xf32>
    %90 = math.log %89 : vector<128x32xf32>
    %cst_48 = arith.constant 9.99999993E-9 : f32
    %91 = vector.broadcast %cst_48 : f32 to vector<128x32xf32>
    %92 = arith.addf %73, %91 : vector<128x32xf32>
    %93 = math.log %92 : vector<128x32xf32>
    %94 = vector.broadcast %76 : vector<1x32xf32> to vector<128x32xf32>
    %95 = arith.addf %0, %94 : vector<128x32xf32>
    %cst_49 = arith.constant 1.000000e+00 : f32
    %96 = vector.broadcast %cst_49 : f32 to vector<128x32xf32>
    %97 = arith.mulf %96, %95 : vector<128x32xf32>
    %cst_50 = arith.constant 33.4583321 : f32
    %98 = vector.broadcast %cst_50 : f32 to vector<128x32xf32>
    %99 = arith.addf %97, %98 : vector<128x32xf32>
    %100 = arith.mulf %99, %95 : vector<128x32xf32>
    %cst_51 = arith.constant 466.334198 : f32
    %101 = vector.broadcast %cst_51 : f32 to vector<128x32xf32>
    %102 = arith.addf %100, %101 : vector<128x32xf32>
    %103 = arith.mulf %102, %95 : vector<128x32xf32>
    %cst_52 = arith.constant 3465.70947 : f32
    %104 = vector.broadcast %cst_52 : f32 to vector<128x32xf32>
    %105 = arith.addf %103, %104 : vector<128x32xf32>
    %106 = arith.mulf %105, %95 : vector<128x32xf32>
    %cst_53 = arith.constant 14484.9141 : f32
    %107 = vector.broadcast %cst_53 : f32 to vector<128x32xf32>
    %108 = arith.addf %106, %107 : vector<128x32xf32>
    %109 = arith.mulf %108, %95 : vector<128x32xf32>
    %cst_54 = arith.constant 32281.0645 : f32
    %110 = vector.broadcast %cst_54 : f32 to vector<128x32xf32>
    %111 = arith.addf %109, %110 : vector<128x32xf32>
    %112 = arith.mulf %111, %95 : vector<128x32xf32>
    %cst_55 = arith.constant 29969.5938 : f32
    %113 = vector.broadcast %cst_55 : f32 to vector<128x32xf32>
    %114 = arith.addf %112, %113 : vector<128x32xf32>
    %cst_56 = arith.constant 1.000000e+00 : f32
    %115 = vector.broadcast %cst_56 : f32 to vector<128x32xf32>
    %116 = arith.mulf %115, %95 : vector<128x32xf32>
    %cst_57 = arith.constant 2.100000e+01 : f32
    %117 = vector.broadcast %cst_57 : f32 to vector<128x32xf32>
    %118 = arith.addf %116, %117 : vector<128x32xf32>
    %119 = arith.mulf %118, %95 : vector<128x32xf32>
    %cst_58 = arith.constant 1.750000e+02 : f32
    %120 = vector.broadcast %cst_58 : f32 to vector<128x32xf32>
    %121 = arith.addf %119, %120 : vector<128x32xf32>
    %122 = arith.mulf %121, %95 : vector<128x32xf32>
    %cst_59 = arith.constant 7.350000e+02 : f32
    %123 = vector.broadcast %cst_59 : f32 to vector<128x32xf32>
    %124 = arith.addf %122, %123 : vector<128x32xf32>
    %125 = arith.mulf %124, %95 : vector<128x32xf32>
    %cst_60 = arith.constant 1.624000e+03 : f32
    %126 = vector.broadcast %cst_60 : f32 to vector<128x32xf32>
    %127 = arith.addf %125, %126 : vector<128x32xf32>
    %128 = arith.mulf %127, %95 : vector<128x32xf32>
    %cst_61 = arith.constant 1.764000e+03 : f32
    %129 = vector.broadcast %cst_61 : f32 to vector<128x32xf32>
    %130 = arith.addf %128, %129 : vector<128x32xf32>
    %131 = arith.mulf %130, %95 : vector<128x32xf32>
    %cst_62 = arith.constant 7.200000e+02 : f32
    %132 = vector.broadcast %cst_62 : f32 to vector<128x32xf32>
    %133 = arith.addf %131, %132 : vector<128x32xf32>
    %134 = arith.mulf %133, %95 : vector<128x32xf32>
    %cst_63 = arith.constant 5.500000e+00 : f32
    %135 = vector.broadcast %cst_63 : f32 to vector<128x32xf32>
    %136 = arith.addf %95, %135 : vector<128x32xf32>
    %cst_64 = arith.constant 5.000000e-01 : f32
    %137 = vector.broadcast %cst_64 : f32 to vector<128x32xf32>
    %138 = arith.addf %95, %137 : vector<128x32xf32>
    %139 = math.log %136 : vector<128x32xf32>
    %140 = arith.mulf %138, %139 : vector<128x32xf32>
    %141 = arith.subf %140, %136 : vector<128x32xf32>
    %cst_65 = arith.constant 2.50662827 : f32
    %142 = vector.broadcast %cst_65 : f32 to vector<128x32xf32>
    %143 = arith.mulf %142, %114 : vector<128x32xf32>
    %144 = math.log %143 : vector<128x32xf32>
    %145 = arith.addf %141, %144 : vector<128x32xf32>
    %146 = math.log %134 : vector<128x32xf32>
    %147 = arith.subf %145, %146 : vector<128x32xf32>
    %148 = vector.broadcast %77 : vector<1x32xf32> to vector<128x32xf32>
    %149 = arith.subf %147, %148 : vector<128x32xf32>
    %cst_66 = arith.constant 1.000000e+00 : f32
    %150 = vector.broadcast %cst_66 : f32 to vector<128x32xf32>
    %151 = arith.addf %0, %150 : vector<128x32xf32>
    %cst_67 = arith.constant 1.000000e+00 : f32
    %152 = vector.broadcast %cst_67 : f32 to vector<128x32xf32>
    %153 = arith.mulf %152, %151 : vector<128x32xf32>
    %cst_68 = arith.constant 33.4583321 : f32
    %154 = vector.broadcast %cst_68 : f32 to vector<128x32xf32>
    %155 = arith.addf %153, %154 : vector<128x32xf32>
    %156 = arith.mulf %155, %151 : vector<128x32xf32>
    %cst_69 = arith.constant 466.334198 : f32
    %157 = vector.broadcast %cst_69 : f32 to vector<128x32xf32>
    %158 = arith.addf %156, %157 : vector<128x32xf32>
    %159 = arith.mulf %158, %151 : vector<128x32xf32>
    %cst_70 = arith.constant 3465.70947 : f32
    %160 = vector.broadcast %cst_70 : f32 to vector<128x32xf32>
    %161 = arith.addf %159, %160 : vector<128x32xf32>
    %162 = arith.mulf %161, %151 : vector<128x32xf32>
    %cst_71 = arith.constant 14484.9141 : f32
    %163 = vector.broadcast %cst_71 : f32 to vector<128x32xf32>
    %164 = arith.addf %162, %163 : vector<128x32xf32>
    %165 = arith.mulf %164, %151 : vector<128x32xf32>
    %cst_72 = arith.constant 32281.0645 : f32
    %166 = vector.broadcast %cst_72 : f32 to vector<128x32xf32>
    %167 = arith.addf %165, %166 : vector<128x32xf32>
    %168 = arith.mulf %167, %151 : vector<128x32xf32>
    %cst_73 = arith.constant 29969.5938 : f32
    %169 = vector.broadcast %cst_73 : f32 to vector<128x32xf32>
    %170 = arith.addf %168, %169 : vector<128x32xf32>
    %cst_74 = arith.constant 1.000000e+00 : f32
    %171 = vector.broadcast %cst_74 : f32 to vector<128x32xf32>
    %172 = arith.mulf %171, %151 : vector<128x32xf32>
    %cst_75 = arith.constant 2.100000e+01 : f32
    %173 = vector.broadcast %cst_75 : f32 to vector<128x32xf32>
    %174 = arith.addf %172, %173 : vector<128x32xf32>
    %175 = arith.mulf %174, %151 : vector<128x32xf32>
    %cst_76 = arith.constant 1.750000e+02 : f32
    %176 = vector.broadcast %cst_76 : f32 to vector<128x32xf32>
    %177 = arith.addf %175, %176 : vector<128x32xf32>
    %178 = arith.mulf %177, %151 : vector<128x32xf32>
    %cst_77 = arith.constant 7.350000e+02 : f32
    %179 = vector.broadcast %cst_77 : f32 to vector<128x32xf32>
    %180 = arith.addf %178, %179 : vector<128x32xf32>
    %181 = arith.mulf %180, %151 : vector<128x32xf32>
    %cst_78 = arith.constant 1.624000e+03 : f32
    %182 = vector.broadcast %cst_78 : f32 to vector<128x32xf32>
    %183 = arith.addf %181, %182 : vector<128x32xf32>
    %184 = arith.mulf %183, %151 : vector<128x32xf32>
    %cst_79 = arith.constant 1.764000e+03 : f32
    %185 = vector.broadcast %cst_79 : f32 to vector<128x32xf32>
    %186 = arith.addf %184, %185 : vector<128x32xf32>
    %187 = arith.mulf %186, %151 : vector<128x32xf32>
    %cst_80 = arith.constant 7.200000e+02 : f32
    %188 = vector.broadcast %cst_80 : f32 to vector<128x32xf32>
    %189 = arith.addf %187, %188 : vector<128x32xf32>
    %190 = arith.mulf %189, %151 : vector<128x32xf32>
    %cst_81 = arith.constant 5.500000e+00 : f32
    %191 = vector.broadcast %cst_81 : f32 to vector<128x32xf32>
    %192 = arith.addf %151, %191 : vector<128x32xf32>
    %cst_82 = arith.constant 5.000000e-01 : f32
    %193 = vector.broadcast %cst_82 : f32 to vector<128x32xf32>
    %194 = arith.addf %151, %193 : vector<128x32xf32>
    %195 = math.log %192 : vector<128x32xf32>
    %196 = arith.mulf %194, %195 : vector<128x32xf32>
    %197 = arith.subf %196, %192 : vector<128x32xf32>
    %cst_83 = arith.constant 2.50662827 : f32
    %198 = vector.broadcast %cst_83 : f32 to vector<128x32xf32>
    %199 = arith.mulf %198, %170 : vector<128x32xf32>
    %200 = math.log %199 : vector<128x32xf32>
    %201 = arith.addf %197, %200 : vector<128x32xf32>
    %202 = math.log %190 : vector<128x32xf32>
    %203 = arith.subf %201, %202 : vector<128x32xf32>
    %204 = arith.subf %149, %203 : vector<128x32xf32>
    %205 = vector.broadcast %75 : vector<1x32xf32> to vector<128x32xf32>
    %206 = arith.subf %205, %85 : vector<128x32xf32>
    %207 = vector.broadcast %76 : vector<1x32xf32> to vector<128x32xf32>
    %208 = arith.mulf %207, %206 : vector<128x32xf32>
    %209 = arith.subf %65, %85 : vector<128x32xf32>
    %210 = arith.mulf %0, %209 : vector<128x32xf32>
    %211 = arith.addf %208, %210 : vector<128x32xf32>
    %212 = vector.broadcast %75 : vector<1x32xf32> to vector<128x32xf32>
    %213 = arith.subf %212, %90 : vector<128x32xf32>
    %214 = vector.broadcast %76 : vector<1x32xf32> to vector<128x32xf32>
    %215 = arith.mulf %214, %213 : vector<128x32xf32>
    %216 = arith.subf %93, %90 : vector<128x32xf32>
    %217 = arith.mulf %0, %216 : vector<128x32xf32>
    %218 = arith.addf %215, %217 : vector<128x32xf32>
    %219 = arith.subf %218, %62 : vector<128x32xf32>
    %220 = arith.maximumf %211, %219 : vector<128x32xf32>
    %221 = arith.subf %211, %220 : vector<128x32xf32>
    %222 = math.exp %221 : vector<128x32xf32>
    %223 = arith.subf %219, %220 : vector<128x32xf32>
    %224 = math.exp %223 : vector<128x32xf32>
    %225 = arith.addf %222, %224 : vector<128x32xf32>
    %226 = math.log %225 : vector<128x32xf32>
    %227 = arith.addf %220, %226 : vector<128x32xf32>
    %228 = arith.addf %204, %227 : vector<128x32xf32>
    %cst_84 = arith.constant 0.000000e+00 : f32
    %229 = vector.broadcast %cst_84 : f32 to vector<128x32xf32>
    %230 = arith.subf %229, %62 : vector<128x32xf32>
    %cst_85 = arith.constant 0.000000e+00 : f32
    %231 = vector.broadcast %cst_85 : f32 to vector<128x32xf32>
    %232 = arith.maximumf %230, %231 : vector<128x32xf32>
    %233 = math.absf %230 : vector<128x32xf32>
    %cst_86 = arith.constant 0.000000e+00 : f32
    %234 = vector.broadcast %cst_86 : f32 to vector<128x32xf32>
    %235 = arith.subf %234, %233 : vector<128x32xf32>
    %236 = math.exp %235 : vector<128x32xf32>
    %cst_87 = arith.constant 1.000000e+00 : f32
    %237 = vector.broadcast %cst_87 : f32 to vector<128x32xf32>
    %238 = arith.addf %237, %236 : vector<128x32xf32>
    %239 = math.log %238 : vector<128x32xf32>
    %240 = arith.addf %232, %239 : vector<128x32xf32>
    %241 = arith.subf %228, %240 : vector<128x32xf32>
    %cst_88 = arith.constant 0.000000e+00 : f32
    %242 = vector.broadcast %cst_88 : f32 to vector<128x32xf32>
    %243 = arith.subf %242, %241 : vector<128x32xf32>
    %cst_89 = arith.constant dense<0.000000e+00> : vector<128xf32>
    %244 = vector.multi_reduction <add>, %243, %cst_89 [1] : vector<128x32xf32> to vector<128xf32>
    %245 = vector.shape_cast %244 : vector<128xf32> to vector<128x1xf32>
    %246 = arith.mulf %23, %23 : vector<128x16xf32>
    %247 = arith.addf %27, %246 : vector<128x16xf32>
    %cst_90 = arith.constant 1.000000e+00 : f32
    %248 = vector.broadcast %cst_90 : f32 to vector<128x16xf32>
    %249 = arith.subf %247, %248 : vector<128x16xf32>
    %250 = math.log %27 : vector<128x16xf32>
    %251 = arith.subf %249, %250 : vector<128x16xf32>
    %cst_91 = arith.constant 5.000000e-01 : f32
    %252 = vector.broadcast %cst_91 : f32 to vector<128x16xf32>
    %253 = arith.mulf %252, %251 : vector<128x16xf32>
    %cst_92 = arith.constant dense<0.000000e+00> : vector<128xf32>
    %254 = vector.multi_reduction <add>, %253, %cst_92 [1] : vector<128x16xf32> to vector<128xf32>
    %255 = vector.shape_cast %254 : vector<128xf32> to vector<128x1xf32>
    %256 = vector.broadcast %79 : vector<1x32xf32> to vector<128x32xf32>
    %257 = arith.mulf %60, %256 : vector<128x32xf32>
    %258 = vector.broadcast %78 : vector<1x32xf32> to vector<128x32xf32>
    %259 = arith.subf %58, %258 : vector<128x32xf32>
    %260 = vector.broadcast %79 : vector<1x32xf32> to vector<128x32xf32>
    %261 = arith.mulf %259, %260 : vector<128x32xf32>
    %262 = arith.mulf %257, %257 : vector<128x32xf32>
    %263 = arith.mulf %261, %261 : vector<128x32xf32>
    %264 = arith.addf %262, %263 : vector<128x32xf32>
    %cst_93 = arith.constant 1.000000e+00 : f32
    %265 = vector.broadcast %cst_93 : f32 to vector<128x32xf32>
    %266 = arith.subf %264, %265 : vector<128x32xf32>
    %cst_94 = arith.constant 5.000000e-01 : f32
    %267 = vector.broadcast %cst_94 : f32 to vector<128x32xf32>
    %268 = arith.mulf %267, %266 : vector<128x32xf32>
    %269 = vector.broadcast %80 : vector<1x32xf32> to vector<128x32xf32>
    %270 = arith.subf %59, %269 : vector<128x32xf32>
    %271 = arith.subf %268, %270 : vector<128x32xf32>
    %cst_95 = arith.constant dense<0.000000e+00> : vector<128xf32>
    %272 = vector.multi_reduction <add>, %271, %cst_95 [1] : vector<128x32xf32> to vector<128xf32>
    %273 = vector.shape_cast %272 : vector<128xf32> to vector<128x1xf32>
    %cst_96 = arith.constant 0.000000e+00 : f32
    %274 = vector.broadcast %cst_96 : f32 to vector<128x5xf32>
    %275 = tpu.concatenate %245, %255, %273, %274 in 1 : vector<128x1xf32>, vector<128x1xf32>, vector<128x1xf32>, vector<128x5xf32> -> vector<128x8xf32>
    %c0_97 = arith.constant 0 : index
    %c0_98 = arith.constant 0 : index
    %276 = vector.load %arg16[%c0_97, %c0_98] : memref<128x8xf32, #tpu.memory_space<vmem>>, vector<128x8xf32>
    tpu.vector_store %arg16[%c0_97, %c0_98], %275 {strides = array<i32>} : memref<128x8xf32, #tpu.memory_space<vmem>>, vector<128x8xf32>,
    return
  }
  func.func @transform_0(%arg0: i32) -> (i32, i32) {
    %c0_i32 = arith.constant 0 : i32
    %c0_i32_0 = arith.constant 0 : i32
    return %arg0, %c0_i32 : i32, i32
  }
  func.func @transform_1(%arg0: i32) -> (i32, i32) {
    %c0_i32 = arith.constant 0 : i32
    %c0_i32_0 = arith.constant 0 : i32
    return %arg0, %c0_i32 : i32, i32
  }
  func.func @transform_2(%arg0: i32) -> (i32, i32) {
    %c0_i32 = arith.constant 0 : i32
    %c0_i32_0 = arith.constant 0 : i32
    return %arg0, %c0_i32 : i32, i32
  }
  func.func @transform_3(%arg0: i32) -> (i32, i32) {
    %c0_i32 = arith.constant 0 : i32
    %c0_i32_0 = arith.constant 0 : i32
    %c0_i32_1 = arith.constant 0 : i32
    return %c0_i32, %c0_i32_0 : i32, i32
  }
  func.func @transform_4(%arg0: i32) -> (i32, i32) {
    %c0_i32 = arith.constant 0 : i32
    %c0_i32_0 = arith.constant 0 : i32
    %c0_i32_1 = arith.constant 0 : i32
    return %c0_i32, %c0_i32_0 : i32, i32
  }
  func.func @transform_5(%arg0: i32) -> (i32, i32) {
    %c0_i32 = arith.constant 0 : i32
    %c0_i32_0 = arith.constant 0 : i32
    %c0_i32_1 = arith.constant 0 : i32
    return %c0_i32, %c0_i32_0 : i32, i32
  }
  func.func @transform_6(%arg0: i32) -> (i32, i32) {
    %c0_i32 = arith.constant 0 : i32
    %c0_i32_0 = arith.constant 0 : i32
    %c0_i32_1 = arith.constant 0 : i32
    return %c0_i32, %c0_i32_0 : i32, i32
  }
  func.func @transform_7(%arg0: i32) -> (i32, i32) {
    %c0_i32 = arith.constant 0 : i32
    %c0_i32_0 = arith.constant 0 : i32
    %c0_i32_1 = arith.constant 0 : i32
    return %c0_i32, %c0_i32_0 : i32, i32
  }
  func.func @transform_8(%arg0: i32) -> (i32, i32) {
    %c0_i32 = arith.constant 0 : i32
    %c0_i32_0 = arith.constant 0 : i32
    %c0_i32_1 = arith.constant 0 : i32
    return %c0_i32, %c0_i32_0 : i32, i32
  }
  func.func @transform_9(%arg0: i32) -> (i32, i32) {
    %c0_i32 = arith.constant 0 : i32
    %c0_i32_0 = arith.constant 0 : i32
    %c0_i32_1 = arith.constant 0 : i32
    return %c0_i32, %c0_i32_0 : i32, i32
  }
  func.func @transform_10(%arg0: i32) -> (i32, i32) {
    %c0_i32 = arith.constant 0 : i32
    %c0_i32_0 = arith.constant 0 : i32
    %c0_i32_1 = arith.constant 0 : i32
    return %c0_i32, %c0_i32_0 : i32, i32
  }
  func.func @transform_11(%arg0: i32) -> (i32, i32) {
    %c0_i32 = arith.constant 0 : i32
    %c0_i32_0 = arith.constant 0 : i32
    %c0_i32_1 = arith.constant 0 : i32
    return %c0_i32, %c0_i32_0 : i32, i32
  }
  func.func @transform_12(%arg0: i32) -> (i32, i32) {
    %c0_i32 = arith.constant 0 : i32
    %c0_i32_0 = arith.constant 0 : i32
    %c0_i32_1 = arith.constant 0 : i32
    return %c0_i32, %c0_i32_0 : i32, i32
  }
  func.func @transform_13(%arg0: i32) -> (i32, i32) {
    %c0_i32 = arith.constant 0 : i32
    %c0_i32_0 = arith.constant 0 : i32
    %c0_i32_1 = arith.constant 0 : i32
    return %c0_i32, %c0_i32_0 : i32, i32
  }
  func.func @transform_14(%arg0: i32) -> (i32, i32) {
    %c0_i32 = arith.constant 0 : i32
    %c0_i32_0 = arith.constant 0 : i32
    %c0_i32_1 = arith.constant 0 : i32
    return %c0_i32, %c0_i32_0 : i32, i32
  }
  func.func @transform_15(%arg0: i32) -> (i32, i32) {
    %c0_i32 = arith.constant 0 : i32
    %c0_i32_0 = arith.constant 0 : i32
    return %arg0, %c0_i32 : i32, i32
  }
  func.func @transform_16(%arg0: i32) -> (i32, i32) {
    %c0_i32 = arith.constant 0 : i32
    %c0_i32_0 = arith.constant 0 : i32
    return %arg0, %c0_i32 : i32, i32
  }
}

</mosaic_0001>

<llo_original>
// kernel: tpu_custom_call.1
$region0: #{tpu_custom_call.1}
  #allocation0 [shape = 'u32[]', space=smem, size = 0x4, offset = 0x4, fixed_abs, tag = 'smem constant byte address 0x4 - core index']
  #allocation1 [shape = 'u32[144,128]{1,0:T(1,128)}', space=vmem, size = 0x12000, scoped, tag = 'internal scratch']
  %s0 = inlined_call_operand.vmem [shape: f32[256,32], index: 0, kind: input, shape index: {}]
  %s1 = inlined_call_operand.vmem [shape: f32[256,16], index: 1, kind: input, shape index: {}]
  %s2 = inlined_call_operand.vmem [shape: f32[256,32], index: 2, kind: input, shape index: {}]
  %s3 = inlined_call_operand.vmem [shape: f32[32,32], index: 3, kind: input, shape index: {}]
  %s4 = inlined_call_operand.vmem [shape: f32[1,32], index: 4, kind: input, shape index: {}]
  %s5 = inlined_call_operand.vmem [shape: f32[32,32], index: 5, kind: input, shape index: {}]
  %s6 = inlined_call_operand.vmem [shape: f32[1,32], index: 6, kind: input, shape index: {}]
  %s7 = inlined_call_operand.vmem [shape: f32[32,32], index: 7, kind: input, shape index: {}]
  %s8 = inlined_call_operand.vmem [shape: f32[1,32], index: 8, kind: input, shape index: {}]
  %s9 = inlined_call_operand.vmem [shape: f32[16,96], index: 9, kind: input, shape index: {}]
  %s10 = inlined_call_operand.vmem [shape: f32[1,96], index: 10, kind: input, shape index: {}]
  %s11 = inlined_call_operand.vmem [shape: f32[96,128], index: 11, kind: input, shape index: {}]
  %s12 = inlined_call_operand.vmem [shape: f32[16,128], index: 12, kind: input, shape index: {}]
  %s13 = inlined_call_operand.vmem [shape: f32[1,128], index: 13, kind: input, shape index: {}]
  %s14 = inlined_call_operand.vmem [shape: f32[8,32], index: 14, kind: input, shape index: {}]
  %s15 = inlined_call_operand.vmem [shape: f32[256,8], index: 15, kind: output, shape index: {0}]
  %s16 = inlined_call_operand.vmem [shape: f32[256,16], index: 16, kind: output, shape index: {1}]
  %17 = xla_tuple %s15, %s16
  %s18 = sld [smem:[#allocation0]]
  $region101: #{tpu_custom_call.1} parent=0
    _
  %s20 = ssub.s32 1, %s18
  %s21 = scalar_select 0, %s20, %s18
  loop: start=0, step=1, limit=4
  $region2: #{tpu_custom_call.1} parent=0 // loop_pre_header
    _
  $region3: #{tpu_custom_call.1} parent=0 // loop_header
    %s23 = sphi 0, %s27
    %p24 = scmp.ge.s32.totalorder %s23, 4
    %s33 = sphi 0, %s35
    %s36 = sphi 0, %s33
    %s37 = sphi 0, %s36
    %s53 = sphi 0, %s37
    %s59 = sphi 0, %s61
    %s62 = sphi 0, %s59
    %s63 = sphi 0, %s62
    %s79 = sphi 0, %s63
    %s85 = sphi 0, %s87
    %s88 = sphi 0, %s85
    %s89 = sphi 0, %s88
    %s105 = sphi 0, %s89
    %s109 = sphi 0, %s109
    %s111 = sphi 0, %s109
    %s112 = sphi 0, %s111
    %s126 = sphi 0, %s112
    %s130 = sphi 0, %s130
    %s132 = sphi 0, %s130
    %s133 = sphi 0, %s132
    %s147 = sphi 0, %s133
    %s151 = sphi 0, %s151
    %s153 = sphi 0, %s151
    %s154 = sphi 0, %s153
    %s168 = sphi 0, %s154
    %s172 = sphi 0, %s172
    %s174 = sphi 0, %s172
    %s175 = sphi 0, %s174
    %s189 = sphi 0, %s175
    %s193 = sphi 0, %s193
    %s195 = sphi 0, %s193
    %s196 = sphi 0, %s195
    %s210 = sphi 0, %s196
    %s214 = sphi 0, %s214
    %s216 = sphi 0, %s214
    %s217 = sphi 0, %s216
    %s231 = sphi 0, %s217
    %s235 = sphi 0, %s235
    %s237 = sphi 0, %s235
    %s238 = sphi 0, %s237
    %s252 = sphi 0, %s238
    %s256 = sphi 0, %s256
    %s258 = sphi 0, %s256
    %s259 = sphi 0, %s258
    %s273 = sphi 0, %s259
    %s277 = sphi 0, %s277
    %s279 = sphi 0, %s277
    %s280 = sphi 0, %s279
    %s294 = sphi 0, %s280
    %s298 = sphi 0, %s298
    %s300 = sphi 0, %s298
    %s301 = sphi 0, %s300
    %s315 = sphi 0, %s301
    %s319 = sphi 0, %s319
    %s321 = sphi 0, %s319
    %s322 = sphi 0, %s321
    %s336 = sphi 0, %s322
    %s340 = sphi 0, %s340
    %s342 = sphi 0, %s340
    %s343 = sphi 0, %s342
    %s357 = sphi 0, %s343
    %s363 = sphi 0, %s365
    %s366 = sphi 0, %s363
    %s367 = sphi 0, %s366
    %s383 = sphi 0, %s367
    %s389 = sphi 0, %s391
    %s392 = sphi 0, %s389
    %s393 = sphi 0, %s392
    %s409 = sphi 0, %s393
  $region4: #{tpu_custom_call.1} parent=0 // loop_header_branch
    %26 = sbr.rel (%p24) target = $region8
  $region5: #{tpu_custom_call.1} parent=0 // loop_body
    %s28 = ssub.s32 %s23, 1
    %s29 = ssub.s32 %s23, 2
    %s30 = sadd.s32 %s23, 1
    %s31 = ssub.s32 %s23, %s30
    %p32 = scmp.eq.s32.totalorder %s31, 0
    %s34 = sadd.s32 %s33, 1
    %s35 = scalar_select %p32, %s33, %s34
    %p38 = pneg %p32
    %p39 = scmp.eq.s32.totalorder %s23, 1
    %p40 = por %p38, %p39
    %p41 = scmp.ne.s32.totalorder %s33, %s36
    %p42 = scmp.eq.s32.totalorder %s23, 0
    %p43 = por %p41, %p42
    %p44 = scmp.ne.s32.totalorder %s33, %s36
    %p45 = scmp.eq.s32.totalorder %s28, 1
    %p46 = por %p44, %p45
    %p47 = scmp.ne.s32.totalorder %s36, %s37
    %p48 = scmp.eq.s32.totalorder %s28, 0
    %p49 = por %p47, %p48
    %p50 = scmp.ne.s32.totalorder %s36, %s37
    %p51 = scmp.eq.s32.totalorder %s29, 1
    %p52 = por %p50, %p51
    %p54 = scmp.ne.s32.totalorder %s37, %s53
    %p55 = scmp.eq.s32.totalorder %s29, 0
    %p56 = por %p54, %p55
    %s57 = ssub.s32 %s23, %s30
    %p58 = scmp.eq.s32.totalorder %s57, 0
    %s60 = sadd.s32 %s59, 1
    %s61 = scalar_select %p58, %s59, %s60
    %p64 = pneg %p58
    %p65 = scmp.eq.s32.totalorder %s23, 1
    %p66 = por %p64, %p65
    %p67 = scmp.ne.s32.totalorder %s59, %s62
    %p68 = scmp.eq.s32.totalorder %s23, 0
    %p69 = por %p67, %p68
    %p70 = scmp.ne.s32.totalorder %s59, %s62
    %p71 = scmp.eq.s32.totalorder %s28, 1
    %p72 = por %p70, %p71
    %p73 = scmp.ne.s32.totalorder %s62, %s63
    %p74 = scmp.eq.s32.totalorder %s28, 0
    %p75 = por %p73, %p74
    %p76 = scmp.ne.s32.totalorder %s62, %s63
    %p77 = scmp.eq.s32.totalorder %s29, 1
    %p78 = por %p76, %p77
    %p80 = scmp.ne.s32.totalorder %s63, %s79
    %p81 = scmp.eq.s32.totalorder %s29, 0
    %p82 = por %p80, %p81
    %s83 = ssub.s32 %s23, %s30
    %p84 = scmp.eq.s32.totalorder %s83, 0
    %s86 = sadd.s32 %s85, 1
    %s87 = scalar_select %p84, %s85, %s86
    %p90 = pneg %p84
    %p91 = scmp.eq.s32.totalorder %s23, 1
    %p92 = por %p90, %p91
    %p93 = scmp.ne.s32.totalorder %s85, %s88
    %p94 = scmp.eq.s32.totalorder %s23, 0
    %p95 = por %p93, %p94
    %p96 = scmp.ne.s32.totalorder %s85, %s88
    %p97 = scmp.eq.s32.totalorder %s28, 1
    %p98 = por %p96, %p97
    %p99 = scmp.ne.s32.totalorder %s88, %s89
    %p100 = scmp.eq.s32.totalorder %s28, 0
    %p101 = por %p99, %p100
    %p102 = scmp.ne.s32.totalorder %s88, %s89
    %p103 = scmp.eq.s32.totalorder %s29, 1
    %p104 = por %p102, %p103
    %p106 = scmp.ne.s32.totalorder %s89, %s105
    %p107 = scmp.eq.s32.totalorder %s29, 0
    %p108 = por %p106, %p107
    %s110 = sadd.s32 %s109, 1
    %p113 = scmp.eq.s32.totalorder %s23, 1
    %p114 = scmp.ne.s32.totalorder %s109, %s111
    %p115 = scmp.eq.s32.totalorder %s23, 0
    %p116 = por %p114, %p115
    %p117 = scmp.ne.s32.totalorder %s109, %s111
    %p118 = scmp.eq.s32.totalorder %s28, 1
    %p119 = por %p117, %p118
    %p120 = scmp.ne.s32.totalorder %s111, %s112
    %p121 = scmp.eq.s32.totalorder %s28, 0
    %p122 = por %p120, %p121
    %p123 = scmp.ne.s32.totalorder %s111, %s112
    %p124 = scmp.eq.s32.totalorder %s29, 1
    %p125 = por %p123, %p124
    %p127 = scmp.ne.s32.totalorder %s112, %s126
    %p128 = scmp.eq.s32.totalorder %s29, 0
    %p129 = por %p127, %p128
    %s131 = sadd.s32 %s130, 1
    %p134 = scmp.eq.s32.totalorder %s23, 1
    %p135 = scmp.ne.s32.totalorder %s130, %s132
    %p136 = scmp.eq.s32.totalorder %s23, 0
    %p137 = por %p135, %p136
    %p138 = scmp.ne.s32.totalorder %s130, %s132
    %p139 = scmp.eq.s32.totalorder %s28, 1
    %p140 = por %p138, %p139
    %p141 = scmp.ne.s32.totalorder %s132, %s133
    %p142 = scmp.eq.s32.totalorder %s28, 0
    %p143 = por %p141, %p142
    %p144 = scmp.ne.s32.totalorder %s132, %s133
    %p145 = scmp.eq.s32.totalorder %s29, 1
    %p146 = por %p144, %p145
    %p148 = scmp.ne.s32.totalorder %s133, %s147
    %p149 = scmp.eq.s32.totalorder %s29, 0
    %p150 = por %p148, %p149
    %s152 = sadd.s32 %s151, 1
    %p155 = scmp.eq.s32.totalorder %s23, 1
    %p156 = scmp.ne.s32.totalorder %s151, %s153
    %p157 = scmp.eq.s32.totalorder %s23, 0
    %p158 = por %p156, %p157
    %p159 = scmp.ne.s32.totalorder %s151, %s153
    %p160 = scmp.eq.s32.totalorder %s28, 1
    %p161 = por %p159, %p160
    %p162 = scmp.ne.s32.totalorder %s153, %s154
    %p163 = scmp.eq.s32.totalorder %s28, 0
    %p164 = por %p162, %p163
    %p165 = scmp.ne.s32.totalorder %s153, %s154
    %p166 = scmp.eq.s32.totalorder %s29, 1
    %p167 = por %p165, %p166
    %p169 = scmp.ne.s32.totalorder %s154, %s168
    %p170 = scmp.eq.s32.totalorder %s29, 0
    %p171 = por %p169, %p170
    %s173 = sadd.s32 %s172, 1
    %p176 = scmp.eq.s32.totalorder %s23, 1
    %p177 = scmp.ne.s32.totalorder %s172, %s174
    %p178 = scmp.eq.s32.totalorder %s23, 0
    %p179 = por %p177, %p178
    %p180 = scmp.ne.s32.totalorder %s172, %s174
    %p181 = scmp.eq.s32.totalorder %s28, 1
    %p182 = por %p180, %p181
    %p183 = scmp.ne.s32.totalorder %s174, %s175
    %p184 = scmp.eq.s32.totalorder %s28, 0
    %p185 = por %p183, %p184
    %p186 = scmp.ne.s32.totalorder %s174, %s175
    %p187 = scmp.eq.s32.totalorder %s29, 1
    %p188 = por %p186, %p187
    %p190 = scmp.ne.s32.totalorder %s175, %s189
    %p191 = scmp.eq.s32.totalorder %s29, 0
    %p192 = por %p190, %p191
    %s194 = sadd.s32 %s193, 1
    %p197 = scmp.eq.s32.totalorder %s23, 1
    %p198 = scmp.ne.s32.totalorder %s193, %s195
    %p199 = scmp.eq.s32.totalorder %s23, 0
    %p200 = por %p198, %p199
    %p201 = scmp.ne.s32.totalorder %s193, %s195
    %p202 = scmp.eq.s32.totalorder %s28, 1
    %p203 = por %p201, %p202
    %p204 = scmp.ne.s32.totalorder %s195, %s196
    %p205 = scmp.eq.s32.totalorder %s28, 0
    %p206 = por %p204, %p205
    %p207 = scmp.ne.s32.totalorder %s195, %s196
    %p208 = scmp.eq.s32.totalorder %s29, 1
    %p209 = por %p207, %p208
    %p211 = scmp.ne.s32.totalorder %s196, %s210
    %p212 = scmp.eq.s32.totalorder %s29, 0
    %p213 = por %p211, %p212
    %s215 = sadd.s32 %s214, 1
    %p218 = scmp.eq.s32.totalorder %s23, 1
    %p219 = scmp.ne.s32.totalorder %s214, %s216
    %p220 = scmp.eq.s32.totalorder %s23, 0
    %p221 = por %p219, %p220
    %p222 = scmp.ne.s32.totalorder %s214, %s216
    %p223 = scmp.eq.s32.totalorder %s28, 1
    %p224 = por %p222, %p223
    %p225 = scmp.ne.s32.totalorder %s216, %s217
    %p226 = scmp.eq.s32.totalorder %s28, 0
    %p227 = por %p225, %p226
    %p228 = scmp.ne.s32.totalorder %s216, %s217
    %p229 = scmp.eq.s32.totalorder %s29, 1
    %p230 = por %p228, %p229
    %p232 = scmp.ne.s32.totalorder %s217, %s231
    %p233 = scmp.eq.s32.totalorder %s29, 0
    %p234 = por %p232, %p233
    %s236 = sadd.s32 %s235, 1
    %p239 = scmp.eq.s32.totalorder %s23, 1
    %p240 = scmp.ne.s32.totalorder %s235, %s237
    %p241 = scmp.eq.s32.totalorder %s23, 0
    %p242 = por %p240, %p241
    %p243 = scmp.ne.s32.totalorder %s235, %s237
    %p244 = scmp.eq.s32.totalorder %s28, 1
    %p245 = por %p243, %p244
    %p246 = scmp.ne.s32.totalorder %s237, %s238
    %p247 = scmp.eq.s32.totalorder %s28, 0
    %p248 = por %p246, %p247
    %p249 = scmp.ne.s32.totalorder %s237, %s238
    %p250 = scmp.eq.s32.totalorder %s29, 1
    %p251 = por %p249, %p250
    %p253 = scmp.ne.s32.totalorder %s238, %s252
    %p254 = scmp.eq.s32.totalorder %s29, 0
    %p255 = por %p253, %p254
    %s257 = sadd.s32 %s256, 1
    %p260 = scmp.eq.s32.totalorder %s23, 1
    %p261 = scmp.ne.s32.totalorder %s256, %s258
    %p262 = scmp.eq.s32.totalorder %s23, 0
    %p263 = por %p261, %p262
    %p264 = scmp.ne.s32.totalorder %s256, %s258
    %p265 = scmp.eq.s32.totalorder %s28, 1
    %p266 = por %p264, %p265
    %p267 = scmp.ne.s32.totalorder %s258, %s259
    %p268 = scmp.eq.s32.totalorder %s28, 0
    %p269 = por %p267, %p268
    %p270 = scmp.ne.s32.totalorder %s258, %s259
    %p271 = scmp.eq.s32.totalorder %s29, 1
    %p272 = por %p270, %p271
    %p274 = scmp.ne.s32.totalorder %s259, %s273
    %p275 = scmp.eq.s32.totalorder %s29, 0
    %p276 = por %p274, %p275
    %s278 = sadd.s32 %s277, 1
    %p281 = scmp.eq.s32.totalorder %s23, 1
    %p282 = scmp.ne.s32.totalorder %s277, %s279
    %p283 = scmp.eq.s32.totalorder %s23, 0
    %p284 = por %p282, %p283
    %p285 = scmp.ne.s32.totalorder %s277, %s279
    %p286 = scmp.eq.s32.totalorder %s28, 1
    %p287 = por %p285, %p286
    %p288 = scmp.ne.s32.totalorder %s279, %s280
    %p289 = scmp.eq.s32.totalorder %s28, 0
    %p290 = por %p288, %p289
    %p291 = scmp.ne.s32.totalorder %s279, %s280
    %p292 = scmp.eq.s32.totalorder %s29, 1
    %p293 = por %p291, %p292
    %p295 = scmp.ne.s32.totalorder %s280, %s294
    %p296 = scmp.eq.s32.totalorder %s29, 0
    %p297 = por %p295, %p296
    %s299 = sadd.s32 %s298, 1
    %p302 = scmp.eq.s32.totalorder %s23, 1
    %p303 = scmp.ne.s32.totalorder %s298, %s300
    %p304 = scmp.eq.s32.totalorder %s23, 0
    %p305 = por %p303, %p304
    %p306 = scmp.ne.s32.totalorder %s298, %s300
    %p307 = scmp.eq.s32.totalorder %s28, 1
    %p308 = por %p306, %p307
    %p309 = scmp.ne.s32.totalorder %s300, %s301
    %p310 = scmp.eq.s32.totalorder %s28, 0
    %p311 = por %p309, %p310
    %p312 = scmp.ne.s32.totalorder %s300, %s301
    %p313 = scmp.eq.s32.totalorder %s29, 1
    %p314 = por %p312, %p313
    %p316 = scmp.ne.s32.totalorder %s301, %s315
    %p317 = scmp.eq.s32.totalorder %s29, 0
    %p318 = por %p316, %p317
    %s320 = sadd.s32 %s319, 1
    %p323 = scmp.eq.s32.totalorder %s23, 1
    %p324 = scmp.ne.s32.totalorder %s319, %s321
    %p325 = scmp.eq.s32.totalorder %s23, 0
    %p326 = por %p324, %p325
    %p327 = scmp.ne.s32.totalorder %s319, %s321
    %p328 = scmp.eq.s32.totalorder %s28, 1
    %p329 = por %p327, %p328
    %p330 = scmp.ne.s32.totalorder %s321, %s322
    %p331 = scmp.eq.s32.totalorder %s28, 0
    %p332 = por %p330, %p331
    %p333 = scmp.ne.s32.totalorder %s321, %s322
    %p334 = scmp.eq.s32.totalorder %s29, 1
    %p335 = por %p333, %p334
    %p337 = scmp.ne.s32.totalorder %s322, %s336
    %p338 = scmp.eq.s32.totalorder %s29, 0
    %p339 = por %p337, %p338
    %s341 = sadd.s32 %s340, 1
    %p344 = scmp.eq.s32.totalorder %s23, 1
    %p345 = scmp.ne.s32.totalorder %s340, %s342
    %p346 = scmp.eq.s32.totalorder %s23, 0
    %p347 = por %p345, %p346
    %p348 = scmp.ne.s32.totalorder %s340, %s342
    %p349 = scmp.eq.s32.totalorder %s28, 1
    %p350 = por %p348, %p349
    %p351 = scmp.ne.s32.totalorder %s342, %s343
    %p352 = scmp.eq.s32.totalorder %s28, 0
    %p353 = por %p351, %p352
    %p354 = scmp.ne.s32.totalorder %s342, %s343
    %p355 = scmp.eq.s32.totalorder %s29, 1
    %p356 = por %p354, %p355
    %p358 = scmp.ne.s32.totalorder %s343, %s357
    %p359 = scmp.eq.s32.totalorder %s29, 0
    %p360 = por %p358, %p359
    %s361 = ssub.s32 %s23, %s30
    %p362 = scmp.eq.s32.totalorder %s361, 0
    %s364 = sadd.s32 %s363, 1
    %s365 = scalar_select %p362, %s363, %s364
    %p368 = pneg %p362
    %p369 = scmp.eq.s32.totalorder %s23, 1
    %p370 = por %p368, %p369
    %p371 = scmp.ne.s32.totalorder %s363, %s366
    %p372 = scmp.eq.s32.totalorder %s23, 0
    %p373 = por %p371, %p372
    %p374 = scmp.ne.s32.totalorder %s363, %s366
    %p375 = scmp.eq.s32.totalorder %s28, 1
    %p376 = por %p374, %p375
    %p377 = scmp.ne.s32.totalorder %s366, %s367
    %p378 = scmp.eq.s32.totalorder %s28, 0
    %p379 = por %p377, %p378
    %p380 = scmp.ne.s32.totalorder %s366, %s367
    %p381 = scmp.eq.s32.totalorder %s29, 1
    %p382 = por %p380, %p381
    %p384 = scmp.ne.s32.totalorder %s367, %s383
    %p385 = scmp.eq.s32.totalorder %s29, 0
    %p386 = por %p384, %p385
    %s387 = ssub.s32 %s23, %s30
    %p388 = scmp.eq.s32.totalorder %s387, 0
    %s390 = sadd.s32 %s389, 1
    %s391 = scalar_select %p388, %s389, %s390
    %p394 = pneg %p388
    %p395 = scmp.eq.s32.totalorder %s23, 1
    %p396 = por %p394, %p395
    %p397 = scmp.ne.s32.totalorder %s389, %s392
    %p398 = scmp.eq.s32.totalorder %s23, 0
    %p399 = por %p397, %p398
    %p400 = scmp.ne.s32.totalorder %s389, %s392
    %p401 = scmp.eq.s32.totalorder %s28, 1
    %p402 = por %p400, %p401
    %p403 = scmp.ne.s32.totalorder %s392, %s393
    %p404 = scmp.eq.s32.totalorder %s28, 0
    %p405 = por %p403, %p404
    %p406 = scmp.ne.s32.totalorder %s392, %s393
    %p407 = scmp.eq.s32.totalorder %s29, 1
    %p408 = por %p406, %p407
    %p410 = scmp.ne.s32.totalorder %s393, %s409
    %p411 = scmp.eq.s32.totalorder %s29, 0
    %p412 = por %p410, %p411
    %p413 = scmp.le.s32.totalorder 1, %s23
    %p414 = scmp.lt.s32.totalorder %s23, 3
    %p415 = pnand %p413, %p414
    %p416 = pneg %p415
    // Predicated region
    $region9: #{tpu_custom_call.1} parent=5 // pred_check
      _
    $region10: #{tpu_custom_call.1} parent=5 // pred_check_branch
      %418 = sbr.rel (%p415) target = $region12
    $region11: #{tpu_custom_call.1} parent=5 // pred_region
      %s419 = ssub.s32 %s23, 1
      // Predicated region
      $region13: #{tpu_custom_call.1} parent=11 // pred_check
        %p420 = pneg %p122
      $region14: #{tpu_custom_call.1} parent=11 // pred_check_branch
        %422 = sbr.rel (%p420) target = $region16
      $region15: #{tpu_custom_call.1} parent=11 // pred_region
        _
      $region16: #{tpu_custom_call.1} parent=11 // pred_fallthru
        _
      // Predicated region
      $region17: #{tpu_custom_call.1} parent=11 // pred_check
        %p423 = pneg %p143
      $region18: #{tpu_custom_call.1} parent=11 // pred_check_branch
        %425 = sbr.rel (%p423) target = $region20
      $region19: #{tpu_custom_call.1} parent=11 // pred_region
        _
      $region20: #{tpu_custom_call.1} parent=11 // pred_fallthru
        _
      // Predicated region
      $region21: #{tpu_custom_call.1} parent=11 // pred_check
        %p426 = pneg %p164
      $region22: #{tpu_custom_call.1} parent=11 // pred_check_branch
        %428 = sbr.rel (%p426) target = $region24
      $region23: #{tpu_custom_call.1} parent=11 // pred_region
        _
      $region24: #{tpu_custom_call.1} parent=11 // pred_fallthru
        _
      // Predicated region
      $region25: #{tpu_custom_call.1} parent=11 // pred_check
        %p429 = pneg %p185
      $region26: #{tpu_custom_call.1} parent=11 // pred_check_branch
        %431 = sbr.rel (%p429) target = $region28
      $region27: #{tpu_custom_call.1} parent=11 // pred_region
        _
      $region28: #{tpu_custom_call.1} parent=11 // pred_fallthru
        _
      // Predicated region
      $region29: #{tpu_custom_call.1} parent=11 // pred_check
        %p432 = pneg %p206
      $region30: #{tpu_custom_call.1} parent=11 // pred_check_branch
        %434 = sbr.rel (%p432) target = $region32
      $region31: #{tpu_custom_call.1} parent=11 // pred_region
        _
      $region32: #{tpu_custom_call.1} parent=11 // pred_fallthru
        _
      // Predicated region
      $region33: #{tpu_custom_call.1} parent=11 // pred_check
        %p435 = pneg %p227
      $region34: #{tpu_custom_call.1} parent=11 // pred_check_branch
        %437 = sbr.rel (%p435) target = $region36
      $region35: #{tpu_custom_call.1} parent=11 // pred_region
        _
      $region36: #{tpu_custom_call.1} parent=11 // pred_fallthru
        _
      // Predicated region
      $region37: #{tpu_custom_call.1} parent=11 // pred_check
        %p438 = pneg %p248
      $region38: #{tpu_custom_call.1} parent=11 // pred_check_branch
        %440 = sbr.rel (%p438) target = $region40
      $region39: #{tpu_custom_call.1} parent=11 // pred_region
        _
      $region40: #{tpu_custom_call.1} parent=11 // pred_fallthru
        _
      // Predicated region
      $region41: #{tpu_custom_call.1} parent=11 // pred_check
        %p441 = pneg %p269
      $region42: #{tpu_custom_call.1} parent=11 // pred_check_branch
        %443 = sbr.rel (%p441) target = $region44
      $region43: #{tpu_custom_call.1} parent=11 // pred_region
        _
      $region44: #{tpu_custom_call.1} parent=11 // pred_fallthru
        _
      // Predicated region
      $region45: #{tpu_custom_call.1} parent=11 // pred_check
        %p444 = pneg %p290
      $region46: #{tpu_custom_call.1} parent=11 // pred_check_branch
        %446 = sbr.rel (%p444) target = $region48
      $region47: #{tpu_custom_call.1} parent=11 // pred_region
        _
      $region48: #{tpu_custom_call.1} parent=11 // pred_fallthru
        _
      // Predicated region
      $region49: #{tpu_custom_call.1} parent=11 // pred_check
        %p447 = pneg %p311
      $region50: #{tpu_custom_call.1} parent=11 // pred_check_branch
        %449 = sbr.rel (%p447) target = $region52
      $region51: #{tpu_custom_call.1} parent=11 // pred_region
        _
      $region52: #{tpu_custom_call.1} parent=11 // pred_fallthru
        _
      // Predicated region
      $region53: #{tpu_custom_call.1} parent=11 // pred_check
        %p450 = pneg %p332
      $region54: #{tpu_custom_call.1} parent=11 // pred_check_branch
        %452 = sbr.rel (%p450) target = $region56
      $region55: #{tpu_custom_call.1} parent=11 // pred_region
        _
      $region56: #{tpu_custom_call.1} parent=11 // pred_fallthru
        _
      // Predicated region
      $region57: #{tpu_custom_call.1} parent=11 // pred_check
        %p453 = pneg %p353
      $region58: #{tpu_custom_call.1} parent=11 // pred_check_branch
        %455 = sbr.rel (%p453) target = $region60
      $region59: #{tpu_custom_call.1} parent=11 // pred_region
        _
      $region60: #{tpu_custom_call.1} parent=11 // pred_fallthru
        _
    $region12: #{tpu_custom_call.1} parent=5 // pred_fallthru
      _
    %p456 = scmp.lt.s32.totalorder %s23, 2
    // Predicated region
    $region61: #{tpu_custom_call.1} parent=5 // pred_check
      %p457 = pneg %p456
    $region62: #{tpu_custom_call.1} parent=5 // pred_check_branch
      %459 = sbr.rel (%p457) target = $region64
    $region63: #{tpu_custom_call.1} parent=5 // pred_region
      // Predicated region
      $region65: #{tpu_custom_call.1} parent=63 // pred_check
        %p460 = pneg %p43
      $region66: #{tpu_custom_call.1} parent=63 // pred_check_branch
        %462 = sbr.rel (%p460) target = $region68
      $region67: #{tpu_custom_call.1} parent=63 // pred_region
        %s463 = smul.u32 16, %s23
        %p464 = scmp.lt.s32.totalorder %s463, 31
        %s465 = scalar_select %p464, %s463, 31
        %s466 = smul.addr %s465, 8
        %s467 = scalar_lea.vmem %s0, %s466
        %s468 = smul.u32 16, %s23
      $region68: #{tpu_custom_call.1} parent=63 // pred_fallthru
        _
      // Predicated region
      $region69: #{tpu_custom_call.1} parent=63 // pred_check
        %p469 = pneg %p69
      $region70: #{tpu_custom_call.1} parent=63 // pred_check_branch
        %471 = sbr.rel (%p469) target = $region72
      $region71: #{tpu_custom_call.1} parent=63 // pred_region
        %s472 = smul.u32 16, %s23
        %p473 = scmp.lt.s32.totalorder %s472, 31
        %s474 = scalar_select %p473, %s472, 31
        %s475 = smul.addr %s474, 8
        %s476 = scalar_lea.vmem %s1, %s475
        %s477 = smul.u32 16, %s23
      $region72: #{tpu_custom_call.1} parent=63 // pred_fallthru
        _
      // Predicated region
      $region73: #{tpu_custom_call.1} parent=63 // pred_check
        %p478 = pneg %p95
      $region74: #{tpu_custom_call.1} parent=63 // pred_check_branch
        %480 = sbr.rel (%p478) target = $region76
      $region75: #{tpu_custom_call.1} parent=63 // pred_region
        %s481 = smul.u32 16, %s23
        %p482 = scmp.lt.s32.totalorder %s481, 31
        %s483 = scalar_select %p482, %s481, 31
        %s484 = smul.addr %s483, 8
        %s485 = scalar_lea.vmem %s2, %s484
        %s486 = smul.u32 16, %s23
      $region76: #{tpu_custom_call.1} parent=63 // pred_fallthru
        _
    $region64: #{tpu_custom_call.1} parent=5 // pred_fallthru
      _
    %p487 = scmp.le.s32.totalorder 1, %s23
    %p488 = scmp.lt.s32.totalorder %s23, 3
    %p489 = pnand %p487, %p488
    %p490 = pneg %p489
    // Predicated region
    $region77: #{tpu_custom_call.1} parent=5 // pred_check
      _
    $region78: #{tpu_custom_call.1} parent=5 // pred_check_branch
      %492 = sbr.rel (%p489) target = $region80
    $region79: #{tpu_custom_call.1} parent=5 // pred_region
      %s493 = ssub.s32 %s23, 1
      %s494 = smul.u32 16, %s28
      %p495 = scmp.lt.s32.totalorder %s494, 31
      %s496 = scalar_select %p495, %s494, 31
      %s497 = smul.addr %s496, 8
      %s498 = scalar_lea.vmem %s0, %s497
      %p499 = pneg %p49
      %p500 = pneg %p46
      %s501 = smul.u32 16, %s28
      %p502 = scmp.lt.s32.totalorder %s501, 31
      %s503 = scalar_select %p502, %s501, 31
      %s504 = smul.addr %s503, 8
      %s505 = scalar_lea.vmem %s1, %s504
      %p506 = pneg %p75
      %p507 = pneg %p72
      %s508 = smul.u32 16, %s28
      %p509 = scmp.lt.s32.totalorder %s508, 31
      %s510 = scalar_select %p509, %s508, 31
      %s511 = smul.addr %s510, 8
      %s512 = scalar_lea.vmem %s2, %s511
      %p513 = pneg %p101
      %p514 = pneg %p98
      %p515 = pneg %p122
      %p516 = pneg %p119
      %p517 = pneg %p143
      %p518 = pneg %p140
      %p519 = pneg %p164
      %p520 = pneg %p161
      %p521 = pneg %p185
      %p522 = pneg %p182
      %p523 = pneg %p206
      %p524 = pneg %p203
      %p525 = pneg %p227
      %p526 = pneg %p224
      %p527 = pneg %p248
      %p528 = pneg %p245
      %p529 = pneg %p269
      %p530 = pneg %p266
      %p531 = pneg %p290
      %p532 = pneg %p287
      %p533 = pneg %p311
      %p534 = pneg %p308
      %p535 = pneg %p332
      %p536 = pneg %p329
      %p537 = pneg %p353
      %p538 = pneg %p350
      %p539 = pneg %p379
      %p540 = pneg %p376
      %s541 = smul.u32 16, %s28
      %p542 = scmp.lt.s32.totalorder %s541, 31
      %s543 = scalar_select %p542, %s541, 31
      %s544 = smul.addr %s543, 8
      %s545 = scalar_lea.vmem %s15, %s544
      %p546 = pneg %p405
      %p547 = pneg %p402
      %s548 = smul.u32 16, %s28
      %p549 = scmp.lt.s32.totalorder %s548, 31
      %s550 = scalar_select %p549, %s548, 31
      %s551 = smul.addr %s550, 8
      %s552 = scalar_lea.vmem %s16, %s551
      %s553 = smul.u32 16, %s28
      %p554 = scmp.lt.s32.totalorder %s553, 31
      %s555 = scalar_select %p554, %s553, 31
      %s556 = smul.addr %s555, 8
      %s557 = scalar_lea.vmem %s0, %s556
      %s558 = smul.u32 16, %s28
      %s559 = smul.u32 16, %s28
      %p560 = scmp.lt.s32.totalorder %s559, 31
      %s561 = scalar_select %p560, %s559, 31
      %s562 = smul.addr %s561, 8
      %s563 = scalar_lea.vmem %s1, %s562
      %s564 = smul.u32 16, %s28
      %s565 = smul.u32 16, %s28
      %p566 = scmp.lt.s32.totalorder %s565, 31
      %s567 = scalar_select %p566, %s565, 31
      %s568 = smul.addr %s567, 8
      %s569 = scalar_lea.vmem %s2, %s568
      %s570 = smul.u32 16, %s28
      %s571 = smul.u32 16, %s28
      %p572 = scmp.lt.s32.totalorder %s571, 31
      %s573 = scalar_select %p572, %s571, 31
      %s574 = smul.addr %s573, 8
      %s575 = scalar_lea.vmem %s15, %s574
      %s576 = smul.u32 16, %s28
      %s577 = smul.u32 16, %s28
      %p578 = scmp.lt.s32.totalorder %s577, 31
      %s579 = scalar_select %p578, %s577, 31
      %s580 = smul.addr %s579, 8
      %s581 = scalar_lea.vmem %s16, %s580
      %s582 = smul.u32 16, %s28
      %v583 = vld [vmem:[%s557] sm:$0xff]
      %v584 = vld [vmem:[%s557 + $0x8] sm:$0xff]
      %v585 = vld [vmem:[%s557 + $0x10] sm:$0xff]
      %v586 = vld [vmem:[%s557 + $0x18] sm:$0xff]
      %v587 = vld [vmem:[%s557 + $0x20] sm:$0xff]
      %v588 = vld [vmem:[%s557 + $0x28] sm:$0xff]
      %v589 = vld [vmem:[%s557 + $0x30] sm:$0xff]
      %v590 = vld [vmem:[%s557 + $0x38] sm:$0xff]
      %v591 = vld [vmem:[%s557 + $0x40] sm:$0xff]
      %v592 = vld [vmem:[%s557 + $0x48] sm:$0xff]
      %v593 = vld [vmem:[%s557 + $0x50] sm:$0xff]
      %v594 = vld [vmem:[%s557 + $0x58] sm:$0xff]
      %v595 = vld [vmem:[%s557 + $0x60] sm:$0xff]
      %v596 = vld [vmem:[%s557 + $0x68] sm:$0xff]
      %v597 = vld [vmem:[%s557 + $0x70] sm:$0xff]
      %v598 = vld [vmem:[%s557 + $0x78] sm:$0xff]
      %v599 = vadd.f32 %v583, 1.0
      %v600 = vadd.f32 %v584, 1.0
      %v601 = vadd.f32 %v585, 1.0
      %v602 = vadd.f32 %v586, 1.0
      %v603 = vadd.f32 %v587, 1.0
      %v604 = vadd.f32 %v588, 1.0
      %v605 = vadd.f32 %v589, 1.0
      %v606 = vadd.f32 %v590, 1.0
      %v607 = vadd.f32 %v591, 1.0
      %v608 = vadd.f32 %v592, 1.0
      %v609 = vadd.f32 %v593, 1.0
      %v610 = vadd.f32 %v594, 1.0
      %v611 = vadd.f32 %v595, 1.0
      %v612 = vadd.f32 %v596, 1.0
      %v613 = vadd.f32 %v597, 1.0
      %v614 = vadd.f32 %v598, 1.0
      %v615 = vlog2.pop %v599
      %v616 = vmul.f32 %v615, 0.6931472
      %v617 = vlog2.pop %v600
      %v618 = vmul.f32 %v617, 0.6931472
      %v619 = vlog2.pop %v601
      %v620 = vmul.f32 %v619, 0.6931472
      %v621 = vlog2.pop %v602
      %v622 = vmul.f32 %v621, 0.6931472
      %v623 = vlog2.pop %v603
      %v624 = vmul.f32 %v623, 0.6931472
      %v625 = vlog2.pop %v604
      %v626 = vmul.f32 %v625, 0.6931472
      %v627 = vlog2.pop %v605
      %v628 = vmul.f32 %v627, 0.6931472
      %v629 = vlog2.pop %v606
      %v630 = vmul.f32 %v629, 0.6931472
      %v631 = vlog2.pop %v607
      %v632 = vmul.f32 %v631, 0.6931472
      %v633 = vlog2.pop %v608
      %v634 = vmul.f32 %v633, 0.6931472
      %v635 = vlog2.pop %v609
      %v636 = vmul.f32 %v635, 0.6931472
      %v637 = vlog2.pop %v610
      %v638 = vmul.f32 %v637, 0.6931472
      %v639 = vlog2.pop %v611
      %v640 = vmul.f32 %v639, 0.6931472
      %v641 = vlog2.pop %v612
      %v642 = vmul.f32 %v641, 0.6931472
      %v643 = vlog2.pop %v613
      %v644 = vmul.f32 %v643, 0.6931472
      %v645 = vlog2.pop %v614
      %v646 = vmul.f32 %v645, 0.6931472
      %v647 = vld [vmem:[%s3] sm:$0xff]
      %v648 = vld [vmem:[%s3 + $0x8] sm:$0xff]
      %v649 = vld [vmem:[%s3 + $0x10] sm:$0xff]
      %v650 = vld [vmem:[%s3 + $0x18] sm:$0xff]
      %v651 = vld [vmem:[%s4] sm:$0x1]
      %v653 = vlaneseq
      %v654 = vshrl.u32 %v653, 7
      %v655 = vsub.s32 0, %v654
      %v656 = vrot.slane %v651, %v655
      %vm658 = vcmask 261120
      %v660 = vsel %vm658, %v616, 0
      %v663 = vsel %vm658, %v618, 0
      %v666 = vsel %vm658, %v620, 0
      %v669 = vsel %vm658, %v622, 0
      %v672 = vsel %vm658, %v624, 0
      %v675 = vsel %vm658, %v626, 0
      %v678 = vsel %vm658, %v628, 0
      %v681 = vsel %vm658, %v630, 0
      %v684 = vsel %vm658, %v632, 0
      %v687 = vsel %vm658, %v634, 0
      %v690 = vsel %vm658, %v636, 0
      %v693 = vsel %vm658, %v638, 0
      %v696 = vsel %vm658, %v640, 0
      %v699 = vsel %vm658, %v642, 0
      %v702 = vsel %vm658, %v644, 0
      %v705 = vsel %vm658, %v646, 0
      %707 = vmatprep.subr.mxu0 0.0
      %708 = vmatpush1.msra.mxu0 %v647
      %709 = vmatprep.subr.mxu0 0.0
      %710 = vmatpush1.msra.mxu0 %v648
      %711 = vmatprep.subr.mxu0 0.0
      %712 = vmatpush1.msra.mxu0 %v649
      %713 = vmatprep.subr.mxu0 0.0
      %714 = vmatpush1.msra.mxu0 %v650
      %715 = vmatprep.subr.mxu0 0.0
      %716 = vmatpush1.msra.mxu0 0.0
      %717 = vmatprep.subr.mxu0 0.0
      %718 = vmatpush1.msra.mxu0 0.0
      %719 = vmatprep.subr.mxu0 0.0
      %720 = vmatpush1.msra.mxu0 0.0
      %721 = vmatprep.subr.mxu0 0.0
      %722 = vmatpush1.msra.mxu0 0.0
      %723 = vmatprep.subr.mxu0 0.0
      %724 = vmatpush1.msra.mxu0 0.0
      %725 = vmatprep.subr.mxu0 0.0
      %726 = vmatpush1.msra.mxu0 0.0
      %727 = vmatprep.subr.mxu0 0.0
      %728 = vmatpush1.msra.mxu0 0.0
      %729 = vmatprep.subr.mxu0 0.0
      %730 = vmatpush1.msra.mxu0 0.0
      %731 = vmatprep.subr.mxu0 0.0
      %732 = vmatpush1.msra.mxu0 0.0
      %733 = vmatprep.subr.mxu0 0.0
      %734 = vmatpush1.msra.mxu0 0.0
      %735 = vmatprep.subr.mxu0 0.0
      %736 = vmatpush1.msra.mxu0 0.0
      %737 = vmatprep.subr.mxu0 0.0
      %738 = vmatpush1.msra.mxu0 0.0
      %739 = vmatprep.subr.mxu0 0.0
      %740 = vmatpush1.msra.mxu0 0.0
      %741 = vmatprep.subr.mxu0 0.0
      %742 = vmatpush1.msra.mxu0 0.0
      %743 = vmatprep.subr.mxu0 0.0
      %744 = vmatpush1.msra.mxu0 0.0
      %745 = vmatprep.subr.mxu0 0.0
      %746 = vmatpush1.msra.mxu0 0.0
      %747 = vmatprep.subr.mxu0 0.0
      %748 = vmatpush1.msra.mxu0 0.0
      %749 = vmatprep.subr.mxu0 0.0
      %750 = vmatpush1.msra.mxu0 0.0
      %751 = vmatprep.subr.mxu0 0.0
      %752 = vmatpush1.msra.mxu0 0.0
      %753 = vmatprep.subr.mxu0 0.0
      %754 = vmatpush1.msra.mxu0 0.0
      %755 = vmatprep.subr.mxu0 0.0
      %756 = vmatpush1.msra.mxu0 0.0
      %757 = vmatprep.subr.mxu0 0.0
      %758 = vmatpush1.msra.mxu0 0.0
      %759 = vmatprep.subr.mxu0 0.0
      %760 = vmatpush1.msra.mxu0 0.0
      %761 = vmatprep.subr.mxu0 0.0
      %762 = vmatpush1.msra.mxu0 0.0
      %763 = vmatprep.subr.mxu0 0.0
      %764 = vmatpush1.msra.mxu0 0.0
      %765 = vmatprep.subr.mxu0 0.0
      %766 = vmatpush1.msra.mxu0 0.0
      %767 = vmatprep.subr.mxu0 0.0
      %768 = vmatpush1.msra.mxu0 0.0
      %769 = vmatprep.subr.mxu0 0.0
      %770 = vmatpush1.msra.mxu0 0.0
      %771 = vmatprep.mubr.f32.mxu0 0.0
      %772 = vmatmul.mubr.f32.gmra.mrb[0].mxu0 %v660
      %v773 = vpop.f32.mrb[0].mxu0
      %v774 = vadd.f32 %v656, %v773
      %v775 = vpop.f32.mrb[0].mxu0
      %776 = vmatprep.mubr.f32.mxu0 0.0
      %777 = vmatmul.mubr.f32.gmra.mrb[0].mxu0 %v663
      %v778 = vpop.f32.mrb[0].mxu0
      %v779 = vadd.f32 %v656, %v778
      %v780 = vpop.f32.mrb[0].mxu0
      %781 = vmatprep.mubr.f32.mxu0 0.0
      %782 = vmatmul.mubr.f32.gmra.mrb[0].mxu0 %v666
      %v783 = vpop.f32.mrb[0].mxu0
      %v784 = vadd.f32 %v656, %v783
      %v785 = vpop.f32.mrb[0].mxu0
      %786 = vmatprep.mubr.f32.mxu0 0.0
      %787 = vmatmul.mubr.f32.gmra.mrb[0].mxu0 %v669
      %v788 = vpop.f32.mrb[0].mxu0
      %v789 = vadd.f32 %v656, %v788
      %v790 = vpop.f32.mrb[0].mxu0
      %791 = vmatprep.mubr.f32.mxu0 0.0
      %792 = vmatmul.mubr.f32.gmra.mrb[0].mxu0 %v672
      %v793 = vpop.f32.mrb[0].mxu0
      %v794 = vadd.f32 %v656, %v793
      %v795 = vpop.f32.mrb[0].mxu0
      %796 = vmatprep.mubr.f32.mxu0 0.0
      %797 = vmatmul.mubr.f32.gmra.mrb[0].mxu0 %v675
      %v798 = vpop.f32.mrb[0].mxu0
      %v799 = vadd.f32 %v656, %v798
      %v800 = vpop.f32.mrb[0].mxu0
      %801 = vmatprep.mubr.f32.mxu0 0.0
      %802 = vmatmul.mubr.f32.gmra.mrb[0].mxu0 %v678
      %v803 = vpop.f32.mrb[0].mxu0
      %v804 = vadd.f32 %v656, %v803
      %v805 = vpop.f32.mrb[0].mxu0
      %806 = vmatprep.mubr.f32.mxu0 0.0
      %807 = vmatmul.mubr.f32.gmra.mrb[0].mxu0 %v681
      %v808 = vpop.f32.mrb[0].mxu0
      %v809 = vadd.f32 %v656, %v808
      %v810 = vpop.f32.mrb[0].mxu0
      %811 = vmatprep.mubr.f32.mxu0 0.0
      %812 = vmatmul.mubr.f32.gmra.mrb[0].mxu0 %v684
      %v813 = vpop.f32.mrb[0].mxu0
      %v814 = vadd.f32 %v656, %v813
      %v815 = vpop.f32.mrb[0].mxu0
      %816 = vmatprep.mubr.f32.mxu0 0.0
      %817 = vmatmul.mubr.f32.gmra.mrb[0].mxu0 %v687
      %v818 = vpop.f32.mrb[0].mxu0
      %v819 = vadd.f32 %v656, %v818
      %v820 = vpop.f32.mrb[0].mxu0
      %821 = vmatprep.mubr.f32.mxu0 0.0
      %822 = vmatmul.mubr.f32.gmra.mrb[0].mxu0 %v690
      %v823 = vpop.f32.mrb[0].mxu0
      %v824 = vadd.f32 %v656, %v823
      %v825 = vpop.f32.mrb[0].mxu0
      %826 = vmatprep.mubr.f32.mxu0 0.0
      %827 = vmatmul.mubr.f32.gmra.mrb[0].mxu0 %v693
      %v828 = vpop.f32.mrb[0].mxu0
      %v829 = vadd.f32 %v656, %v828
      %v830 = vpop.f32.mrb[0].mxu0
      %831 = vmatprep.mubr.f32.mxu0 0.0
      %832 = vmatmul.mubr.f32.gmra.mrb[0].mxu0 %v696
      %v833 = vpop.f32.mrb[0].mxu0
      %v834 = vadd.f32 %v656, %v833
      %v835 = vpop.f32.mrb[0].mxu0
      %836 = vmatprep.mubr.f32.mxu0 0.0
      %837 = vmatmul.mubr.f32.gmra.mrb[0].mxu0 %v699
      %v838 = vpop.f32.mrb[0].mxu0
      %v839 = vadd.f32 %v656, %v838
      %v840 = vpop.f32.mrb[0].mxu0
      %841 = vmatprep.mubr.f32.mxu0 0.0
      %842 = vmatmul.mubr.f32.gmra.mrb[0].mxu0 %v702
      %v843 = vpop.f32.mrb[0].mxu0
      %v844 = vadd.f32 %v656, %v843
      %v845 = vpop.f32.mrb[0].mxu0
      %846 = vmatprep.mubr.f32.mxu0 0.0
      %847 = vmatmul.mubr.f32.gmra.mrb[0].mxu0 %v705
      %v848 = vpop.f32.mrb[0].mxu0
      %v849 = vadd.f32 %v656, %v848
      %v850 = vpop.f32.mrb[0].mxu0
      %851 = vdwg.mxu0
      %v852 = vmax.f32 %v774, 0.0
      %v853 = vmax.f32 %v779, 0.0
      %v854 = vmax.f32 %v784, 0.0
      %v855 = vmax.f32 %v789, 0.0
      %v856 = vmax.f32 %v794, 0.0
      %v857 = vmax.f32 %v799, 0.0
      %v858 = vmax.f32 %v804, 0.0
      %v859 = vmax.f32 %v809, 0.0
      %v860 = vmax.f32 %v814, 0.0
      %v861 = vmax.f32 %v819, 0.0
      %v862 = vmax.f32 %v824, 0.0
      %v863 = vmax.f32 %v829, 0.0
      %v864 = vmax.f32 %v834, 0.0
      %v865 = vmax.f32 %v839, 0.0
      %v866 = vmax.f32 %v844, 0.0
      %v867 = vmax.f32 %v849, 0.0
      %v868 = vld [vmem:[%s5] sm:$0xff]
      %v869 = vld [vmem:[%s5 + $0x8] sm:$0xff]
      %v870 = vld [vmem:[%s5 + $0x10] sm:$0xff]
      %v871 = vld [vmem:[%s5 + $0x18] sm:$0xff]
      %v872 = vld [vmem:[%s6] sm:$0x1]
      %v874 = vlaneseq
      %v875 = vshrl.u32 %v874, 7
      %v876 = vsub.s32 0, %v875
      %v877 = vrot.slane %v872, %v876
      %v880 = vsel %vm658, %v852, 0
      %v883 = vsel %vm658, %v853, 0
      %v886 = vsel %vm658, %v854, 0
      %v889 = vsel %vm658, %v855, 0
      %v892 = vsel %vm658, %v856, 0
      %v895 = vsel %vm658, %v857, 0
      %v898 = vsel %vm658, %v858, 0
      %v901 = vsel %vm658, %v859, 0
      %v904 = vsel %vm658, %v860, 0
      %v907 = vsel %vm658, %v861, 0
      %v910 = vsel %vm658, %v862, 0
      %v913 = vsel %vm658, %v863, 0
      %v916 = vsel %vm658, %v864, 0
      %v919 = vsel %vm658, %v865, 0
      %v922 = vsel %vm658, %v866, 0
      %v925 = vsel %vm658, %v867, 0
      %927 = vmatprep.subr.mxu0 0.0
      %928 = vmatpush1.msra.mxu0 %v868
      %929 = vmatprep.subr.mxu0 0.0
      %930 = vmatpush1.msra.mxu0 %v869
      %931 = vmatprep.subr.mxu0 0.0
      %932 = vmatpush1.msra.mxu0 %v870
      %933 = vmatprep.subr.mxu0 0.0
      %934 = vmatpush1.msra.mxu0 %v871
      %935 = vmatprep.subr.mxu0 0.0
      %936 = vmatpush1.msra.mxu0 0.0
      %937 = vmatprep.subr.mxu0 0.0
      %938 = vmatpush1.msra.mxu0 0.0
      %939 = vmatprep.subr.mxu0 0.0
      %940 = vmatpush1.msra.mxu0 0.0
      %941 = vmatprep.subr.mxu0 0.0
      %942 = vmatpush1.msra.mxu0 0.0
      %943 = vmatprep.subr.mxu0 0.0
      %944 = vmatpush1.msra.mxu0 0.0
      %945 = vmatprep.subr.mxu0 0.0
      %946 = vmatpush1.msra.mxu0 0.0
      %947 = vmatprep.subr.mxu0 0.0
      %948 = vmatpush1.msra.mxu0 0.0
      %949 = vmatprep.subr.mxu0 0.0
      %950 = vmatpush1.msra.mxu0 0.0
      %951 = vmatprep.subr.mxu0 0.0
      %952 = vmatpush1.msra.mxu0 0.0
      %953 = vmatprep.subr.mxu0 0.0
      %954 = vmatpush1.msra.mxu0 0.0
      %955 = vmatprep.subr.mxu0 0.0
      %956 = vmatpush1.msra.mxu0 0.0
      %957 = vmatprep.subr.mxu0 0.0
      %958 = vmatpush1.msra.mxu0 0.0
      %959 = vmatprep.subr.mxu0 0.0
      %960 = vmatpush1.msra.mxu0 0.0
      %961 = vmatprep.subr.mxu0 0.0
      %962 = vmatpush1.msra.mxu0 0.0
      %963 = vmatprep.subr.mxu0 0.0
      %964 = vmatpush1.msra.mxu0 0.0
      %965 = vmatprep.subr.mxu0 0.0
      %966 = vmatpush1.msra.mxu0 0.0
      %967 = vmatprep.subr.mxu0 0.0
      %968 = vmatpush1.msra.mxu0 0.0
      %969 = vmatprep.subr.mxu0 0.0
      %970 = vmatpush1.msra.mxu0 0.0
      %971 = vmatprep.subr.mxu0 0.0
      %972 = vmatpush1.msra.mxu0 0.0
      %973 = vmatprep.subr.mxu0 0.0
      %974 = vmatpush1.msra.mxu0 0.0
      %975 = vmatprep.subr.mxu0 0.0
      %976 = vmatpush1.msra.mxu0 0.0
      %977 = vmatprep.subr.mxu0 0.0
      %978 = vmatpush1.msra.mxu0 0.0
      %979 = vmatprep.subr.mxu0 0.0
      %980 = vmatpush1.msra.mxu0 0.0
      %981 = vmatprep.subr.mxu0 0.0
      %982 = vmatpush1.msra.mxu0 0.0
      %983 = vmatprep.subr.mxu0 0.0
      %984 = vmatpush1.msra.mxu0 0.0
      %985 = vmatprep.subr.mxu0 0.0
      %986 = vmatpush1.msra.mxu0 0.0
      %987 = vmatprep.subr.mxu0 0.0
      %988 = vmatpush1.msra.mxu0 0.0
      %989 = vmatprep.subr.mxu0 0.0
      %990 = vmatpush1.msra.mxu0 0.0
      %991 = vmatprep.mubr.f32.mxu0 0.0
      %992 = vmatmul.mubr.f32.gmra.mrb[0].mxu0 %v880
      %v993 = vpop.f32.mrb[0].mxu0
      %v994 = vadd.f32 %v877, %v993
      %v995 = vpop.f32.mrb[0].mxu0
      %996 = vmatprep.mubr.f32.mxu0 0.0
      %997 = vmatmul.mubr.f32.gmra.mrb[0].mxu0 %v883
      %v998 = vpop.f32.mrb[0].mxu0
      %v999 = vadd.f32 %v877, %v998
      %v1000 = vpop.f32.mrb[0].mxu0
      %1001 = vmatprep.mubr.f32.mxu0 0.0
      %1002 = vmatmul.mubr.f32.gmra.mrb[0].mxu0 %v886
      %v1003 = vpop.f32.mrb[0].mxu0
      %v1004 = vadd.f32 %v877, %v1003
      %v1005 = vpop.f32.mrb[0].mxu0
      %1006 = vmatprep.mubr.f32.mxu0 0.0
      %1007 = vmatmul.mubr.f32.gmra.mrb[0].mxu0 %v889
      %v1008 = vpop.f32.mrb[0].mxu0
      %v1009 = vadd.f32 %v877, %v1008
      %v1010 = vpop.f32.mrb[0].mxu0
      %1011 = vmatprep.mubr.f32.mxu0 0.0
      %1012 = vmatmul.mubr.f32.gmra.mrb[0].mxu0 %v892
      %v1013 = vpop.f32.mrb[0].mxu0
      %v1014 = vadd.f32 %v877, %v1013
      %v1015 = vpop.f32.mrb[0].mxu0
      %1016 = vmatprep.mubr.f32.mxu0 0.0
      %1017 = vmatmul.mubr.f32.gmra.mrb[0].mxu0 %v895
      %v1018 = vpop.f32.mrb[0].mxu0
      %v1019 = vadd.f32 %v877, %v1018
      %v1020 = vpop.f32.mrb[0].mxu0
      %1021 = vmatprep.mubr.f32.mxu0 0.0
      %1022 = vmatmul.mubr.f32.gmra.mrb[0].mxu0 %v898
      %v1023 = vpop.f32.mrb[0].mxu0
      %v1024 = vadd.f32 %v877, %v1023
      %v1025 = vpop.f32.mrb[0].mxu0
      %1026 = vmatprep.mubr.f32.mxu0 0.0
      %1027 = vmatmul.mubr.f32.gmra.mrb[0].mxu0 %v901
      %v1028 = vpop.f32.mrb[0].mxu0
      %v1029 = vadd.f32 %v877, %v1028
      %v1030 = vpop.f32.mrb[0].mxu0
      %1031 = vmatprep.mubr.f32.mxu0 0.0
      %1032 = vmatmul.mubr.f32.gmra.mrb[0].mxu0 %v904
      %v1033 = vpop.f32.mrb[0].mxu0
      %v1034 = vadd.f32 %v877, %v1033
      %v1035 = vpop.f32.mrb[0].mxu0
      %1036 = vmatprep.mubr.f32.mxu0 0.0
      %1037 = vmatmul.mubr.f32.gmra.mrb[0].mxu0 %v907
      %v1038 = vpop.f32.mrb[0].mxu0
      %v1039 = vadd.f32 %v877, %v1038
      %v1040 = vpop.f32.mrb[0].mxu0
      %1041 = vmatprep.mubr.f32.mxu0 0.0
      %1042 = vmatmul.mubr.f32.gmra.mrb[0].mxu0 %v910
      %v1043 = vpop.f32.mrb[0].mxu0
      %v1044 = vadd.f32 %v877, %v1043
      %v1045 = vpop.f32.mrb[0].mxu0
      %1046 = vmatprep.mubr.f32.mxu0 0.0
      %1047 = vmatmul.mubr.f32.gmra.mrb[0].mxu0 %v913
      %v1048 = vpop.f32.mrb[0].mxu0
      %v1049 = vadd.f32 %v877, %v1048
      %v1050 = vpop.f32.mrb[0].mxu0
      %1051 = vmatprep.mubr.f32.mxu0 0.0
      %1052 = vmatmul.mubr.f32.gmra.mrb[0].mxu0 %v916
      %v1053 = vpop.f32.mrb[0].mxu0
      %v1054 = vadd.f32 %v877, %v1053
      %v1055 = vpop.f32.mrb[0].mxu0
      %1056 = vmatprep.mubr.f32.mxu0 0.0
      %1057 = vmatmul.mubr.f32.gmra.mrb[0].mxu0 %v919
      %v1058 = vpop.f32.mrb[0].mxu0
      %v1059 = vadd.f32 %v877, %v1058
      %v1060 = vpop.f32.mrb[0].mxu0
      %1061 = vmatprep.mubr.f32.mxu0 0.0
      %1062 = vmatmul.mubr.f32.gmra.mrb[0].mxu0 %v922
      %v1063 = vpop.f32.mrb[0].mxu0
      %v1064 = vadd.f32 %v877, %v1063
      %v1065 = vpop.f32.mrb[0].mxu0
      %1066 = vmatprep.mubr.f32.mxu0 0.0
      %1067 = vmatmul.mubr.f32.gmra.mrb[0].mxu0 %v925
      %v1068 = vpop.f32.mrb[0].mxu0
      %v1069 = vadd.f32 %v877, %v1068
      %v1070 = vpop.f32.mrb[0].mxu0
      %1071 = vdwg.mxu0
      %v1072 = vmax.f32 %v994, 0.0
      %v1073 = vmax.f32 %v999, 0.0
      %v1074 = vmax.f32 %v1004, 0.0
      %v1075 = vmax.f32 %v1009, 0.0
      %v1076 = vmax.f32 %v1014, 0.0
      %v1077 = vmax.f32 %v1019, 0.0
      %v1078 = vmax.f32 %v1024, 0.0
      %v1079 = vmax.f32 %v1029, 0.0
      %v1080 = vmax.f32 %v1034, 0.0
      %v1081 = vmax.f32 %v1039, 0.0
      %v1082 = vmax.f32 %v1044, 0.0
      %v1083 = vmax.f32 %v1049, 0.0
      %v1084 = vmax.f32 %v1054, 0.0
      %v1085 = vmax.f32 %v1059, 0.0
      %v1086 = vmax.f32 %v1064, 0.0
      %v1087 = vmax.f32 %v1069, 0.0
      %v1088 = vld [vmem:[%s7] sm:$0xff]
      %v1089 = vld [vmem:[%s7 + $0x8] sm:$0xff]
      %v1090 = vld [vmem:[%s7 + $0x10] sm:$0xff]
      %v1091 = vld [vmem:[%s7 + $0x18] sm:$0xff]
      %v1092 = vld [vmem:[%s8] sm:$0x1]
      %v1094 = vlaneseq
      %v1095 = vshrl.u32 %v1094, 7
      %v1096 = vsub.s32 0, %v1095
      %v1097 = vrot.slane %v1092, %v1096
      %v1100 = vsel %vm658, %v1072, 0
      %v1103 = vsel %vm658, %v1073, 0
      %v1106 = vsel %vm658, %v1074, 0
      %v1109 = vsel %vm658, %v1075, 0
      %v1112 = vsel %vm658, %v1076, 0
      %v1115 = vsel %vm658, %v1077, 0
      %v1118 = vsel %vm658, %v1078, 0
      %v1121 = vsel %vm658, %v1079, 0
      %v1124 = vsel %vm658, %v1080, 0
      %v1127 = vsel %vm658, %v1081, 0
      %v1130 = vsel %vm658, %v1082, 0
      %v1133 = vsel %vm658, %v1083, 0
      %v1136 = vsel %vm658, %v1084, 0
      %v1139 = vsel %vm658, %v1085, 0
      %v1142 = vsel %vm658, %v1086, 0
      %v1145 = vsel %vm658, %v1087, 0
      %1147 = vmatprep.subr.mxu0 0.0
      %1148 = vmatpush1.msra.mxu0 %v1088
      %1149 = vmatprep.subr.mxu0 0.0
      %1150 = vmatpush1.msra.mxu0 %v1089
      %1151 = vmatprep.subr.mxu0 0.0
      %1152 = vmatpush1.msra.mxu0 %v1090
      %1153 = vmatprep.subr.mxu0 0.0
      %1154 = vmatpush1.msra.mxu0 %v1091
      %1155 = vmatprep.subr.mxu0 0.0
      %1156 = vmatpush1.msra.mxu0 0.0
      %1157 = vmatprep.subr.mxu0 0.0
      %1158 = vmatpush1.msra.mxu0 0.0
      %1159 = vmatprep.subr.mxu0 0.0
      %1160 = vmatpush1.msra.mxu0 0.0
      %1161 = vmatprep.subr.mxu0 0.0
      %1162 = vmatpush1.msra.mxu0 0.0
      %1163 = vmatprep.subr.mxu0 0.0
      %1164 = vmatpush1.msra.mxu0 0.0
      %1165 = vmatprep.subr.mxu0 0.0
      %1166 = vmatpush1.msra.mxu0 0.0
      %1167 = vmatprep.subr.mxu0 0.0
      %1168 = vmatpush1.msra.mxu0 0.0
      %1169 = vmatprep.subr.mxu0 0.0
      %1170 = vmatpush1.msra.mxu0 0.0
      %1171 = vmatprep.subr.mxu0 0.0
      %1172 = vmatpush1.msra.mxu0 0.0
      %1173 = vmatprep.subr.mxu0 0.0
      %1174 = vmatpush1.msra.mxu0 0.0
      %1175 = vmatprep.subr.mxu0 0.0
      %1176 = vmatpush1.msra.mxu0 0.0
      %1177 = vmatprep.subr.mxu0 0.0
      %1178 = vmatpush1.msra.mxu0 0.0
      %1179 = vmatprep.subr.mxu0 0.0
      %1180 = vmatpush1.msra.mxu0 0.0
      %1181 = vmatprep.subr.mxu0 0.0
      %1182 = vmatpush1.msra.mxu0 0.0
      %1183 = vmatprep.subr.mxu0 0.0
      %1184 = vmatpush1.msra.mxu0 0.0
      %1185 = vmatprep.subr.mxu0 0.0
      %1186 = vmatpush1.msra.mxu0 0.0
      %1187 = vmatprep.subr.mxu0 0.0
      %1188 = vmatpush1.msra.mxu0 0.0
      %1189 = vmatprep.subr.mxu0 0.0
      %1190 = vmatpush1.msra.mxu0 0.0
      %1191 = vmatprep.subr.mxu0 0.0
      %1192 = vmatpush1.msra.mxu0 0.0
      %1193 = vmatprep.subr.mxu0 0.0
      %1194 = vmatpush1.msra.mxu0 0.0
      %1195 = vmatprep.subr.mxu0 0.0
      %1196 = vmatpush1.msra.mxu0 0.0
      %1197 = vmatprep.subr.mxu0 0.0
      %1198 = vmatpush1.msra.mxu0 0.0
      %1199 = vmatprep.subr.mxu0 0.0
      %1200 = vmatpush1.msra.mxu0 0.0
      %1201 = vmatprep.subr.mxu0 0.0
      %1202 = vmatpush1.msra.mxu0 0.0
      %1203 = vmatprep.subr.mxu0 0.0
      %1204 = vmatpush1.msra.mxu0 0.0
      %1205 = vmatprep.subr.mxu0 0.0
      %1206 = vmatpush1.msra.mxu0 0.0
      %1207 = vmatprep.subr.mxu0 0.0
      %1208 = vmatpush1.msra.mxu0 0.0
      %1209 = vmatprep.subr.mxu0 0.0
      %1210 = vmatpush1.msra.mxu0 0.0
      %1211 = vmatprep.mubr.f32.mxu0 0.0
      %1212 = vmatmul.mubr.f32.gmra.mrb[0].mxu0 %v1100
      %v1213 = vpop.f32.mrb[0].mxu0
      %v1214 = vadd.f32 %v1097, %v1213
      %v1215 = vpop.f32.mrb[0].mxu0
      %1216 = vmatprep.mubr.f32.mxu0 0.0
      %1217 = vmatmul.mubr.f32.gmra.mrb[0].mxu0 %v1103
      %v1218 = vpop.f32.mrb[0].mxu0
      %v1219 = vadd.f32 %v1097, %v1218
      %v1220 = vpop.f32.mrb[0].mxu0
      %1221 = vmatprep.mubr.f32.mxu0 0.0
      %1222 = vmatmul.mubr.f32.gmra.mrb[0].mxu0 %v1106
      %v1223 = vpop.f32.mrb[0].mxu0
      %v1224 = vadd.f32 %v1097, %v1223
      %v1225 = vpop.f32.mrb[0].mxu0
      %1226 = vmatprep.mubr.f32.mxu0 0.0
      %1227 = vmatmul.mubr.f32.gmra.mrb[0].mxu0 %v1109
      %v1228 = vpop.f32.mrb[0].mxu0
      %v1229 = vadd.f32 %v1097, %v1228
      %v1230 = vpop.f32.mrb[0].mxu0
      %1231 = vmatprep.mubr.f32.mxu0 0.0
      %1232 = vmatmul.mubr.f32.gmra.mrb[0].mxu0 %v1112
      %v1233 = vpop.f32.mrb[0].mxu0
      %v1234 = vadd.f32 %v1097, %v1233
      %v1235 = vpop.f32.mrb[0].mxu0
      %1236 = vmatprep.mubr.f32.mxu0 0.0
      %1237 = vmatmul.mubr.f32.gmra.mrb[0].mxu0 %v1115
      %v1238 = vpop.f32.mrb[0].mxu0
      %v1239 = vadd.f32 %v1097, %v1238
      %v1240 = vpop.f32.mrb[0].mxu0
      %1241 = vmatprep.mubr.f32.mxu0 0.0
      %1242 = vmatmul.mubr.f32.gmra.mrb[0].mxu0 %v1118
      %v1243 = vpop.f32.mrb[0].mxu0
      %v1244 = vadd.f32 %v1097, %v1243
      %v1245 = vpop.f32.mrb[0].mxu0
      %1246 = vmatprep.mubr.f32.mxu0 0.0
      %1247 = vmatmul.mubr.f32.gmra.mrb[0].mxu0 %v1121
      %v1248 = vpop.f32.mrb[0].mxu0
      %v1249 = vadd.f32 %v1097, %v1248
      %v1250 = vpop.f32.mrb[0].mxu0
      %1251 = vmatprep.mubr.f32.mxu0 0.0
      %1252 = vmatmul.mubr.f32.gmra.mrb[0].mxu0 %v1124
      %v1253 = vpop.f32.mrb[0].mxu0
      %v1254 = vadd.f32 %v1097, %v1253
      %v1255 = vpop.f32.mrb[0].mxu0
      %1256 = vmatprep.mubr.f32.mxu0 0.0
      %1257 = vmatmul.mubr.f32.gmra.mrb[0].mxu0 %v1127
      %v1258 = vpop.f32.mrb[0].mxu0
      %v1259 = vadd.f32 %v1097, %v1258
      %v1260 = vpop.f32.mrb[0].mxu0
      %1261 = vmatprep.mubr.f32.mxu0 0.0
      %1262 = vmatmul.mubr.f32.gmra.mrb[0].mxu0 %v1130
      %v1263 = vpop.f32.mrb[0].mxu0
      %v1264 = vadd.f32 %v1097, %v1263
      %v1265 = vpop.f32.mrb[0].mxu0
      %1266 = vmatprep.mubr.f32.mxu0 0.0
      %1267 = vmatmul.mubr.f32.gmra.mrb[0].mxu0 %v1133
      %v1268 = vpop.f32.mrb[0].mxu0
      %v1269 = vadd.f32 %v1097, %v1268
      %v1270 = vpop.f32.mrb[0].mxu0
      %1271 = vmatprep.mubr.f32.mxu0 0.0
      %1272 = vmatmul.mubr.f32.gmra.mrb[0].mxu0 %v1136
      %v1273 = vpop.f32.mrb[0].mxu0
      %v1274 = vadd.f32 %v1097, %v1273
      %v1275 = vpop.f32.mrb[0].mxu0
      %1276 = vmatprep.mubr.f32.mxu0 0.0
      %1277 = vmatmul.mubr.f32.gmra.mrb[0].mxu0 %v1139
      %v1278 = vpop.f32.mrb[0].mxu0
      %v1279 = vadd.f32 %v1097, %v1278
      %v1280 = vpop.f32.mrb[0].mxu0
      %1281 = vmatprep.mubr.f32.mxu0 0.0
      %1282 = vmatmul.mubr.f32.gmra.mrb[0].mxu0 %v1142
      %v1283 = vpop.f32.mrb[0].mxu0
      %v1284 = vadd.f32 %v1097, %v1283
      %v1285 = vpop.f32.mrb[0].mxu0
      %1286 = vmatprep.mubr.f32.mxu0 0.0
      %1287 = vmatmul.mubr.f32.gmra.mrb[0].mxu0 %v1145
      %v1288 = vpop.f32.mrb[0].mxu0
      %v1289 = vadd.f32 %v1097, %v1288
      %v1290 = vpop.f32.mrb[0].mxu0
      %1291 = vdwg.mxu0
      %v1292 = vmul.f32 %v1214, 1.442695
      %v1293 = vpow.pop %v1292
      %v1294 = vmul.f32 %v1219, 1.442695
      %v1295 = vpow.pop %v1294
      %v1296 = vmul.f32 %v1224, 1.442695
      %v1297 = vpow.pop %v1296
      %v1298 = vmul.f32 %v1229, 1.442695
      %v1299 = vpow.pop %v1298
      %v1300 = vmul.f32 %v1234, 1.442695
      %v1301 = vpow.pop %v1300
      %v1302 = vmul.f32 %v1239, 1.442695
      %v1303 = vpow.pop %v1302
      %v1304 = vmul.f32 %v1244, 1.442695
      %v1305 = vpow.pop %v1304
      %v1306 = vmul.f32 %v1249, 1.442695
      %v1307 = vpow.pop %v1306
      %v1308 = vmul.f32 %v1254, 1.442695
      %v1309 = vpow.pop %v1308
      %v1310 = vmul.f32 %v1259, 1.442695
      %v1311 = vpow.pop %v1310
      %v1312 = vmul.f32 %v1264, 1.442695
      %v1313 = vpow.pop %v1312
      %v1314 = vmul.f32 %v1269, 1.442695
      %v1315 = vpow.pop %v1314
      %v1316 = vmul.f32 %v1274, 1.442695
      %v1317 = vpow.pop %v1316
      %v1318 = vmul.f32 %v1279, 1.442695
      %v1319 = vpow.pop %v1318
      %v1320 = vmul.f32 %v1284, 1.442695
      %v1321 = vpow.pop %v1320
      %v1322 = vmul.f32 %v1289, 1.442695
      %v1323 = vpow.pop %v1322
      %v1324 = vadd.f32 %v1293, 0.0001
      %v1325 = vadd.f32 %v1295, 0.0001
      %v1326 = vadd.f32 %v1297, 0.0001
      %v1327 = vadd.f32 %v1299, 0.0001
      %v1328 = vadd.f32 %v1301, 0.0001
      %v1329 = vadd.f32 %v1303, 0.0001
      %v1330 = vadd.f32 %v1305, 0.0001
      %v1331 = vadd.f32 %v1307, 0.0001
      %v1332 = vadd.f32 %v1309, 0.0001
      %v1333 = vadd.f32 %v1311, 0.0001
      %v1334 = vadd.f32 %v1313, 0.0001
      %v1335 = vadd.f32 %v1315, 0.0001
      %v1336 = vadd.f32 %v1317, 0.0001
      %v1337 = vadd.f32 %v1319, 0.0001
      %v1338 = vadd.f32 %v1321, 0.0001
      %v1339 = vadd.f32 %v1323, 0.0001
      %v1340 = vrsqrt.pop %v1324
      %v1341 = vmul.f32 %v1324, %v1340
      %vm1342 = vcmp.eq.f32.partialorder %v1324, inf
      %v1343 = vsel %vm1342, %v1324, %v1341
      %vm1344 = vcmp.eq.f32.partialorder %v1324, 0.0
      %v1345 = vand.u32 %v1324, 2147483648
      %v1346 = vsel %vm1344, %v1345, %v1343
      %v1347 = vrsqrt.pop %v1325
      %v1348 = vmul.f32 %v1325, %v1347
      %vm1349 = vcmp.eq.f32.partialorder %v1325, inf
      %v1350 = vsel %vm1349, %v1325, %v1348
      %vm1351 = vcmp.eq.f32.partialorder %v1325, 0.0
      %v1352 = vand.u32 %v1325, 2147483648
      %v1353 = vsel %vm1351, %v1352, %v1350
      %v1354 = vrsqrt.pop %v1326
      %v1355 = vmul.f32 %v1326, %v1354
      %vm1356 = vcmp.eq.f32.partialorder %v1326, inf
      %v1357 = vsel %vm1356, %v1326, %v1355
      %vm1358 = vcmp.eq.f32.partialorder %v1326, 0.0
      %v1359 = vand.u32 %v1326, 2147483648
      %v1360 = vsel %vm1358, %v1359, %v1357
      %v1361 = vrsqrt.pop %v1327
      %v1362 = vmul.f32 %v1327, %v1361
      %vm1363 = vcmp.eq.f32.partialorder %v1327, inf
      %v1364 = vsel %vm1363, %v1327, %v1362
      %vm1365 = vcmp.eq.f32.partialorder %v1327, 0.0
      %v1366 = vand.u32 %v1327, 2147483648
      %v1367 = vsel %vm1365, %v1366, %v1364
      %v1368 = vrsqrt.pop %v1328
      %v1369 = vmul.f32 %v1328, %v1368
      %vm1370 = vcmp.eq.f32.partialorder %v1328, inf
      %v1371 = vsel %vm1370, %v1328, %v1369
      %vm1372 = vcmp.eq.f32.partialorder %v1328, 0.0
      %v1373 = vand.u32 %v1328, 2147483648
      %v1374 = vsel %vm1372, %v1373, %v1371
      %v1375 = vrsqrt.pop %v1329
      %v1376 = vmul.f32 %v1329, %v1375
      %vm1377 = vcmp.eq.f32.partialorder %v1329, inf
      %v1378 = vsel %vm1377, %v1329, %v1376
      %vm1379 = vcmp.eq.f32.partialorder %v1329, 0.0
      %v1380 = vand.u32 %v1329, 2147483648
      %v1381 = vsel %vm1379, %v1380, %v1378
      %v1382 = vrsqrt.pop %v1330
      %v1383 = vmul.f32 %v1330, %v1382
      %vm1384 = vcmp.eq.f32.partialorder %v1330, inf
      %v1385 = vsel %vm1384, %v1330, %v1383
      %vm1386 = vcmp.eq.f32.partialorder %v1330, 0.0
      %v1387 = vand.u32 %v1330, 2147483648
      %v1388 = vsel %vm1386, %v1387, %v1385
      %v1389 = vrsqrt.pop %v1331
      %v1390 = vmul.f32 %v1331, %v1389
      %vm1391 = vcmp.eq.f32.partialorder %v1331, inf
      %v1392 = vsel %vm1391, %v1331, %v1390
      %vm1393 = vcmp.eq.f32.partialorder %v1331, 0.0
      %v1394 = vand.u32 %v1331, 2147483648
      %v1395 = vsel %vm1393, %v1394, %v1392
      %v1396 = vrsqrt.pop %v1332
      %v1397 = vmul.f32 %v1332, %v1396
      %vm1398 = vcmp.eq.f32.partialorder %v1332, inf
      %v1399 = vsel %vm1398, %v1332, %v1397
      %vm1400 = vcmp.eq.f32.partialorder %v1332, 0.0
      %v1401 = vand.u32 %v1332, 2147483648
      %v1402 = vsel %vm1400, %v1401, %v1399
      %v1403 = vrsqrt.pop %v1333
      %v1404 = vmul.f32 %v1333, %v1403
      %vm1405 = vcmp.eq.f32.partialorder %v1333, inf
      %v1406 = vsel %vm1405, %v1333, %v1404
      %vm1407 = vcmp.eq.f32.partialorder %v1333, 0.0
      %v1408 = vand.u32 %v1333, 2147483648
      %v1409 = vsel %vm1407, %v1408, %v1406
      %v1410 = vrsqrt.pop %v1334
      %v1411 = vmul.f32 %v1334, %v1410
      %vm1412 = vcmp.eq.f32.partialorder %v1334, inf
      %v1413 = vsel %vm1412, %v1334, %v1411
      %vm1414 = vcmp.eq.f32.partialorder %v1334, 0.0
      %v1415 = vand.u32 %v1334, 2147483648
      %v1416 = vsel %vm1414, %v1415, %v1413
      %v1417 = vrsqrt.pop %v1335
      %v1418 = vmul.f32 %v1335, %v1417
      %vm1419 = vcmp.eq.f32.partialorder %v1335, inf
      %v1420 = vsel %vm1419, %v1335, %v1418
      %vm1421 = vcmp.eq.f32.partialorder %v1335, 0.0
      %v1422 = vand.u32 %v1335, 2147483648
      %v1423 = vsel %vm1421, %v1422, %v1420
      %v1424 = vrsqrt.pop %v1336
      %v1425 = vmul.f32 %v1336, %v1424
      %vm1426 = vcmp.eq.f32.partialorder %v1336, inf
      %v1427 = vsel %vm1426, %v1336, %v1425
      %vm1428 = vcmp.eq.f32.partialorder %v1336, 0.0
      %v1429 = vand.u32 %v1336, 2147483648
      %v1430 = vsel %vm1428, %v1429, %v1427
      %v1431 = vrsqrt.pop %v1337
      %v1432 = vmul.f32 %v1337, %v1431
      %vm1433 = vcmp.eq.f32.partialorder %v1337, inf
      %v1434 = vsel %vm1433, %v1337, %v1432
      %vm1435 = vcmp.eq.f32.partialorder %v1337, 0.0
      %v1436 = vand.u32 %v1337, 2147483648
      %v1437 = vsel %vm1435, %v1436, %v1434
      %v1438 = vrsqrt.pop %v1338
      %v1439 = vmul.f32 %v1338, %v1438
      %vm1440 = vcmp.eq.f32.partialorder %v1338, inf
      %v1441 = vsel %vm1440, %v1338, %v1439
      %vm1442 = vcmp.eq.f32.partialorder %v1338, 0.0
      %v1443 = vand.u32 %v1338, 2147483648
      %v1444 = vsel %vm1442, %v1443, %v1441
      %v1445 = vrsqrt.pop %v1339
      %v1446 = vmul.f32 %v1339, %v1445
      %vm1447 = vcmp.eq.f32.partialorder %v1339, inf
      %v1448 = vsel %vm1447, %v1339, %v1446
      %vm1449 = vcmp.eq.f32.partialorder %v1339, 0.0
      %v1450 = vand.u32 %v1339, 2147483648
      %v1451 = vsel %vm1449, %v1450, %v1448
      %v1452 = vld [vmem:[%s563] sm:$0xff]
      %v1453 = vld [vmem:[%s563 + $0x8] sm:$0xff]
      %v1454 = vld [vmem:[%s563 + $0x10] sm:$0xff]
      %v1455 = vld [vmem:[%s563 + $0x18] sm:$0xff]
      %v1456 = vld [vmem:[%s563 + $0x20] sm:$0xff]
      %v1457 = vld [vmem:[%s563 + $0x28] sm:$0xff]
      %v1458 = vld [vmem:[%s563 + $0x30] sm:$0xff]
      %v1459 = vld [vmem:[%s563 + $0x38] sm:$0xff]
      %v1460 = vld [vmem:[%s563 + $0x40] sm:$0xff]
      %v1461 = vld [vmem:[%s563 + $0x48] sm:$0xff]
      %v1462 = vld [vmem:[%s563 + $0x50] sm:$0xff]
      %v1463 = vld [vmem:[%s563 + $0x58] sm:$0xff]
      %v1464 = vld [vmem:[%s563 + $0x60] sm:$0xff]
      %v1465 = vld [vmem:[%s563 + $0x68] sm:$0xff]
      %v1466 = vld [vmem:[%s563 + $0x70] sm:$0xff]
      %v1467 = vld [vmem:[%s563 + $0x78] sm:$0xff]
      %1484 = vrot.lane.b32.xlu0 %v1452, 16
      %v1485 = vpop.permute.xlu0 %1484
      %1486 = vrot.lane.b32.xlu0 %v1453, 16
      %v1487 = vpop.permute.xlu0 %1486
      %1488 = vrot.lane.b32.xlu0 %v1454, 16
      %v1489 = vpop.permute.xlu0 %1488
      %1490 = vrot.lane.b32.xlu0 %v1455, 16
      %v1491 = vpop.permute.xlu0 %1490
      %1492 = vrot.lane.b32.xlu0 %v1456, 16
      %v1493 = vpop.permute.xlu0 %1492
      %1494 = vrot.lane.b32.xlu0 %v1457, 16
      %v1495 = vpop.permute.xlu0 %1494
      %1496 = vrot.lane.b32.xlu0 %v1458, 16
      %v1497 = vpop.permute.xlu0 %1496
      %1498 = vrot.lane.b32.xlu0 %v1459, 16
      %v1499 = vpop.permute.xlu0 %1498
      %1500 = vrot.lane.b32.xlu0 %v1460, 16
      %v1501 = vpop.permute.xlu0 %1500
      %1502 = vrot.lane.b32.xlu0 %v1461, 16
      %v1503 = vpop.permute.xlu0 %1502
      %1504 = vrot.lane.b32.xlu0 %v1462, 16
      %v1505 = vpop.permute.xlu0 %1504
      %1506 = vrot.lane.b32.xlu0 %v1463, 16
      %v1507 = vpop.permute.xlu0 %1506
      %1508 = vrot.lane.b32.xlu0 %v1464, 16
      %v1509 = vpop.permute.xlu0 %1508
      %1510 = vrot.lane.b32.xlu0 %v1465, 16
      %v1511 = vpop.permute.xlu0 %1510
      %1512 = vrot.lane.b32.xlu0 %v1466, 16
      %v1513 = vpop.permute.xlu0 %1512
      %1514 = vrot.lane.b32.xlu0 %v1467, 16
      %v1515 = vpop.permute.xlu0 %1514
      %v1532 = vmul.f32 %v1346, %v1485
      %v1533 = vmul.f32 %v1353, %v1487
      %v1534 = vmul.f32 %v1360, %v1489
      %v1535 = vmul.f32 %v1367, %v1491
      %v1536 = vmul.f32 %v1374, %v1493
      %v1537 = vmul.f32 %v1381, %v1495
      %v1538 = vmul.f32 %v1388, %v1497
      %v1539 = vmul.f32 %v1395, %v1499
      %v1540 = vmul.f32 %v1402, %v1501
      %v1541 = vmul.f32 %v1409, %v1503
      %v1542 = vmul.f32 %v1416, %v1505
      %v1543 = vmul.f32 %v1423, %v1507
      %v1544 = vmul.f32 %v1430, %v1509
      %v1545 = vmul.f32 %v1437, %v1511
      %v1546 = vmul.f32 %v1444, %v1513
      %v1547 = vmul.f32 %v1451, %v1515
      %1564 = vrot.lane.b32.xlu0 %v1532, 112
      %v1565 = vpop.permute.xlu0 %1564
      %1566 = vrot.lane.b32.xlu0 %v1533, 112
      %v1567 = vpop.permute.xlu0 %1566
      %1568 = vrot.lane.b32.xlu0 %v1534, 112
      %v1569 = vpop.permute.xlu0 %1568
      %1570 = vrot.lane.b32.xlu0 %v1535, 112
      %v1571 = vpop.permute.xlu0 %1570
      %1572 = vrot.lane.b32.xlu0 %v1536, 112
      %v1573 = vpop.permute.xlu0 %1572
      %1574 = vrot.lane.b32.xlu0 %v1537, 112
      %v1575 = vpop.permute.xlu0 %1574
      %1576 = vrot.lane.b32.xlu0 %v1538, 112
      %v1577 = vpop.permute.xlu0 %1576
      %1578 = vrot.lane.b32.xlu0 %v1539, 112
      %v1579 = vpop.permute.xlu0 %1578
      %1580 = vrot.lane.b32.xlu0 %v1540, 112
      %v1581 = vpop.permute.xlu0 %1580
      %1582 = vrot.lane.b32.xlu0 %v1541, 112
      %v1583 = vpop.permute.xlu0 %1582
      %1584 = vrot.lane.b32.xlu0 %v1542, 112
      %v1585 = vpop.permute.xlu0 %1584
      %1586 = vrot.lane.b32.xlu0 %v1543, 112
      %v1587 = vpop.permute.xlu0 %1586
      %1588 = vrot.lane.b32.xlu0 %v1544, 112
      %v1589 = vpop.permute.xlu0 %1588
      %1590 = vrot.lane.b32.xlu0 %v1545, 112
      %v1591 = vpop.permute.xlu0 %1590
      %1592 = vrot.lane.b32.xlu0 %v1546, 112
      %v1593 = vpop.permute.xlu0 %1592
      %1594 = vrot.lane.b32.xlu0 %v1547, 112
      %v1595 = vpop.permute.xlu0 %1594
      %v1612 = vadd.f32 %v1214, %v1565
      %v1613 = vadd.f32 %v1219, %v1567
      %v1614 = vadd.f32 %v1224, %v1569
      %v1615 = vadd.f32 %v1229, %v1571
      %v1616 = vadd.f32 %v1234, %v1573
      %v1617 = vadd.f32 %v1239, %v1575
      %v1618 = vadd.f32 %v1244, %v1577
      %v1619 = vadd.f32 %v1249, %v1579
      %v1620 = vadd.f32 %v1254, %v1581
      %v1621 = vadd.f32 %v1259, %v1583
      %v1622 = vadd.f32 %v1264, %v1585
      %v1623 = vadd.f32 %v1269, %v1587
      %v1624 = vadd.f32 %v1274, %v1589
      %v1625 = vadd.f32 %v1279, %v1591
      %v1626 = vadd.f32 %v1284, %v1593
      %v1627 = vadd.f32 %v1289, %v1595
      %vm1628 = vcmask 130048
      %v1629 = vsel %vm1628, %v1612, -inf
      %1630 = vmax.xlane.f32.xlu0 %v1629
      %v1631 = vpop.xlane.xlu0 %1630
      %v1632 = vsel %vm1628, %v1613, -inf
      %1633 = vmax.xlane.f32.xlu0 %v1632
      %v1634 = vpop.xlane.xlu0 %1633
      %v1635 = vsel %vm1628, %v1614, -inf
      %1636 = vmax.xlane.f32.xlu0 %v1635
      %v1637 = vpop.xlane.xlu0 %1636
      %v1638 = vsel %vm1628, %v1615, -inf
      %1639 = vmax.xlane.f32.xlu0 %v1638
      %v1640 = vpop.xlane.xlu0 %1639
      %v1641 = vsel %vm1628, %v1616, -inf
      %1642 = vmax.xlane.f32.xlu0 %v1641
      %v1643 = vpop.xlane.xlu0 %1642
      %v1644 = vsel %vm1628, %v1617, -inf
      %1645 = vmax.xlane.f32.xlu0 %v1644
      %v1646 = vpop.xlane.xlu0 %1645
      %v1647 = vsel %vm1628, %v1618, -inf
      %1648 = vmax.xlane.f32.xlu0 %v1647
      %v1649 = vpop.xlane.xlu0 %1648
      %v1650 = vsel %vm1628, %v1619, -inf
      %1651 = vmax.xlane.f32.xlu0 %v1650
      %v1652 = vpop.xlane.xlu0 %1651
      %v1653 = vsel %vm1628, %v1620, -inf
      %1654 = vmax.xlane.f32.xlu0 %v1653
      %v1655 = vpop.xlane.xlu0 %1654
      %v1656 = vsel %vm1628, %v1621, -inf
      %1657 = vmax.xlane.f32.xlu0 %v1656
      %v1658 = vpop.xlane.xlu0 %1657
      %v1659 = vsel %vm1628, %v1622, -inf
      %1660 = vmax.xlane.f32.xlu0 %v1659
      %v1661 = vpop.xlane.xlu0 %1660
      %v1662 = vsel %vm1628, %v1623, -inf
      %1663 = vmax.xlane.f32.xlu0 %v1662
      %v1664 = vpop.xlane.xlu0 %1663
      %v1665 = vsel %vm1628, %v1624, -inf
      %1666 = vmax.xlane.f32.xlu0 %v1665
      %v1667 = vpop.xlane.xlu0 %1666
      %v1668 = vsel %vm1628, %v1625, -inf
      %1669 = vmax.xlane.f32.xlu0 %v1668
      %v1670 = vpop.xlane.xlu0 %1669
      %v1671 = vsel %vm1628, %v1626, -inf
      %1672 = vmax.xlane.f32.xlu0 %v1671
      %v1673 = vpop.xlane.xlu0 %1672
      %v1674 = vsel %vm1628, %v1627, -inf
      %1675 = vmax.xlane.f32.xlu0 %v1674
      %v1676 = vpop.xlane.xlu0 %1675
      %v1677 = vsub.f32 %v1612, %v1631
      %v1678 = vsub.f32 %v1613, %v1634
      %v1679 = vsub.f32 %v1614, %v1637
      %v1680 = vsub.f32 %v1615, %v1640
      %v1681 = vsub.f32 %v1616, %v1643
      %v1682 = vsub.f32 %v1617, %v1646
      %v1683 = vsub.f32 %v1618, %v1649
      %v1684 = vsub.f32 %v1619, %v1652
      %v1685 = vsub.f32 %v1620, %v1655
      %v1686 = vsub.f32 %v1621, %v1658
      %v1687 = vsub.f32 %v1622, %v1661
      %v1688 = vsub.f32 %v1623, %v1664
      %v1689 = vsub.f32 %v1624, %v1667
      %v1690 = vsub.f32 %v1625, %v1670
      %v1691 = vsub.f32 %v1626, %v1673
      %v1692 = vsub.f32 %v1627, %v1676
      %v1693 = vmul.f32 %v1677, 1.442695
      %v1694 = vpow.pop %v1693
      %v1695 = vmul.f32 %v1678, 1.442695
      %v1696 = vpow.pop %v1695
      %v1697 = vmul.f32 %v1679, 1.442695
      %v1698 = vpow.pop %v1697
      %v1699 = vmul.f32 %v1680, 1.442695
      %v1700 = vpow.pop %v1699
      %v1701 = vmul.f32 %v1681, 1.442695
      %v1702 = vpow.pop %v1701
      %v1703 = vmul.f32 %v1682, 1.442695
      %v1704 = vpow.pop %v1703
      %v1705 = vmul.f32 %v1683, 1.442695
      %v1706 = vpow.pop %v1705
      %v1707 = vmul.f32 %v1684, 1.442695
      %v1708 = vpow.pop %v1707
      %v1709 = vmul.f32 %v1685, 1.442695
      %v1710 = vpow.pop %v1709
      %v1711 = vmul.f32 %v1686, 1.442695
      %v1712 = vpow.pop %v1711
      %v1713 = vmul.f32 %v1687, 1.442695
      %v1714 = vpow.pop %v1713
      %v1715 = vmul.f32 %v1688, 1.442695
      %v1716 = vpow.pop %v1715
      %v1717 = vmul.f32 %v1689, 1.442695
      %v1718 = vpow.pop %v1717
      %v1719 = vmul.f32 %v1690, 1.442695
      %v1720 = vpow.pop %v1719
      %v1721 = vmul.f32 %v1691, 1.442695
      %v1722 = vpow.pop %v1721
      %v1723 = vmul.f32 %v1692, 1.442695
      %v1724 = vpow.pop %v1723
      %v1725 = vsel %vm1628, %v1694, 0.0
      %1726 = vadd.xlane.f32.xlu0 %v1725
      %v1727 = vpop.xlane.xlu0 %1726
      %v1728 = vsel %vm1628, %v1696, 0.0
      %1729 = vadd.xlane.f32.xlu0 %v1728
      %v1730 = vpop.xlane.xlu0 %1729
      %v1731 = vsel %vm1628, %v1698, 0.0
      %1732 = vadd.xlane.f32.xlu0 %v1731
      %v1733 = vpop.xlane.xlu0 %1732
      %v1734 = vsel %vm1628, %v1700, 0.0
      %1735 = vadd.xlane.f32.xlu0 %v1734
      %v1736 = vpop.xlane.xlu0 %1735
      %v1737 = vsel %vm1628, %v1702, 0.0
      %1738 = vadd.xlane.f32.xlu0 %v1737
      %v1739 = vpop.xlane.xlu0 %1738
      %v1740 = vsel %vm1628, %v1704, 0.0
      %1741 = vadd.xlane.f32.xlu0 %v1740
      %v1742 = vpop.xlane.xlu0 %1741
      %v1743 = vsel %vm1628, %v1706, 0.0
      %1744 = vadd.xlane.f32.xlu0 %v1743
      %v1745 = vpop.xlane.xlu0 %1744
      %v1746 = vsel %vm1628, %v1708, 0.0
      %1747 = vadd.xlane.f32.xlu0 %v1746
      %v1748 = vpop.xlane.xlu0 %1747
      %v1749 = vsel %vm1628, %v1710, 0.0
      %1750 = vadd.xlane.f32.xlu0 %v1749
      %v1751 = vpop.xlane.xlu0 %1750
      %v1752 = vsel %vm1628, %v1712, 0.0
      %1753 = vadd.xlane.f32.xlu0 %v1752
      %v1754 = vpop.xlane.xlu0 %1753
      %v1755 = vsel %vm1628, %v1714, 0.0
      %1756 = vadd.xlane.f32.xlu0 %v1755
      %v1757 = vpop.xlane.xlu0 %1756
      %v1758 = vsel %vm1628, %v1716, 0.0
      %1759 = vadd.xlane.f32.xlu0 %v1758
      %v1760 = vpop.xlane.xlu0 %1759
      %v1761 = vsel %vm1628, %v1718, 0.0
      %1762 = vadd.xlane.f32.xlu0 %v1761
      %v1763 = vpop.xlane.xlu0 %1762
      %v1764 = vsel %vm1628, %v1720, 0.0
      %1765 = vadd.xlane.f32.xlu0 %v1764
      %v1766 = vpop.xlane.xlu0 %1765
      %v1767 = vsel %vm1628, %v1722, 0.0
      %1768 = vadd.xlane.f32.xlu0 %v1767
      %v1769 = vpop.xlane.xlu0 %1768
      %v1770 = vsel %vm1628, %v1724, 0.0
      %1771 = vadd.xlane.f32.xlu0 %v1770
      %v1772 = vpop.xlane.xlu0 %1771
      %v1773 = vrcp.pop %v1727
      %v1774 = vrcp.pop %v1730
      %v1775 = vrcp.pop %v1733
      %v1776 = vrcp.pop %v1736
      %v1777 = vrcp.pop %v1739
      %v1778 = vrcp.pop %v1742
      %v1779 = vrcp.pop %v1745
      %v1780 = vrcp.pop %v1748
      %v1781 = vrcp.pop %v1751
      %v1782 = vrcp.pop %v1754
      %v1783 = vrcp.pop %v1757
      %v1784 = vrcp.pop %v1760
      %v1785 = vrcp.pop %v1763
      %v1786 = vrcp.pop %v1766
      %v1787 = vrcp.pop %v1769
      %v1788 = vrcp.pop %v1772
      %v1789 = vmul.f32 %v1694, %v1773
      %v1790 = vmul.f32 %v1696, %v1774
      %v1791 = vmul.f32 %v1698, %v1775
      %v1792 = vmul.f32 %v1700, %v1776
      %v1793 = vmul.f32 %v1702, %v1777
      %v1794 = vmul.f32 %v1704, %v1778
      %v1795 = vmul.f32 %v1706, %v1779
      %v1796 = vmul.f32 %v1708, %v1780
      %v1797 = vmul.f32 %v1710, %v1781
      %v1798 = vmul.f32 %v1712, %v1782
      %v1799 = vmul.f32 %v1714, %v1783
      %v1800 = vmul.f32 %v1716, %v1784
      %v1801 = vmul.f32 %v1718, %v1785
      %v1802 = vmul.f32 %v1720, %v1786
      %v1803 = vmul.f32 %v1722, %v1787
      %v1804 = vmul.f32 %v1724, %v1788
      %1805 = vst.msk [vmem:[%s581] sm:$0xff] %vm1628, %v1789
      %1806 = vst.msk [vmem:[%s581 + $0x8] sm:$0xff] %vm1628, %v1790
      %1807 = vst.msk [vmem:[%s581 + $0x10] sm:$0xff] %vm1628, %v1791
      %1808 = vst.msk [vmem:[%s581 + $0x18] sm:$0xff] %vm1628, %v1792
      %1809 = vst.msk [vmem:[%s581 + $0x20] sm:$0xff] %vm1628, %v1793
      %1810 = vst.msk [vmem:[%s581 + $0x28] sm:$0xff] %vm1628, %v1794
      %1811 = vst.msk [vmem:[%s581 + $0x30] sm:$0xff] %vm1628, %v1795
      %1812 = vst.msk [vmem:[%s581 + $0x38] sm:$0xff] %vm1628, %v1796
      %1813 = vst.msk [vmem:[%s581 + $0x40] sm:$0xff] %vm1628, %v1797
      %1814 = vst.msk [vmem:[%s581 + $0x48] sm:$0xff] %vm1628, %v1798
      %1815 = vst.msk [vmem:[%s581 + $0x50] sm:$0xff] %vm1628, %v1799
      %1816 = vst.msk [vmem:[%s581 + $0x58] sm:$0xff] %vm1628, %v1800
      %1817 = vst.msk [vmem:[%s581 + $0x60] sm:$0xff] %vm1628, %v1801
      %1818 = vst.msk [vmem:[%s581 + $0x68] sm:$0xff] %vm1628, %v1802
      %1819 = vst.msk [vmem:[%s581 + $0x70] sm:$0xff] %vm1628, %v1803
      %1820 = vst.msk [vmem:[%s581 + $0x78] sm:$0xff] %vm1628, %v1804
      %v1821 = vld [vmem:[%s9] sm:$0xff]
      %v1822 = vld [vmem:[%s9 + $0x8] sm:$0xff]
      %v1823 = vld [vmem:[%s10] sm:$0x1]
      %v1825 = vlaneseq
      %v1826 = vshrl.u32 %v1825, 7
      %v1827 = vsub.s32 0, %v1826
      %v1828 = vrot.slane %v1823, %v1827
      %v1831 = vsel %vm1628, %v1789, 0
      %v1834 = vsel %vm1628, %v1790, 0
      %v1837 = vsel %vm1628, %v1791, 0
      %v1840 = vsel %vm1628, %v1792, 0
      %v1843 = vsel %vm1628, %v1793, 0
      %v1846 = vsel %vm1628, %v1794, 0
      %v1849 = vsel %vm1628, %v1795, 0
      %v1852 = vsel %vm1628, %v1796, 0
      %v1855 = vsel %vm1628, %v1797, 0
      %v1858 = vsel %vm1628, %v1798, 0
      %v1861 = vsel %vm1628, %v1799, 0
      %v1864 = vsel %vm1628, %v1800, 0
      %v1867 = vsel %vm1628, %v1801, 0
      %v1870 = vsel %vm1628, %v1802, 0
      %v1873 = vsel %vm1628, %v1803, 0
      %v1876 = vsel %vm1628, %v1804, 0
      %1878 = vmatprep.subr.mxu0 0.0
      %1879 = vmatpush1.msra.mxu0 %v1821
      %1880 = vmatprep.subr.mxu0 0.0
      %1881 = vmatpush1.msra.mxu0 %v1822
      %1882 = vmatprep.subr.mxu0 0.0
      %1883 = vmatpush1.msra.mxu0 0.0
      %1884 = vmatprep.subr.mxu0 0.0
      %1885 = vmatpush1.msra.mxu0 0.0
      %1886 = vmatprep.subr.mxu0 0.0
      %1887 = vmatpush1.msra.mxu0 0.0
      %1888 = vmatprep.subr.mxu0 0.0
      %1889 = vmatpush1.msra.mxu0 0.0
      %1890 = vmatprep.subr.mxu0 0.0
      %1891 = vmatpush1.msra.mxu0 0.0
      %1892 = vmatprep.subr.mxu0 0.0
      %1893 = vmatpush1.msra.mxu0 0.0
      %1894 = vmatprep.subr.mxu0 0.0
      %1895 = vmatpush1.msra.mxu0 0.0
      %1896 = vmatprep.subr.mxu0 0.0
      %1897 = vmatpush1.msra.mxu0 0.0
      %1898 = vmatprep.subr.mxu0 0.0
      %1899 = vmatpush1.msra.mxu0 0.0
      %1900 = vmatprep.subr.mxu0 0.0
      %1901 = vmatpush1.msra.mxu0 0.0
      %1902 = vmatprep.subr.mxu0 0.0
      %1903 = vmatpush1.msra.mxu0 0.0
      %1904 = vmatprep.subr.mxu0 0.0
      %1905 = vmatpush1.msra.mxu0 0.0
      %1906 = vmatprep.subr.mxu0 0.0
      %1907 = vmatpush1.msra.mxu0 0.0
      %1908 = vmatprep.subr.mxu0 0.0
      %1909 = vmatpush1.msra.mxu0 0.0
      %1910 = vmatprep.subr.mxu0 0.0
      %1911 = vmatpush1.msra.mxu0 0.0
      %1912 = vmatprep.subr.mxu0 0.0
      %1913 = vmatpush1.msra.mxu0 0.0
      %1914 = vmatprep.subr.mxu0 0.0
      %1915 = vmatpush1.msra.mxu0 0.0
      %1916 = vmatprep.subr.mxu0 0.0
      %1917 = vmatpush1.msra.mxu0 0.0
      %1918 = vmatprep.subr.mxu0 0.0
      %1919 = vmatpush1.msra.mxu0 0.0
      %1920 = vmatprep.subr.mxu0 0.0
      %1921 = vmatpush1.msra.mxu0 0.0
      %1922 = vmatprep.subr.mxu0 0.0
      %1923 = vmatpush1.msra.mxu0 0.0
      %1924 = vmatprep.subr.mxu0 0.0
      %1925 = vmatpush1.msra.mxu0 0.0
      %1926 = vmatprep.subr.mxu0 0.0
      %1927 = vmatpush1.msra.mxu0 0.0
      %1928 = vmatprep.subr.mxu0 0.0
      %1929 = vmatpush1.msra.mxu0 0.0
      %1930 = vmatprep.subr.mxu0 0.0
      %1931 = vmatpush1.msra.mxu0 0.0
      %1932 = vmatprep.subr.mxu0 0.0
      %1933 = vmatpush1.msra.mxu0 0.0
      %1934 = vmatprep.subr.mxu0 0.0
      %1935 = vmatpush1.msra.mxu0 0.0
      %1936 = vmatprep.subr.mxu0 0.0
      %1937 = vmatpush1.msra.mxu0 0.0
      %1938 = vmatprep.subr.mxu0 0.0
      %1939 = vmatpush1.msra.mxu0 0.0
      %1940 = vmatprep.subr.mxu0 0.0
      %1941 = vmatpush1.msra.mxu0 0.0
      %1942 = vmatprep.mubr.f32.mxu0 0.0
      %1943 = vmatmul.mubr.f32.gmra.mrb[0].mxu0 %v1831
      %v1944 = vpop.f32.mrb[0].mxu0
      %v1945 = vadd.f32 %v1828, %v1944
      %v1946 = vpop.f32.mrb[0].mxu0
      %1947 = vmatprep.mubr.f32.mxu0 0.0
      %1948 = vmatmul.mubr.f32.gmra.mrb[0].mxu0 %v1834
      %v1949 = vpop.f32.mrb[0].mxu0
      %v1950 = vadd.f32 %v1828, %v1949
      %v1951 = vpop.f32.mrb[0].mxu0
      %1952 = vmatprep.mubr.f32.mxu0 0.0
      %1953 = vmatmul.mubr.f32.gmra.mrb[0].mxu0 %v1837
      %v1954 = vpop.f32.mrb[0].mxu0
      %v1955 = vadd.f32 %v1828, %v1954
      %v1956 = vpop.f32.mrb[0].mxu0
      %1957 = vmatprep.mubr.f32.mxu0 0.0
      %1958 = vmatmul.mubr.f32.gmra.mrb[0].mxu0 %v1840
      %v1959 = vpop.f32.mrb[0].mxu0
      %v1960 = vadd.f32 %v1828, %v1959
      %v1961 = vpop.f32.mrb[0].mxu0
      %1962 = vmatprep.mubr.f32.mxu0 0.0
      %1963 = vmatmul.mubr.f32.gmra.mrb[0].mxu0 %v1843
      %v1964 = vpop.f32.mrb[0].mxu0
      %v1965 = vadd.f32 %v1828, %v1964
      %v1966 = vpop.f32.mrb[0].mxu0
      %1967 = vmatprep.mubr.f32.mxu0 0.0
      %1968 = vmatmul.mubr.f32.gmra.mrb[0].mxu0 %v1846
      %v1969 = vpop.f32.mrb[0].mxu0
      %v1970 = vadd.f32 %v1828, %v1969
      %v1971 = vpop.f32.mrb[0].mxu0
      %1972 = vmatprep.mubr.f32.mxu0 0.0
      %1973 = vmatmul.mubr.f32.gmra.mrb[0].mxu0 %v1849
      %v1974 = vpop.f32.mrb[0].mxu0
      %v1975 = vadd.f32 %v1828, %v1974
      %v1976 = vpop.f32.mrb[0].mxu0
      %1977 = vmatprep.mubr.f32.mxu0 0.0
      %1978 = vmatmul.mubr.f32.gmra.mrb[0].mxu0 %v1852
      %v1979 = vpop.f32.mrb[0].mxu0
      %v1980 = vadd.f32 %v1828, %v1979
      %v1981 = vpop.f32.mrb[0].mxu0
      %1982 = vmatprep.mubr.f32.mxu0 0.0
      %1983 = vmatmul.mubr.f32.gmra.mrb[0].mxu0 %v1855
      %v1984 = vpop.f32.mrb[0].mxu0
      %v1985 = vadd.f32 %v1828, %v1984
      %v1986 = vpop.f32.mrb[0].mxu0
      %1987 = vmatprep.mubr.f32.mxu0 0.0
      %1988 = vmatmul.mubr.f32.gmra.mrb[0].mxu0 %v1858
      %v1989 = vpop.f32.mrb[0].mxu0
      %v1990 = vadd.f32 %v1828, %v1989
      %v1991 = vpop.f32.mrb[0].mxu0
      %1992 = vmatprep.mubr.f32.mxu0 0.0
      %1993 = vmatmul.mubr.f32.gmra.mrb[0].mxu0 %v1861
      %v1994 = vpop.f32.mrb[0].mxu0
      %v1995 = vadd.f32 %v1828, %v1994
      %v1996 = vpop.f32.mrb[0].mxu0
      %1997 = vmatprep.mubr.f32.mxu0 0.0
      %1998 = vmatmul.mubr.f32.gmra.mrb[0].mxu0 %v1864
      %v1999 = vpop.f32.mrb[0].mxu0
      %v2000 = vadd.f32 %v1828, %v1999
      %v2001 = vpop.f32.mrb[0].mxu0
      %2002 = vmatprep.mubr.f32.mxu0 0.0
      %2003 = vmatmul.mubr.f32.gmra.mrb[0].mxu0 %v1867
      %v2004 = vpop.f32.mrb[0].mxu0
      %v2005 = vadd.f32 %v1828, %v2004
      %v2006 = vpop.f32.mrb[0].mxu0
      %2007 = vmatprep.mubr.f32.mxu0 0.0
      %2008 = vmatmul.mubr.f32.gmra.mrb[0].mxu0 %v1870
      %v2009 = vpop.f32.mrb[0].mxu0
      %v2010 = vadd.f32 %v1828, %v2009
      %v2011 = vpop.f32.mrb[0].mxu0
      %2012 = vmatprep.mubr.f32.mxu0 0.0
      %2013 = vmatmul.mubr.f32.gmra.mrb[0].mxu0 %v1873
      %v2014 = vpop.f32.mrb[0].mxu0
      %v2015 = vadd.f32 %v1828, %v2014
      %v2016 = vpop.f32.mrb[0].mxu0
      %2017 = vmatprep.mubr.f32.mxu0 0.0
      %2018 = vmatmul.mubr.f32.gmra.mrb[0].mxu0 %v1876
      %v2019 = vpop.f32.mrb[0].mxu0
      %v2020 = vadd.f32 %v1828, %v2019
      %v2021 = vpop.f32.mrb[0].mxu0
      %2022 = vdwg.mxu0
      %v2023 = vmax.f32 %v1945, 0.0
      %v2024 = vmax.f32 %v1950, 0.0
      %v2025 = vmax.f32 %v1955, 0.0
      %v2026 = vmax.f32 %v1960, 0.0
      %v2027 = vmax.f32 %v1965, 0.0
      %v2028 = vmax.f32 %v1970, 0.0
      %v2029 = vmax.f32 %v1975, 0.0
      %v2030 = vmax.f32 %v1980, 0.0
      %v2031 = vmax.f32 %v1985, 0.0
      %v2032 = vmax.f32 %v1990, 0.0
      %v2033 = vmax.f32 %v1995, 0.0
      %v2034 = vmax.f32 %v2000, 0.0
      %v2035 = vmax.f32 %v2005, 0.0
      %v2036 = vmax.f32 %v2010, 0.0
      %v2037 = vmax.f32 %v2015, 0.0
      %v2038 = vmax.f32 %v2020, 0.0
      %v2039 = vld [vmem:[%s11] sm:$0xff]
      %v2040 = vld [vmem:[%s11 + $0x8] sm:$0xff]
      %v2041 = vld [vmem:[%s11 + $0x10] sm:$0xff]
      %v2042 = vld [vmem:[%s11 + $0x18] sm:$0xff]
      %v2043 = vld [vmem:[%s11 + $0x20] sm:$0xff]
      %v2044 = vld [vmem:[%s11 + $0x28] sm:$0xff]
      %v2045 = vld [vmem:[%s11 + $0x30] sm:$0xff]
      %v2046 = vld [vmem:[%s11 + $0x38] sm:$0xff]
      %v2047 = vld [vmem:[%s11 + $0x40] sm:$0xff]
      %v2048 = vld [vmem:[%s11 + $0x48] sm:$0xff]
      %v2049 = vld [vmem:[%s11 + $0x50] sm:$0xff]
      %v2050 = vld [vmem:[%s11 + $0x58] sm:$0xff]
      %v2051 = vld [vmem:[%s12] sm:$0xff]
      %v2052 = vld [vmem:[%s12 + $0x8] sm:$0xff]
      %2053 = vmatprep.subr.mxu0 0.0
      %2054 = vmatpush1.msra.mxu0 %v2051
      %2055 = vmatprep.subr.mxu0 0.0
      %2056 = vmatpush1.msra.mxu0 %v2052
      %2057 = vmatprep.subr.mxu0 0.0
      %2058 = vmatpush1.msra.mxu0 0.0
      %2059 = vmatprep.subr.mxu0 0.0
      %2060 = vmatpush1.msra.mxu0 0.0
      %2061 = vmatprep.subr.mxu0 0.0
      %2062 = vmatpush1.msra.mxu0 0.0
      %2063 = vmatprep.subr.mxu0 0.0
      %2064 = vmatpush1.msra.mxu0 0.0
      %2065 = vmatprep.subr.mxu0 0.0
      %2066 = vmatpush1.msra.mxu0 0.0
      %2067 = vmatprep.subr.mxu0 0.0
      %2068 = vmatpush1.msra.mxu0 0.0
      %2069 = vmatprep.subr.mxu0 0.0
      %2070 = vmatpush1.msra.mxu0 0.0
      %2071 = vmatprep.subr.mxu0 0.0
      %2072 = vmatpush1.msra.mxu0 0.0
      %2073 = vmatprep.subr.mxu0 0.0
      %2074 = vmatpush1.msra.mxu0 0.0
      %2075 = vmatprep.subr.mxu0 0.0
      %2076 = vmatpush1.msra.mxu0 0.0
      %2077 = vmatprep.subr.mxu0 0.0
      %2078 = vmatpush1.msra.mxu0 0.0
      %2079 = vmatprep.subr.mxu0 0.0
      %2080 = vmatpush1.msra.mxu0 0.0
      %2081 = vmatprep.subr.mxu0 0.0
      %2082 = vmatpush1.msra.mxu0 0.0
      %2083 = vmatprep.subr.mxu0 0.0
      %2084 = vmatpush1.msra.mxu0 0.0
      %2085 = vmatprep.subr.mxu0 0.0
      %2086 = vmatpush1.msra.mxu0 0.0
      %2087 = vmatprep.subr.mxu0 0.0
      %2088 = vmatpush1.msra.mxu0 0.0
      %2089 = vmatprep.subr.mxu0 0.0
      %2090 = vmatpush1.msra.mxu0 0.0
      %2091 = vmatprep.subr.mxu0 0.0
      %2092 = vmatpush1.msra.mxu0 0.0
      %2093 = vmatprep.subr.mxu0 0.0
      %2094 = vmatpush1.msra.mxu0 0.0
      %2095 = vmatprep.subr.mxu0 0.0
      %2096 = vmatpush1.msra.mxu0 0.0
      %2097 = vmatprep.subr.mxu0 0.0
      %2098 = vmatpush1.msra.mxu0 0.0
      %2099 = vmatprep.subr.mxu0 0.0
      %2100 = vmatpush1.msra.mxu0 0.0
      %2101 = vmatprep.subr.mxu0 0.0
      %2102 = vmatpush1.msra.mxu0 0.0
      %2103 = vmatprep.subr.mxu0 0.0
      %2104 = vmatpush1.msra.mxu0 0.0
      %2105 = vmatprep.subr.mxu0 0.0
      %2106 = vmatpush1.msra.mxu0 0.0
      %2107 = vmatprep.subr.mxu0 0.0
      %2108 = vmatpush1.msra.mxu0 0.0
      %2109 = vmatprep.subr.mxu0 0.0
      %2110 = vmatpush1.msra.mxu0 0.0
      %2111 = vmatprep.subr.mxu0 0.0
      %2112 = vmatpush1.msra.mxu0 0.0
      %2113 = vmatprep.subr.mxu0 0.0
      %2114 = vmatpush1.msra.mxu0 0.0
      %2115 = vmatprep.subr.mxu0 0.0
      %2116 = vmatpush1.msra.mxu0 0.0
      %2117 = vmatprep.mubr.f32.mxu0 0.0
      %2118 = vmatmul.mubr.f32.gmra.mrb[0].mxu0 %v1831
      %v2119 = vpop.f32.mrb[0].mxu0
      %v2120 = vadd.f32 0.0, %v2119
      %v2121 = vpop.f32.mrb[0].mxu0
      %2122 = vmatprep.mubr.f32.mxu0 0.0
      %2123 = vmatmul.mubr.f32.gmra.mrb[0].mxu0 %v1834
      %v2124 = vpop.f32.mrb[0].mxu0
      %v2125 = vadd.f32 0.0, %v2124
      %v2126 = vpop.f32.mrb[0].mxu0
      %2127 = vmatprep.mubr.f32.mxu0 0.0
      %2128 = vmatmul.mubr.f32.gmra.mrb[0].mxu0 %v1837
      %v2129 = vpop.f32.mrb[0].mxu0
      %v2130 = vadd.f32 0.0, %v2129
      %v2131 = vpop.f32.mrb[0].mxu0
      %2132 = vmatprep.mubr.f32.mxu0 0.0
      %2133 = vmatmul.mubr.f32.gmra.mrb[0].mxu0 %v1840
      %v2134 = vpop.f32.mrb[0].mxu0
      %v2135 = vadd.f32 0.0, %v2134
      %v2136 = vpop.f32.mrb[0].mxu0
      %2137 = vmatprep.mubr.f32.mxu0 0.0
      %2138 = vmatmul.mubr.f32.gmra.mrb[0].mxu0 %v1843
      %v2139 = vpop.f32.mrb[0].mxu0
      %v2140 = vadd.f32 0.0, %v2139
      %v2141 = vpop.f32.mrb[0].mxu0
      %2142 = vmatprep.mubr.f32.mxu0 0.0
      %2143 = vmatmul.mubr.f32.gmra.mrb[0].mxu0 %v1846
      %v2144 = vpop.f32.mrb[0].mxu0
      %v2145 = vadd.f32 0.0, %v2144
      %v2146 = vpop.f32.mrb[0].mxu0
      %2147 = vmatprep.mubr.f32.mxu0 0.0
      %2148 = vmatmul.mubr.f32.gmra.mrb[0].mxu0 %v1849
      %v2149 = vpop.f32.mrb[0].mxu0
      %v2150 = vadd.f32 0.0, %v2149
      %v2151 = vpop.f32.mrb[0].mxu0
      %2152 = vmatprep.mubr.f32.mxu0 0.0
      %2153 = vmatmul.mubr.f32.gmra.mrb[0].mxu0 %v1852
      %v2154 = vpop.f32.mrb[0].mxu0
      %v2155 = vadd.f32 0.0, %v2154
      %v2156 = vpop.f32.mrb[0].mxu0
      %2157 = vmatprep.mubr.f32.mxu0 0.0
      %2158 = vmatmul.mubr.f32.gmra.mrb[0].mxu0 %v1855
      %v2159 = vpop.f32.mrb[0].mxu0
      %v2160 = vadd.f32 0.0, %v2159
      %v2161 = vpop.f32.mrb[0].mxu0
      %2162 = vmatprep.mubr.f32.mxu0 0.0
      %2163 = vmatmul.mubr.f32.gmra.mrb[0].mxu0 %v1858
      %v2164 = vpop.f32.mrb[0].mxu0
      %v2165 = vadd.f32 0.0, %v2164
      %v2166 = vpop.f32.mrb[0].mxu0
      %2167 = vmatprep.mubr.f32.mxu0 0.0
      %2168 = vmatmul.mubr.f32.gmra.mrb[0].mxu0 %v1861
      %v2169 = vpop.f32.mrb[0].mxu0
      %v2170 = vadd.f32 0.0, %v2169
      %v2171 = vpop.f32.mrb[0].mxu0
      %2172 = vmatprep.mubr.f32.mxu0 0.0
      %2173 = vmatmul.mubr.f32.gmra.mrb[0].mxu0 %v1864
      %v2174 = vpop.f32.mrb[0].mxu0
      %v2175 = vadd.f32 0.0, %v2174
      %v2176 = vpop.f32.mrb[0].mxu0
      %2177 = vmatprep.mubr.f32.mxu0 0.0
      %2178 = vmatmul.mubr.f32.gmra.mrb[0].mxu0 %v1867
      %v2179 = vpop.f32.mrb[0].mxu0
      %v2180 = vadd.f32 0.0, %v2179
      %v2181 = vpop.f32.mrb[0].mxu0
      %2182 = vmatprep.mubr.f32.mxu0 0.0
      %2183 = vmatmul.mubr.f32.gmra.mrb[0].mxu0 %v1870
      %v2184 = vpop.f32.mrb[0].mxu0
      %v2185 = vadd.f32 0.0, %v2184
      %v2186 = vpop.f32.mrb[0].mxu0
      %2187 = vmatprep.mubr.f32.mxu0 0.0
      %2188 = vmatmul.mubr.f32.gmra.mrb[0].mxu0 %v1873
      %v2189 = vpop.f32.mrb[0].mxu0
      %v2190 = vadd.f32 0.0, %v2189
      %v2191 = vpop.f32.mrb[0].mxu0
      %2192 = vmatprep.mubr.f32.mxu0 0.0
      %2193 = vmatmul.mubr.f32.gmra.mrb[0].mxu0 %v1876
      %v2194 = vpop.f32.mrb[0].mxu0
      %v2195 = vadd.f32 0.0, %v2194
      %v2196 = vpop.f32.mrb[0].mxu0
      %2197 = vdwg.mxu0
      %vm2198 = vcmask 785408
      %v2200 = vsel %vm2198, %v2023, 0
      %v2203 = vsel %vm2198, %v2024, 0
      %v2206 = vsel %vm2198, %v2025, 0
      %v2209 = vsel %vm2198, %v2026, 0
      %v2212 = vsel %vm2198, %v2027, 0
      %v2215 = vsel %vm2198, %v2028, 0
      %v2218 = vsel %vm2198, %v2029, 0
      %v2221 = vsel %vm2198, %v2030, 0
      %v2224 = vsel %vm2198, %v2031, 0
      %v2227 = vsel %vm2198, %v2032, 0
      %v2230 = vsel %vm2198, %v2033, 0
      %v2233 = vsel %vm2198, %v2034, 0
      %v2236 = vsel %vm2198, %v2035, 0
      %v2239 = vsel %vm2198, %v2036, 0
      %v2242 = vsel %vm2198, %v2037, 0
      %v2245 = vsel %vm2198, %v2038, 0
      %2247 = vmatprep.subr.mxu0 0.0
      %2248 = vmatpush1.msra.mxu0 %v2039
      %2249 = vmatprep.subr.mxu0 0.0
      %2250 = vmatpush1.msra.mxu0 %v2040
      %2251 = vmatprep.subr.mxu0 0.0
      %2252 = vmatpush1.msra.mxu0 %v2041
      %2253 = vmatprep.subr.mxu0 0.0
      %2254 = vmatpush1.msra.mxu0 %v2042
      %2255 = vmatprep.subr.mxu0 0.0
      %2256 = vmatpush1.msra.mxu0 %v2043
      %2257 = vmatprep.subr.mxu0 0.0
      %2258 = vmatpush1.msra.mxu0 %v2044
      %2259 = vmatprep.subr.mxu0 0.0
      %2260 = vmatpush1.msra.mxu0 %v2045
      %2261 = vmatprep.subr.mxu0 0.0
      %2262 = vmatpush1.msra.mxu0 %v2046
      %2263 = vmatprep.subr.mxu0 0.0
      %2264 = vmatpush1.msra.mxu0 %v2047
      %2265 = vmatprep.subr.mxu0 0.0
      %2266 = vmatpush1.msra.mxu0 %v2048
      %2267 = vmatprep.subr.mxu0 0.0
      %2268 = vmatpush1.msra.mxu0 %v2049
      %2269 = vmatprep.subr.mxu0 0.0
      %2270 = vmatpush1.msra.mxu0 %v2050
      %2271 = vmatprep.subr.mxu0 0.0
      %2272 = vmatpush1.msra.mxu0 0.0
      %2273 = vmatprep.subr.mxu0 0.0
      %2274 = vmatpush1.msra.mxu0 0.0
      %2275 = vmatprep.subr.mxu0 0.0
      %2276 = vmatpush1.msra.mxu0 0.0
      %2277 = vmatprep.subr.mxu0 0.0
      %2278 = vmatpush1.msra.mxu0 0.0
      %2279 = vmatprep.subr.mxu0 0.0
      %2280 = vmatpush1.msra.mxu0 0.0
      %2281 = vmatprep.subr.mxu0 0.0
      %2282 = vmatpush1.msra.mxu0 0.0
      %2283 = vmatprep.subr.mxu0 0.0
      %2284 = vmatpush1.msra.mxu0 0.0
      %2285 = vmatprep.subr.mxu0 0.0
      %2286 = vmatpush1.msra.mxu0 0.0
      %2287 = vmatprep.subr.mxu0 0.0
      %2288 = vmatpush1.msra.mxu0 0.0
      %2289 = vmatprep.subr.mxu0 0.0
      %2290 = vmatpush1.msra.mxu0 0.0
      %2291 = vmatprep.subr.mxu0 0.0
      %2292 = vmatpush1.msra.mxu0 0.0
      %2293 = vmatprep.subr.mxu0 0.0
      %2294 = vmatpush1.msra.mxu0 0.0
      %2295 = vmatprep.subr.mxu0 0.0
      %2296 = vmatpush1.msra.mxu0 0.0
      %2297 = vmatprep.subr.mxu0 0.0
      %2298 = vmatpush1.msra.mxu0 0.0
      %2299 = vmatprep.subr.mxu0 0.0
      %2300 = vmatpush1.msra.mxu0 0.0
      %2301 = vmatprep.subr.mxu0 0.0
      %2302 = vmatpush1.msra.mxu0 0.0
      %2303 = vmatprep.subr.mxu0 0.0
      %2304 = vmatpush1.msra.mxu0 0.0
      %2305 = vmatprep.subr.mxu0 0.0
      %2306 = vmatpush1.msra.mxu0 0.0
      %2307 = vmatprep.subr.mxu0 0.0
      %2308 = vmatpush1.msra.mxu0 0.0
      %2309 = vmatprep.subr.mxu0 0.0
      %2310 = vmatpush1.msra.mxu0 0.0
      %2311 = vmatprep.mubr.f32.mxu0 0.0
      %2312 = vmatmul.mubr.f32.gmra.mrb[0].mxu0 %v2200
      %v2313 = vpop.f32.mrb[0].mxu0
      %v2314 = vadd.f32 %v2120, %v2313
      %v2315 = vpop.f32.mrb[0].mxu0
      %2316 = vmatprep.mubr.f32.mxu0 0.0
      %2317 = vmatmul.mubr.f32.gmra.mrb[0].mxu0 %v2203
      %v2318 = vpop.f32.mrb[0].mxu0
      %v2319 = vadd.f32 %v2125, %v2318
      %v2320 = vpop.f32.mrb[0].mxu0
      %2321 = vmatprep.mubr.f32.mxu0 0.0
      %2322 = vmatmul.mubr.f32.gmra.mrb[0].mxu0 %v2206
      %v2323 = vpop.f32.mrb[0].mxu0
      %v2324 = vadd.f32 %v2130, %v2323
      %v2325 = vpop.f32.mrb[0].mxu0
      %2326 = vmatprep.mubr.f32.mxu0 0.0
      %2327 = vmatmul.mubr.f32.gmra.mrb[0].mxu0 %v2209
      %v2328 = vpop.f32.mrb[0].mxu0
      %v2329 = vadd.f32 %v2135, %v2328
      %v2330 = vpop.f32.mrb[0].mxu0
      %2331 = vmatprep.mubr.f32.mxu0 0.0
      %2332 = vmatmul.mubr.f32.gmra.mrb[0].mxu0 %v2212
      %v2333 = vpop.f32.mrb[0].mxu0
      %v2334 = vadd.f32 %v2140, %v2333
      %v2335 = vpop.f32.mrb[0].mxu0
      %2336 = vmatprep.mubr.f32.mxu0 0.0
      %2337 = vmatmul.mubr.f32.gmra.mrb[0].mxu0 %v2215
      %v2338 = vpop.f32.mrb[0].mxu0
      %v2339 = vadd.f32 %v2145, %v2338
      %v2340 = vpop.f32.mrb[0].mxu0
      %2341 = vmatprep.mubr.f32.mxu0 0.0
      %2342 = vmatmul.mubr.f32.gmra.mrb[0].mxu0 %v2218
      %v2343 = vpop.f32.mrb[0].mxu0
      %v2344 = vadd.f32 %v2150, %v2343
      %v2345 = vpop.f32.mrb[0].mxu0
      %2346 = vmatprep.mubr.f32.mxu0 0.0
      %2347 = vmatmul.mubr.f32.gmra.mrb[0].mxu0 %v2221
      %v2348 = vpop.f32.mrb[0].mxu0
      %v2349 = vadd.f32 %v2155, %v2348
      %v2350 = vpop.f32.mrb[0].mxu0
      %2351 = vmatprep.mubr.f32.mxu0 0.0
      %2352 = vmatmul.mubr.f32.gmra.mrb[0].mxu0 %v2224
      %v2353 = vpop.f32.mrb[0].mxu0
      %v2354 = vadd.f32 %v2160, %v2353
      %v2355 = vpop.f32.mrb[0].mxu0
      %2356 = vmatprep.mubr.f32.mxu0 0.0
      %2357 = vmatmul.mubr.f32.gmra.mrb[0].mxu0 %v2227
      %v2358 = vpop.f32.mrb[0].mxu0
      %v2359 = vadd.f32 %v2165, %v2358
      %v2360 = vpop.f32.mrb[0].mxu0
      %2361 = vmatprep.mubr.f32.mxu0 0.0
      %2362 = vmatmul.mubr.f32.gmra.mrb[0].mxu0 %v2230
      %v2363 = vpop.f32.mrb[0].mxu0
      %v2364 = vadd.f32 %v2170, %v2363
      %v2365 = vpop.f32.mrb[0].mxu0
      %2366 = vmatprep.mubr.f32.mxu0 0.0
      %2367 = vmatmul.mubr.f32.gmra.mrb[0].mxu0 %v2233
      %v2368 = vpop.f32.mrb[0].mxu0
      %v2369 = vadd.f32 %v2175, %v2368
      %v2370 = vpop.f32.mrb[0].mxu0
      %2371 = vmatprep.mubr.f32.mxu0 0.0
      %2372 = vmatmul.mubr.f32.gmra.mrb[0].mxu0 %v2236
      %v2373 = vpop.f32.mrb[0].mxu0
      %v2374 = vadd.f32 %v2180, %v2373
      %v2375 = vpop.f32.mrb[0].mxu0
      %2376 = vmatprep.mubr.f32.mxu0 0.0
      %2377 = vmatmul.mubr.f32.gmra.mrb[0].mxu0 %v2239
      %v2378 = vpop.f32.mrb[0].mxu0
      %v2379 = vadd.f32 %v2185, %v2378
      %v2380 = vpop.f32.mrb[0].mxu0
      %2381 = vmatprep.mubr.f32.mxu0 0.0
      %2382 = vmatmul.mubr.f32.gmra.mrb[0].mxu0 %v2242
      %v2383 = vpop.f32.mrb[0].mxu0
      %v2384 = vadd.f32 %v2190, %v2383
      %v2385 = vpop.f32.mrb[0].mxu0
      %2386 = vmatprep.mubr.f32.mxu0 0.0
      %2387 = vmatmul.mubr.f32.gmra.mrb[0].mxu0 %v2245
      %v2388 = vpop.f32.mrb[0].mxu0
      %v2389 = vadd.f32 %v2195, %v2388
      %v2390 = vpop.f32.mrb[0].mxu0
      %2391 = vdwg.mxu0
      %v2392 = vld [vmem:[%s13] sm:$0x1]
      %v2394 = vlaneseq
      %v2395 = vshrl.u32 %v2394, 7
      %v2396 = vsub.s32 0, %v2395
      %v2397 = vrot.slane %v2392, %v2396
      %v2399 = vadd.f32 %v2314, %v2397
      %v2400 = vadd.f32 %v2319, %v2397
      %v2401 = vadd.f32 %v2324, %v2397
      %v2402 = vadd.f32 %v2329, %v2397
      %v2403 = vadd.f32 %v2334, %v2397
      %v2404 = vadd.f32 %v2339, %v2397
      %v2405 = vadd.f32 %v2344, %v2397
      %v2406 = vadd.f32 %v2349, %v2397
      %v2407 = vadd.f32 %v2354, %v2397
      %v2408 = vadd.f32 %v2359, %v2397
      %v2409 = vadd.f32 %v2364, %v2397
      %v2410 = vadd.f32 %v2369, %v2397
      %v2411 = vadd.f32 %v2374, %v2397
      %v2412 = vadd.f32 %v2379, %v2397
      %v2413 = vadd.f32 %v2384, %v2397
      %v2414 = vadd.f32 %v2389, %v2397
      %v2415 = vmul.f32 %v2399, 1.442695
      %v2416 = vpow.pop %v2415
      %v2417 = vmul.f32 %v2400, 1.442695
      %v2418 = vpow.pop %v2417
      %v2419 = vmul.f32 %v2401, 1.442695
      %v2420 = vpow.pop %v2419
      %v2421 = vmul.f32 %v2402, 1.442695
      %v2422 = vpow.pop %v2421
      %v2423 = vmul.f32 %v2403, 1.442695
      %v2424 = vpow.pop %v2423
      %v2425 = vmul.f32 %v2404, 1.442695
      %v2426 = vpow.pop %v2425
      %v2427 = vmul.f32 %v2405, 1.442695
      %v2428 = vpow.pop %v2427
      %v2429 = vmul.f32 %v2406, 1.442695
      %v2430 = vpow.pop %v2429
      %v2431 = vmul.f32 %v2407, 1.442695
      %v2432 = vpow.pop %v2431
      %v2433 = vmul.f32 %v2408, 1.442695
      %v2434 = vpow.pop %v2433
      %v2435 = vmul.f32 %v2409, 1.442695
      %v2436 = vpow.pop %v2435
      %v2437 = vmul.f32 %v2410, 1.442695
      %v2438 = vpow.pop %v2437
      %v2439 = vmul.f32 %v2411, 1.442695
      %v2440 = vpow.pop %v2439
      %v2441 = vmul.f32 %v2412, 1.442695
      %v2442 = vpow.pop %v2441
      %v2443 = vmul.f32 %v2413, 1.442695
      %v2444 = vpow.pop %v2443
      %v2445 = vmul.f32 %v2414, 1.442695
      %v2446 = vpow.pop %v2445
      %v2447 = vld [vmem:[%s569] sm:$0xff]
      %v2448 = vld [vmem:[%s569 + $0x8] sm:$0xff]
      %v2449 = vld [vmem:[%s569 + $0x10] sm:$0xff]
      %v2450 = vld [vmem:[%s569 + $0x18] sm:$0xff]
      %v2451 = vld [vmem:[%s569 + $0x20] sm:$0xff]
      %v2452 = vld [vmem:[%s569 + $0x28] sm:$0xff]
      %v2453 = vld [vmem:[%s569 + $0x30] sm:$0xff]
      %v2454 = vld [vmem:[%s569 + $0x38] sm:$0xff]
      %v2455 = vld [vmem:[%s569 + $0x40] sm:$0xff]
      %v2456 = vld [vmem:[%s569 + $0x48] sm:$0xff]
      %v2457 = vld [vmem:[%s569 + $0x50] sm:$0xff]
      %v2458 = vld [vmem:[%s569 + $0x58] sm:$0xff]
      %v2459 = vld [vmem:[%s569 + $0x60] sm:$0xff]
      %v2460 = vld [vmem:[%s569 + $0x68] sm:$0xff]
      %v2461 = vld [vmem:[%s569 + $0x70] sm:$0xff]
      %v2462 = vld [vmem:[%s569 + $0x78] sm:$0xff]
      %2479 = vrot.lane.b32.xlu0 %v2447, 32
      %v2480 = vpop.permute.xlu0 %2479
      %2481 = vrot.lane.b32.xlu0 %v2448, 32
      %v2482 = vpop.permute.xlu0 %2481
      %2483 = vrot.lane.b32.xlu0 %v2449, 32
      %v2484 = vpop.permute.xlu0 %2483
      %2485 = vrot.lane.b32.xlu0 %v2450, 32
      %v2486 = vpop.permute.xlu0 %2485
      %2487 = vrot.lane.b32.xlu0 %v2451, 32
      %v2488 = vpop.permute.xlu0 %2487
      %2489 = vrot.lane.b32.xlu0 %v2452, 32
      %v2490 = vpop.permute.xlu0 %2489
      %2491 = vrot.lane.b32.xlu0 %v2453, 32
      %v2492 = vpop.permute.xlu0 %2491
      %2493 = vrot.lane.b32.xlu0 %v2454, 32
      %v2494 = vpop.permute.xlu0 %2493
      %2495 = vrot.lane.b32.xlu0 %v2455, 32
      %v2496 = vpop.permute.xlu0 %2495
      %2497 = vrot.lane.b32.xlu0 %v2456, 32
      %v2498 = vpop.permute.xlu0 %2497
      %2499 = vrot.lane.b32.xlu0 %v2457, 32
      %v2500 = vpop.permute.xlu0 %2499
      %2501 = vrot.lane.b32.xlu0 %v2458, 32
      %v2502 = vpop.permute.xlu0 %2501
      %2503 = vrot.lane.b32.xlu0 %v2459, 32
      %v2504 = vpop.permute.xlu0 %2503
      %2505 = vrot.lane.b32.xlu0 %v2460, 32
      %v2506 = vpop.permute.xlu0 %2505
      %2507 = vrot.lane.b32.xlu0 %v2461, 32
      %v2508 = vpop.permute.xlu0 %2507
      %2509 = vrot.lane.b32.xlu0 %v2462, 32
      %v2510 = vpop.permute.xlu0 %2509
      %v2527 = vmul.f32 %v2416, %v2480
      %v2528 = vmul.f32 %v2418, %v2482
      %v2529 = vmul.f32 %v2420, %v2484
      %v2530 = vmul.f32 %v2422, %v2486
      %v2531 = vmul.f32 %v2424, %v2488
      %v2532 = vmul.f32 %v2426, %v2490
      %v2533 = vmul.f32 %v2428, %v2492
      %v2534 = vmul.f32 %v2430, %v2494
      %v2535 = vmul.f32 %v2432, %v2496
      %v2536 = vmul.f32 %v2434, %v2498
      %v2537 = vmul.f32 %v2436, %v2500
      %v2538 = vmul.f32 %v2438, %v2502
      %v2539 = vmul.f32 %v2440, %v2504
      %v2540 = vmul.f32 %v2442, %v2506
      %v2541 = vmul.f32 %v2444, %v2508
      %v2542 = vmul.f32 %v2446, %v2510
      %2559 = vrot.lane.b32.xlu0 %v2527, 96
      %v2560 = vpop.permute.xlu0 %2559
      %2561 = vrot.lane.b32.xlu0 %v2528, 96
      %v2562 = vpop.permute.xlu0 %2561
      %2563 = vrot.lane.b32.xlu0 %v2529, 96
      %v2564 = vpop.permute.xlu0 %2563
      %2565 = vrot.lane.b32.xlu0 %v2530, 96
      %v2566 = vpop.permute.xlu0 %2565
      %2567 = vrot.lane.b32.xlu0 %v2531, 96
      %v2568 = vpop.permute.xlu0 %2567
      %2569 = vrot.lane.b32.xlu0 %v2532, 96
      %v2570 = vpop.permute.xlu0 %2569
      %2571 = vrot.lane.b32.xlu0 %v2533, 96
      %v2572 = vpop.permute.xlu0 %2571
      %2573 = vrot.lane.b32.xlu0 %v2534, 96
      %v2574 = vpop.permute.xlu0 %2573
      %2575 = vrot.lane.b32.xlu0 %v2535, 96
      %v2576 = vpop.permute.xlu0 %2575
      %2577 = vrot.lane.b32.xlu0 %v2536, 96
      %v2578 = vpop.permute.xlu0 %2577
      %2579 = vrot.lane.b32.xlu0 %v2537, 96
      %v2580 = vpop.permute.xlu0 %2579
      %2581 = vrot.lane.b32.xlu0 %v2538, 96
      %v2582 = vpop.permute.xlu0 %2581
      %2583 = vrot.lane.b32.xlu0 %v2539, 96
      %v2584 = vpop.permute.xlu0 %2583
      %2585 = vrot.lane.b32.xlu0 %v2540, 96
      %v2586 = vpop.permute.xlu0 %2585
      %2587 = vrot.lane.b32.xlu0 %v2541, 96
      %v2588 = vpop.permute.xlu0 %2587
      %2589 = vrot.lane.b32.xlu0 %v2542, 96
      %v2590 = vpop.permute.xlu0 %2589
      %v2607 = vadd.f32 %v2399, %v2560
      %v2608 = vadd.f32 %v2400, %v2562
      %v2609 = vadd.f32 %v2401, %v2564
      %v2610 = vadd.f32 %v2402, %v2566
      %v2611 = vadd.f32 %v2403, %v2568
      %v2612 = vadd.f32 %v2404, %v2570
      %v2613 = vadd.f32 %v2405, %v2572
      %v2614 = vadd.f32 %v2406, %v2574
      %v2615 = vadd.f32 %v2407, %v2576
      %v2616 = vadd.f32 %v2408, %v2578
      %v2617 = vadd.f32 %v2409, %v2580
      %v2618 = vadd.f32 %v2410, %v2582
      %v2619 = vadd.f32 %v2411, %v2584
      %v2620 = vadd.f32 %v2412, %v2586
      %v2621 = vadd.f32 %v2413, %v2588
      %v2622 = vadd.f32 %v2414, %v2590
      %v2623 = vmul.f32 %v2607, 1.442695
      %v2624 = vpow.pop %v2623
      %v2625 = vmul.f32 %v2608, 1.442695
      %v2626 = vpow.pop %v2625
      %v2627 = vmul.f32 %v2609, 1.442695
      %v2628 = vpow.pop %v2627
      %v2629 = vmul.f32 %v2610, 1.442695
      %v2630 = vpow.pop %v2629
      %v2631 = vmul.f32 %v2611, 1.442695
      %v2632 = vpow.pop %v2631
      %v2633 = vmul.f32 %v2612, 1.442695
      %v2634 = vpow.pop %v2633
      %v2635 = vmul.f32 %v2613, 1.442695
      %v2636 = vpow.pop %v2635
      %v2637 = vmul.f32 %v2614, 1.442695
      %v2638 = vpow.pop %v2637
      %v2639 = vmul.f32 %v2615, 1.442695
      %v2640 = vpow.pop %v2639
      %v2641 = vmul.f32 %v2616, 1.442695
      %v2642 = vpow.pop %v2641
      %v2643 = vmul.f32 %v2617, 1.442695
      %v2644 = vpow.pop %v2643
      %v2645 = vmul.f32 %v2618, 1.442695
      %v2646 = vpow.pop %v2645
      %v2647 = vmul.f32 %v2619, 1.442695
      %v2648 = vpow.pop %v2647
      %v2649 = vmul.f32 %v2620, 1.442695
      %v2650 = vpow.pop %v2649
      %v2651 = vmul.f32 %v2621, 1.442695
      %v2652 = vpow.pop %v2651
      %v2653 = vmul.f32 %v2622, 1.442695
      %v2654 = vpow.pop %v2653
      %v2655 = vmax.f32 %v2399, 0.0
      %v2656 = vmax.f32 %v2400, 0.0
      %v2657 = vmax.f32 %v2401, 0.0
      %v2658 = vmax.f32 %v2402, 0.0
      %v2659 = vmax.f32 %v2403, 0.0
      %v2660 = vmax.f32 %v2404, 0.0
      %v2661 = vmax.f32 %v2405, 0.0
      %v2662 = vmax.f32 %v2406, 0.0
      %v2663 = vmax.f32 %v2407, 0.0
      %v2664 = vmax.f32 %v2408, 0.0
      %v2665 = vmax.f32 %v2409, 0.0
      %v2666 = vmax.f32 %v2410, 0.0
      %v2667 = vmax.f32 %v2411, 0.0
      %v2668 = vmax.f32 %v2412, 0.0
      %v2669 = vmax.f32 %v2413, 0.0
      %v2670 = vmax.f32 %v2414, 0.0
      %v2671 = vadd.f32 %v2655, 1.0
      %v2672 = vadd.f32 %v2656, 1.0
      %v2673 = vadd.f32 %v2657, 1.0
      %v2674 = vadd.f32 %v2658, 1.0
      %v2675 = vadd.f32 %v2659, 1.0
      %v2676 = vadd.f32 %v2660, 1.0
      %v2677 = vadd.f32 %v2661, 1.0
      %v2678 = vadd.f32 %v2662, 1.0
      %v2679 = vadd.f32 %v2663, 1.0
      %v2680 = vadd.f32 %v2664, 1.0
      %v2681 = vadd.f32 %v2665, 1.0
      %v2682 = vadd.f32 %v2666, 1.0
      %v2683 = vadd.f32 %v2667, 1.0
      %v2684 = vadd.f32 %v2668, 1.0
      %v2685 = vadd.f32 %v2669, 1.0
      %v2686 = vadd.f32 %v2670, 1.0
      %v2687 = vadd.f32 %v2671, 1e-08
      %v2688 = vadd.f32 %v2672, 1e-08
      %v2689 = vadd.f32 %v2673, 1e-08
      %v2690 = vadd.f32 %v2674, 1e-08
      %v2691 = vadd.f32 %v2675, 1e-08
      %v2692 = vadd.f32 %v2676, 1e-08
      %v2693 = vadd.f32 %v2677, 1e-08
      %v2694 = vadd.f32 %v2678, 1e-08
      %v2695 = vadd.f32 %v2679, 1e-08
      %v2696 = vadd.f32 %v2680, 1e-08
      %v2697 = vadd.f32 %v2681, 1e-08
      %v2698 = vadd.f32 %v2682, 1e-08
      %v2699 = vadd.f32 %v2683, 1e-08
      %v2700 = vadd.f32 %v2684, 1e-08
      %v2701 = vadd.f32 %v2685, 1e-08
      %v2702 = vadd.f32 %v2686, 1e-08
      %2719 = vrot.lane.b32.xlu0 %v2687, 64
      %v2720 = vpop.permute.xlu0 %2719
      %2721 = vrot.lane.b32.xlu0 %v2688, 64
      %v2722 = vpop.permute.xlu0 %2721
      %2723 = vrot.lane.b32.xlu0 %v2689, 64
      %v2724 = vpop.permute.xlu0 %2723
      %2725 = vrot.lane.b32.xlu0 %v2690, 64
      %v2726 = vpop.permute.xlu0 %2725
      %2727 = vrot.lane.b32.xlu0 %v2691, 64
      %v2728 = vpop.permute.xlu0 %2727
      %2729 = vrot.lane.b32.xlu0 %v2692, 64
      %v2730 = vpop.permute.xlu0 %2729
      %2731 = vrot.lane.b32.xlu0 %v2693, 64
      %v2732 = vpop.permute.xlu0 %2731
      %2733 = vrot.lane.b32.xlu0 %v2694, 64
      %v2734 = vpop.permute.xlu0 %2733
      %2735 = vrot.lane.b32.xlu0 %v2695, 64
      %v2736 = vpop.permute.xlu0 %2735
      %2737 = vrot.lane.b32.xlu0 %v2696, 64
      %v2738 = vpop.permute.xlu0 %2737
      %2739 = vrot.lane.b32.xlu0 %v2697, 64
      %v2740 = vpop.permute.xlu0 %2739
      %2741 = vrot.lane.b32.xlu0 %v2698, 64
      %v2742 = vpop.permute.xlu0 %2741
      %2743 = vrot.lane.b32.xlu0 %v2699, 64
      %v2744 = vpop.permute.xlu0 %2743
      %2745 = vrot.lane.b32.xlu0 %v2700, 64
      %v2746 = vpop.permute.xlu0 %2745
      %2747 = vrot.lane.b32.xlu0 %v2701, 64
      %v2748 = vpop.permute.xlu0 %2747
      %2749 = vrot.lane.b32.xlu0 %v2702, 64
      %v2750 = vpop.permute.xlu0 %2749
      %v2767 = vmul.f32 %v2624, %v2720
      %v2768 = vmul.f32 %v2626, %v2722
      %v2769 = vmul.f32 %v2628, %v2724
      %v2770 = vmul.f32 %v2630, %v2726
      %v2771 = vmul.f32 %v2632, %v2728
      %v2772 = vmul.f32 %v2634, %v2730
      %v2773 = vmul.f32 %v2636, %v2732
      %v2774 = vmul.f32 %v2638, %v2734
      %v2775 = vmul.f32 %v2640, %v2736
      %v2776 = vmul.f32 %v2642, %v2738
      %v2777 = vmul.f32 %v2644, %v2740
      %v2778 = vmul.f32 %v2646, %v2742
      %v2779 = vmul.f32 %v2648, %v2744
      %v2780 = vmul.f32 %v2650, %v2746
      %v2781 = vmul.f32 %v2652, %v2748
      %v2782 = vmul.f32 %v2654, %v2750
      %v2783 = vld [vmem:[%s14] sm:$0xff]
      %v2784 = vlaneseq
      %v2785 = vshrl.u32 %v2784, 7
      %v2786 = vsub.s32 1, %v2785
      %v2787 = vrot.slane %v2783, %v2786
      %v2788 = vadd.f32 %v2787, %v2624
      %v2789 = vadd.f32 %v2787, %v2626
      %v2790 = vadd.f32 %v2787, %v2628
      %v2791 = vadd.f32 %v2787, %v2630
      %v2792 = vadd.f32 %v2787, %v2632
      %v2793 = vadd.f32 %v2787, %v2634
      %v2794 = vadd.f32 %v2787, %v2636
      %v2795 = vadd.f32 %v2787, %v2638
      %v2796 = vadd.f32 %v2787, %v2640
      %v2797 = vadd.f32 %v2787, %v2642
      %v2798 = vadd.f32 %v2787, %v2644
      %v2799 = vadd.f32 %v2787, %v2646
      %v2800 = vadd.f32 %v2787, %v2648
      %v2801 = vadd.f32 %v2787, %v2650
      %v2802 = vadd.f32 %v2787, %v2652
      %v2803 = vadd.f32 %v2787, %v2654
      %v2804 = vadd.f32 %v2788, 1e-08
      %v2805 = vadd.f32 %v2789, 1e-08
      %v2806 = vadd.f32 %v2790, 1e-08
      %v2807 = vadd.f32 %v2791, 1e-08
      %v2808 = vadd.f32 %v2792, 1e-08
      %v2809 = vadd.f32 %v2793, 1e-08
      %v2810 = vadd.f32 %v2794, 1e-08
      %v2811 = vadd.f32 %v2795, 1e-08
      %v2812 = vadd.f32 %v2796, 1e-08
      %v2813 = vadd.f32 %v2797, 1e-08
      %v2814 = vadd.f32 %v2798, 1e-08
      %v2815 = vadd.f32 %v2799, 1e-08
      %v2816 = vadd.f32 %v2800, 1e-08
      %v2817 = vadd.f32 %v2801, 1e-08
      %v2818 = vadd.f32 %v2802, 1e-08
      %v2819 = vadd.f32 %v2803, 1e-08
      %v2820 = vlog2.pop %v2804
      %v2821 = vmul.f32 %v2820, 0.6931472
      %v2822 = vlog2.pop %v2805
      %v2823 = vmul.f32 %v2822, 0.6931472
      %v2824 = vlog2.pop %v2806
      %v2825 = vmul.f32 %v2824, 0.6931472
      %v2826 = vlog2.pop %v2807
      %v2827 = vmul.f32 %v2826, 0.6931472
      %v2828 = vlog2.pop %v2808
      %v2829 = vmul.f32 %v2828, 0.6931472
      %v2830 = vlog2.pop %v2809
      %v2831 = vmul.f32 %v2830, 0.6931472
      %v2832 = vlog2.pop %v2810
      %v2833 = vmul.f32 %v2832, 0.6931472
      %v2834 = vlog2.pop %v2811
      %v2835 = vmul.f32 %v2834, 0.6931472
      %v2836 = vlog2.pop %v2812
      %v2837 = vmul.f32 %v2836, 0.6931472
      %v2838 = vlog2.pop %v2813
      %v2839 = vmul.f32 %v2838, 0.6931472
      %v2840 = vlog2.pop %v2814
      %v2841 = vmul.f32 %v2840, 0.6931472
      %v2842 = vlog2.pop %v2815
      %v2843 = vmul.f32 %v2842, 0.6931472
      %v2844 = vlog2.pop %v2816
      %v2845 = vmul.f32 %v2844, 0.6931472
      %v2846 = vlog2.pop %v2817
      %v2847 = vmul.f32 %v2846, 0.6931472
      %v2848 = vlog2.pop %v2818
      %v2849 = vmul.f32 %v2848, 0.6931472
      %v2850 = vlog2.pop %v2819
      %v2851 = vmul.f32 %v2850, 0.6931472
      %v2852 = vadd.f32 %v2787, %v2767
      %v2853 = vadd.f32 %v2787, %v2768
      %v2854 = vadd.f32 %v2787, %v2769
      %v2855 = vadd.f32 %v2787, %v2770
      %v2856 = vadd.f32 %v2787, %v2771
      %v2857 = vadd.f32 %v2787, %v2772
      %v2858 = vadd.f32 %v2787, %v2773
      %v2859 = vadd.f32 %v2787, %v2774
      %v2860 = vadd.f32 %v2787, %v2775
      %v2861 = vadd.f32 %v2787, %v2776
      %v2862 = vadd.f32 %v2787, %v2777
      %v2863 = vadd.f32 %v2787, %v2778
      %v2864 = vadd.f32 %v2787, %v2779
      %v2865 = vadd.f32 %v2787, %v2780
      %v2866 = vadd.f32 %v2787, %v2781
      %v2867 = vadd.f32 %v2787, %v2782
      %v2868 = vadd.f32 %v2852, 1e-08
      %v2869 = vadd.f32 %v2853, 1e-08
      %v2870 = vadd.f32 %v2854, 1e-08
      %v2871 = vadd.f32 %v2855, 1e-08
      %v2872 = vadd.f32 %v2856, 1e-08
      %v2873 = vadd.f32 %v2857, 1e-08
      %v2874 = vadd.f32 %v2858, 1e-08
      %v2875 = vadd.f32 %v2859, 1e-08
      %v2876 = vadd.f32 %v2860, 1e-08
      %v2877 = vadd.f32 %v2861, 1e-08
      %v2878 = vadd.f32 %v2862, 1e-08
      %v2879 = vadd.f32 %v2863, 1e-08
      %v2880 = vadd.f32 %v2864, 1e-08
      %v2881 = vadd.f32 %v2865, 1e-08
      %v2882 = vadd.f32 %v2866, 1e-08
      %v2883 = vadd.f32 %v2867, 1e-08
      %v2884 = vlog2.pop %v2868
      %v2885 = vmul.f32 %v2884, 0.6931472
      %v2886 = vlog2.pop %v2869
      %v2887 = vmul.f32 %v2886, 0.6931472
      %v2888 = vlog2.pop %v2870
      %v2889 = vmul.f32 %v2888, 0.6931472
      %v2890 = vlog2.pop %v2871
      %v2891 = vmul.f32 %v2890, 0.6931472
      %v2892 = vlog2.pop %v2872
      %v2893 = vmul.f32 %v2892, 0.6931472
      %v2894 = vlog2.pop %v2873
      %v2895 = vmul.f32 %v2894, 0.6931472
      %v2896 = vlog2.pop %v2874
      %v2897 = vmul.f32 %v2896, 0.6931472
      %v2898 = vlog2.pop %v2875
      %v2899 = vmul.f32 %v2898, 0.6931472
      %v2900 = vlog2.pop %v2876
      %v2901 = vmul.f32 %v2900, 0.6931472
      %v2902 = vlog2.pop %v2877
      %v2903 = vmul.f32 %v2902, 0.6931472
      %v2904 = vlog2.pop %v2878
      %v2905 = vmul.f32 %v2904, 0.6931472
      %v2906 = vlog2.pop %v2879
      %v2907 = vmul.f32 %v2906, 0.6931472
      %v2908 = vlog2.pop %v2880
      %v2909 = vmul.f32 %v2908, 0.6931472
      %v2910 = vlog2.pop %v2881
      %v2911 = vmul.f32 %v2910, 0.6931472
      %v2912 = vlog2.pop %v2882
      %v2913 = vmul.f32 %v2912, 0.6931472
      %v2914 = vlog2.pop %v2883
      %v2915 = vmul.f32 %v2914, 0.6931472
      %v2916 = vadd.f32 %v2767, 1e-08
      %v2917 = vadd.f32 %v2768, 1e-08
      %v2918 = vadd.f32 %v2769, 1e-08
      %v2919 = vadd.f32 %v2770, 1e-08
      %v2920 = vadd.f32 %v2771, 1e-08
      %v2921 = vadd.f32 %v2772, 1e-08
      %v2922 = vadd.f32 %v2773, 1e-08
      %v2923 = vadd.f32 %v2774, 1e-08
      %v2924 = vadd.f32 %v2775, 1e-08
      %v2925 = vadd.f32 %v2776, 1e-08
      %v2926 = vadd.f32 %v2777, 1e-08
      %v2927 = vadd.f32 %v2778, 1e-08
      %v2928 = vadd.f32 %v2779, 1e-08
      %v2929 = vadd.f32 %v2780, 1e-08
      %v2930 = vadd.f32 %v2781, 1e-08
      %v2931 = vadd.f32 %v2782, 1e-08
      %v2932 = vlog2.pop %v2916
      %v2933 = vmul.f32 %v2932, 0.6931472
      %v2934 = vlog2.pop %v2917
      %v2935 = vmul.f32 %v2934, 0.6931472
      %v2936 = vlog2.pop %v2918
      %v2937 = vmul.f32 %v2936, 0.6931472
      %v2938 = vlog2.pop %v2919
      %v2939 = vmul.f32 %v2938, 0.6931472
      %v2940 = vlog2.pop %v2920
      %v2941 = vmul.f32 %v2940, 0.6931472
      %v2942 = vlog2.pop %v2921
      %v2943 = vmul.f32 %v2942, 0.6931472
      %v2944 = vlog2.pop %v2922
      %v2945 = vmul.f32 %v2944, 0.6931472
      %v2946 = vlog2.pop %v2923
      %v2947 = vmul.f32 %v2946, 0.6931472
      %v2948 = vlog2.pop %v2924
      %v2949 = vmul.f32 %v2948, 0.6931472
      %v2950 = vlog2.pop %v2925
      %v2951 = vmul.f32 %v2950, 0.6931472
      %v2952 = vlog2.pop %v2926
      %v2953 = vmul.f32 %v2952, 0.6931472
      %v2954 = vlog2.pop %v2927
      %v2955 = vmul.f32 %v2954, 0.6931472
      %v2956 = vlog2.pop %v2928
      %v2957 = vmul.f32 %v2956, 0.6931472
      %v2958 = vlog2.pop %v2929
      %v2959 = vmul.f32 %v2958, 0.6931472
      %v2960 = vlog2.pop %v2930
      %v2961 = vmul.f32 %v2960, 0.6931472
      %v2962 = vlog2.pop %v2931
      %v2963 = vmul.f32 %v2962, 0.6931472
      %v2964 = vadd.f32 %v583, %v2787
      %v2965 = vadd.f32 %v584, %v2787
      %v2966 = vadd.f32 %v585, %v2787
      %v2967 = vadd.f32 %v586, %v2787
      %v2968 = vadd.f32 %v587, %v2787
      %v2969 = vadd.f32 %v588, %v2787
      %v2970 = vadd.f32 %v589, %v2787
      %v2971 = vadd.f32 %v590, %v2787
      %v2972 = vadd.f32 %v591, %v2787
      %v2973 = vadd.f32 %v592, %v2787
      %v2974 = vadd.f32 %v593, %v2787
      %v2975 = vadd.f32 %v594, %v2787
      %v2976 = vadd.f32 %v595, %v2787
      %v2977 = vadd.f32 %v596, %v2787
      %v2978 = vadd.f32 %v597, %v2787
      %v2979 = vadd.f32 %v598, %v2787
      %v2980 = vadd.f32 %v2964, 33.458332
      %v2981 = vadd.f32 %v2965, 33.458332
      %v2982 = vadd.f32 %v2966, 33.458332
      %v2983 = vadd.f32 %v2967, 33.458332
      %v2984 = vadd.f32 %v2968, 33.458332
      %v2985 = vadd.f32 %v2969, 33.458332
      %v2986 = vadd.f32 %v2970, 33.458332
      %v2987 = vadd.f32 %v2971, 33.458332
      %v2988 = vadd.f32 %v2972, 33.458332
      %v2989 = vadd.f32 %v2973, 33.458332
      %v2990 = vadd.f32 %v2974, 33.458332
      %v2991 = vadd.f32 %v2975, 33.458332
      %v2992 = vadd.f32 %v2976, 33.458332
      %v2993 = vadd.f32 %v2977, 33.458332
      %v2994 = vadd.f32 %v2978, 33.458332
      %v2995 = vadd.f32 %v2979, 33.458332
      %v2996 = vmul.f32 %v2980, %v2964
      %v2997 = vmul.f32 %v2981, %v2965
      %v2998 = vmul.f32 %v2982, %v2966
      %v2999 = vmul.f32 %v2983, %v2967
      %v3000 = vmul.f32 %v2984, %v2968
      %v3001 = vmul.f32 %v2985, %v2969
      %v3002 = vmul.f32 %v2986, %v2970
      %v3003 = vmul.f32 %v2987, %v2971
      %v3004 = vmul.f32 %v2988, %v2972
      %v3005 = vmul.f32 %v2989, %v2973
      %v3006 = vmul.f32 %v2990, %v2974
      %v3007 = vmul.f32 %v2991, %v2975
      %v3008 = vmul.f32 %v2992, %v2976
      %v3009 = vmul.f32 %v2993, %v2977
      %v3010 = vmul.f32 %v2994, %v2978
      %v3011 = vmul.f32 %v2995, %v2979
      %v3012 = vadd.f32 %v2996, 466.3342
      %v3013 = vadd.f32 %v2997, 466.3342
      %v3014 = vadd.f32 %v2998, 466.3342
      %v3015 = vadd.f32 %v2999, 466.3342
      %v3016 = vadd.f32 %v3000, 466.3342
      %v3017 = vadd.f32 %v3001, 466.3342
      %v3018 = vadd.f32 %v3002, 466.3342
      %v3019 = vadd.f32 %v3003, 466.3342
      %v3020 = vadd.f32 %v3004, 466.3342
      %v3021 = vadd.f32 %v3005, 466.3342
      %v3022 = vadd.f32 %v3006, 466.3342
      %v3023 = vadd.f32 %v3007, 466.3342
      %v3024 = vadd.f32 %v3008, 466.3342
      %v3025 = vadd.f32 %v3009, 466.3342
      %v3026 = vadd.f32 %v3010, 466.3342
      %v3027 = vadd.f32 %v3011, 466.3342
      %v3028 = vmul.f32 %v3012, %v2964
      %v3029 = vmul.f32 %v3013, %v2965
      %v3030 = vmul.f32 %v3014, %v2966
      %v3031 = vmul.f32 %v3015, %v2967
      %v3032 = vmul.f32 %v3016, %v2968
      %v3033 = vmul.f32 %v3017, %v2969
      %v3034 = vmul.f32 %v3018, %v2970
      %v3035 = vmul.f32 %v3019, %v2971
      %v3036 = vmul.f32 %v3020, %v2972
      %v3037 = vmul.f32 %v3021, %v2973
      %v3038 = vmul.f32 %v3022, %v2974
      %v3039 = vmul.f32 %v3023, %v2975
      %v3040 = vmul.f32 %v3024, %v2976
      %v3041 = vmul.f32 %v3025, %v2977
      %v3042 = vmul.f32 %v3026, %v2978
      %v3043 = vmul.f32 %v3027, %v2979
      %v3044 = vadd.f32 %v3028, 3465.7095
      %v3045 = vadd.f32 %v3029, 3465.7095
      %v3046 = vadd.f32 %v3030, 3465.7095
      %v3047 = vadd.f32 %v3031, 3465.7095
      %v3048 = vadd.f32 %v3032, 3465.7095
      %v3049 = vadd.f32 %v3033, 3465.7095
      %v3050 = vadd.f32 %v3034, 3465.7095
      %v3051 = vadd.f32 %v3035, 3465.7095
      %v3052 = vadd.f32 %v3036, 3465.7095
      %v3053 = vadd.f32 %v3037, 3465.7095
      %v3054 = vadd.f32 %v3038, 3465.7095
      %v3055 = vadd.f32 %v3039, 3465.7095
      %v3056 = vadd.f32 %v3040, 3465.7095
      %v3057 = vadd.f32 %v3041, 3465.7095
      %v3058 = vadd.f32 %v3042, 3465.7095
      %v3059 = vadd.f32 %v3043, 3465.7095
      %v3060 = vmul.f32 %v3044, %v2964
      %v3061 = vmul.f32 %v3045, %v2965
      %v3062 = vmul.f32 %v3046, %v2966
      %v3063 = vmul.f32 %v3047, %v2967
      %v3064 = vmul.f32 %v3048, %v2968
      %v3065 = vmul.f32 %v3049, %v2969
      %v3066 = vmul.f32 %v3050, %v2970
      %v3067 = vmul.f32 %v3051, %v2971
      %v3068 = vmul.f32 %v3052, %v2972
      %v3069 = vmul.f32 %v3053, %v2973
      %v3070 = vmul.f32 %v3054, %v2974
      %v3071 = vmul.f32 %v3055, %v2975
      %v3072 = vmul.f32 %v3056, %v2976
      %v3073 = vmul.f32 %v3057, %v2977
      %v3074 = vmul.f32 %v3058, %v2978
      %v3075 = vmul.f32 %v3059, %v2979
      %v3076 = vadd.f32 %v3060, 14484.914
      %v3077 = vadd.f32 %v3061, 14484.914
      %v3078 = vadd.f32 %v3062, 14484.914
      %v3079 = vadd.f32 %v3063, 14484.914
      %v3080 = vadd.f32 %v3064, 14484.914
      %v3081 = vadd.f32 %v3065, 14484.914
      %v3082 = vadd.f32 %v3066, 14484.914
      %v3083 = vadd.f32 %v3067, 14484.914
      %v3084 = vadd.f32 %v3068, 14484.914
      %v3085 = vadd.f32 %v3069, 14484.914
      %v3086 = vadd.f32 %v3070, 14484.914
      %v3087 = vadd.f32 %v3071, 14484.914
      %v3088 = vadd.f32 %v3072, 14484.914
      %v3089 = vadd.f32 %v3073, 14484.914
      %v3090 = vadd.f32 %v3074, 14484.914
      %v3091 = vadd.f32 %v3075, 14484.914
      %v3092 = vmul.f32 %v3076, %v2964
      %v3093 = vmul.f32 %v3077, %v2965
      %v3094 = vmul.f32 %v3078, %v2966
      %v3095 = vmul.f32 %v3079, %v2967
      %v3096 = vmul.f32 %v3080, %v2968
      %v3097 = vmul.f32 %v3081, %v2969
      %v3098 = vmul.f32 %v3082, %v2970
      %v3099 = vmul.f32 %v3083, %v2971
      %v3100 = vmul.f32 %v3084, %v2972
      %v3101 = vmul.f32 %v3085, %v2973
      %v3102 = vmul.f32 %v3086, %v2974
      %v3103 = vmul.f32 %v3087, %v2975
      %v3104 = vmul.f32 %v3088, %v2976
      %v3105 = vmul.f32 %v3089, %v2977
      %v3106 = vmul.f32 %v3090, %v2978
      %v3107 = vmul.f32 %v3091, %v2979
      %v3108 = vadd.f32 %v3092, 32281.064
      %v3109 = vadd.f32 %v3093, 32281.064
      %v3110 = vadd.f32 %v3094, 32281.064
      %v3111 = vadd.f32 %v3095, 32281.064
      %v3112 = vadd.f32 %v3096, 32281.064
      %v3113 = vadd.f32 %v3097, 32281.064
      %v3114 = vadd.f32 %v3098, 32281.064
      %v3115 = vadd.f32 %v3099, 32281.064
      %v3116 = vadd.f32 %v3100, 32281.064
      %v3117 = vadd.f32 %v3101, 32281.064
      %v3118 = vadd.f32 %v3102, 32281.064
      %v3119 = vadd.f32 %v3103, 32281.064
      %v3120 = vadd.f32 %v3104, 32281.064
      %v3121 = vadd.f32 %v3105, 32281.064
      %v3122 = vadd.f32 %v3106, 32281.064
      %v3123 = vadd.f32 %v3107, 32281.064
      %v3124 = vmul.f32 %v3108, %v2964
      %v3125 = vmul.f32 %v3109, %v2965
      %v3126 = vmul.f32 %v3110, %v2966
      %v3127 = vmul.f32 %v3111, %v2967
      %v3128 = vmul.f32 %v3112, %v2968
      %v3129 = vmul.f32 %v3113, %v2969
      %v3130 = vmul.f32 %v3114, %v2970
      %v3131 = vmul.f32 %v3115, %v2971
      %v3132 = vmul.f32 %v3116, %v2972
      %v3133 = vmul.f32 %v3117, %v2973
      %v3134 = vmul.f32 %v3118, %v2974
      %v3135 = vmul.f32 %v3119, %v2975
      %v3136 = vmul.f32 %v3120, %v2976
      %v3137 = vmul.f32 %v3121, %v2977
      %v3138 = vmul.f32 %v3122, %v2978
      %v3139 = vmul.f32 %v3123, %v2979
      %v3140 = vadd.f32 %v3124, 29969.594
      %v3141 = vadd.f32 %v3125, 29969.594
      %v3142 = vadd.f32 %v3126, 29969.594
      %v3143 = vadd.f32 %v3127, 29969.594
      %v3144 = vadd.f32 %v3128, 29969.594
      %v3145 = vadd.f32 %v3129, 29969.594
      %v3146 = vadd.f32 %v3130, 29969.594
      %v3147 = vadd.f32 %v3131, 29969.594
      %v3148 = vadd.f32 %v3132, 29969.594
      %v3149 = vadd.f32 %v3133, 29969.594
      %v3150 = vadd.f32 %v3134, 29969.594
      %v3151 = vadd.f32 %v3135, 29969.594
      %v3152 = vadd.f32 %v3136, 29969.594
      %v3153 = vadd.f32 %v3137, 29969.594
      %v3154 = vadd.f32 %v3138, 29969.594
      %v3155 = vadd.f32 %v3139, 29969.594
      %v3156 = vadd.f32 %v2964, 21.0
      %v3157 = vadd.f32 %v2965, 21.0
      %v3158 = vadd.f32 %v2966, 21.0
      %v3159 = vadd.f32 %v2967, 21.0
      %v3160 = vadd.f32 %v2968, 21.0
      %v3161 = vadd.f32 %v2969, 21.0
      %v3162 = vadd.f32 %v2970, 21.0
      %v3163 = vadd.f32 %v2971, 21.0
      %v3164 = vadd.f32 %v2972, 21.0
      %v3165 = vadd.f32 %v2973, 21.0
      %v3166 = vadd.f32 %v2974, 21.0
      %v3167 = vadd.f32 %v2975, 21.0
      %v3168 = vadd.f32 %v2976, 21.0
      %v3169 = vadd.f32 %v2977, 21.0
      %v3170 = vadd.f32 %v2978, 21.0
      %v3171 = vadd.f32 %v2979, 21.0
      %v3172 = vmul.f32 %v3156, %v2964
      %v3173 = vmul.f32 %v3157, %v2965
      %v3174 = vmul.f32 %v3158, %v2966
      %v3175 = vmul.f32 %v3159, %v2967
      %v3176 = vmul.f32 %v3160, %v2968
      %v3177 = vmul.f32 %v3161, %v2969
      %v3178 = vmul.f32 %v3162, %v2970
      %v3179 = vmul.f32 %v3163, %v2971
      %v3180 = vmul.f32 %v3164, %v2972
      %v3181 = vmul.f32 %v3165, %v2973
      %v3182 = vmul.f32 %v3166, %v2974
      %v3183 = vmul.f32 %v3167, %v2975
      %v3184 = vmul.f32 %v3168, %v2976
      %v3185 = vmul.f32 %v3169, %v2977
      %v3186 = vmul.f32 %v3170, %v2978
      %v3187 = vmul.f32 %v3171, %v2979
      %v3188 = vadd.f32 %v3172, 175.0
      %v3189 = vadd.f32 %v3173, 175.0
      %v3190 = vadd.f32 %v3174, 175.0
      %v3191 = vadd.f32 %v3175, 175.0
      %v3192 = vadd.f32 %v3176, 175.0
      %v3193 = vadd.f32 %v3177, 175.0
      %v3194 = vadd.f32 %v3178, 175.0
      %v3195 = vadd.f32 %v3179, 175.0
      %v3196 = vadd.f32 %v3180, 175.0
      %v3197 = vadd.f32 %v3181, 175.0
      %v3198 = vadd.f32 %v3182, 175.0
      %v3199 = vadd.f32 %v3183, 175.0
      %v3200 = vadd.f32 %v3184, 175.0
      %v3201 = vadd.f32 %v3185, 175.0
      %v3202 = vadd.f32 %v3186, 175.0
      %v3203 = vadd.f32 %v3187, 175.0
      %v3204 = vmul.f32 %v3188, %v2964
      %v3205 = vmul.f32 %v3189, %v2965
      %v3206 = vmul.f32 %v3190, %v2966
      %v3207 = vmul.f32 %v3191, %v2967
      %v3208 = vmul.f32 %v3192, %v2968
      %v3209 = vmul.f32 %v3193, %v2969
      %v3210 = vmul.f32 %v3194, %v2970
      %v3211 = vmul.f32 %v3195, %v2971
      %v3212 = vmul.f32 %v3196, %v2972
      %v3213 = vmul.f32 %v3197, %v2973
      %v3214 = vmul.f32 %v3198, %v2974
      %v3215 = vmul.f32 %v3199, %v2975
      %v3216 = vmul.f32 %v3200, %v2976
      %v3217 = vmul.f32 %v3201, %v2977
      %v3218 = vmul.f32 %v3202, %v2978
      %v3219 = vmul.f32 %v3203, %v2979
      %v3220 = vadd.f32 %v3204, 735.0
      %v3221 = vadd.f32 %v3205, 735.0
      %v3222 = vadd.f32 %v3206, 735.0
      %v3223 = vadd.f32 %v3207, 735.0
      %v3224 = vadd.f32 %v3208, 735.0
      %v3225 = vadd.f32 %v3209, 735.0
      %v3226 = vadd.f32 %v3210, 735.0
      %v3227 = vadd.f32 %v3211, 735.0
      %v3228 = vadd.f32 %v3212, 735.0
      %v3229 = vadd.f32 %v3213, 735.0
      %v3230 = vadd.f32 %v3214, 735.0
      %v3231 = vadd.f32 %v3215, 735.0
      %v3232 = vadd.f32 %v3216, 735.0
      %v3233 = vadd.f32 %v3217, 735.0
      %v3234 = vadd.f32 %v3218, 735.0
      %v3235 = vadd.f32 %v3219, 735.0
      %v3236 = vmul.f32 %v3220, %v2964
      %v3237 = vmul.f32 %v3221, %v2965
      %v3238 = vmul.f32 %v3222, %v2966
      %v3239 = vmul.f32 %v3223, %v2967
      %v3240 = vmul.f32 %v3224, %v2968
      %v3241 = vmul.f32 %v3225, %v2969
      %v3242 = vmul.f32 %v3226, %v2970
      %v3243 = vmul.f32 %v3227, %v2971
      %v3244 = vmul.f32 %v3228, %v2972
      %v3245 = vmul.f32 %v3229, %v2973
      %v3246 = vmul.f32 %v3230, %v2974
      %v3247 = vmul.f32 %v3231, %v2975
      %v3248 = vmul.f32 %v3232, %v2976
      %v3249 = vmul.f32 %v3233, %v2977
      %v3250 = vmul.f32 %v3234, %v2978
      %v3251 = vmul.f32 %v3235, %v2979
      %v3252 = vadd.f32 %v3236, 1624.0
      %v3253 = vadd.f32 %v3237, 1624.0
      %v3254 = vadd.f32 %v3238, 1624.0
      %v3255 = vadd.f32 %v3239, 1624.0
      %v3256 = vadd.f32 %v3240, 1624.0
      %v3257 = vadd.f32 %v3241, 1624.0
      %v3258 = vadd.f32 %v3242, 1624.0
      %v3259 = vadd.f32 %v3243, 1624.0
      %v3260 = vadd.f32 %v3244, 1624.0
      %v3261 = vadd.f32 %v3245, 1624.0
      %v3262 = vadd.f32 %v3246, 1624.0
      %v3263 = vadd.f32 %v3247, 1624.0
      %v3264 = vadd.f32 %v3248, 1624.0
      %v3265 = vadd.f32 %v3249, 1624.0
      %v3266 = vadd.f32 %v3250, 1624.0
      %v3267 = vadd.f32 %v3251, 1624.0
      %v3268 = vmul.f32 %v3252, %v2964
      %v3269 = vmul.f32 %v3253, %v2965
      %v3270 = vmul.f32 %v3254, %v2966
      %v3271 = vmul.f32 %v3255, %v2967
      %v3272 = vmul.f32 %v3256, %v2968
      %v3273 = vmul.f32 %v3257, %v2969
      %v3274 = vmul.f32 %v3258, %v2970
      %v3275 = vmul.f32 %v3259, %v2971
      %v3276 = vmul.f32 %v3260, %v2972
      %v3277 = vmul.f32 %v3261, %v2973
      %v3278 = vmul.f32 %v3262, %v2974
      %v3279 = vmul.f32 %v3263, %v2975
      %v3280 = vmul.f32 %v3264, %v2976
      %v3281 = vmul.f32 %v3265, %v2977
      %v3282 = vmul.f32 %v3266, %v2978
      %v3283 = vmul.f32 %v3267, %v2979
      %v3284 = vadd.f32 %v3268, 1764.0
      %v3285 = vadd.f32 %v3269, 1764.0
      %v3286 = vadd.f32 %v3270, 1764.0
      %v3287 = vadd.f32 %v3271, 1764.0
      %v3288 = vadd.f32 %v3272, 1764.0
      %v3289 = vadd.f32 %v3273, 1764.0
      %v3290 = vadd.f32 %v3274, 1764.0
      %v3291 = vadd.f32 %v3275, 1764.0
      %v3292 = vadd.f32 %v3276, 1764.0
      %v3293 = vadd.f32 %v3277, 1764.0
      %v3294 = vadd.f32 %v3278, 1764.0
      %v3295 = vadd.f32 %v3279, 1764.0
      %v3296 = vadd.f32 %v3280, 1764.0
      %v3297 = vadd.f32 %v3281, 1764.0
      %v3298 = vadd.f32 %v3282, 1764.0
      %v3299 = vadd.f32 %v3283, 1764.0
      %v3300 = vmul.f32 %v3284, %v2964
      %v3301 = vmul.f32 %v3285, %v2965
      %v3302 = vmul.f32 %v3286, %v2966
      %v3303 = vmul.f32 %v3287, %v2967
      %v3304 = vmul.f32 %v3288, %v2968
      %v3305 = vmul.f32 %v3289, %v2969
      %v3306 = vmul.f32 %v3290, %v2970
      %v3307 = vmul.f32 %v3291, %v2971
      %v3308 = vmul.f32 %v3292, %v2972
      %v3309 = vmul.f32 %v3293, %v2973
      %v3310 = vmul.f32 %v3294, %v2974
      %v3311 = vmul.f32 %v3295, %v2975
      %v3312 = vmul.f32 %v3296, %v2976
      %v3313 = vmul.f32 %v3297, %v2977
      %v3314 = vmul.f32 %v3298, %v2978
      %v3315 = vmul.f32 %v3299, %v2979
      %v3316 = vadd.f32 %v3300, 720.0
      %v3317 = vadd.f32 %v3301, 720.0
      %v3318 = vadd.f32 %v3302, 720.0
      %v3319 = vadd.f32 %v3303, 720.0
      %v3320 = vadd.f32 %v3304, 720.0
      %v3321 = vadd.f32 %v3305, 720.0
      %v3322 = vadd.f32 %v3306, 720.0
      %v3323 = vadd.f32 %v3307, 720.0
      %v3324 = vadd.f32 %v3308, 720.0
      %v3325 = vadd.f32 %v3309, 720.0
      %v3326 = vadd.f32 %v3310, 720.0
      %v3327 = vadd.f32 %v3311, 720.0
      %v3328 = vadd.f32 %v3312, 720.0
      %v3329 = vadd.f32 %v3313, 720.0
      %v3330 = vadd.f32 %v3314, 720.0
      %v3331 = vadd.f32 %v3315, 720.0
      %v3332 = vmul.f32 %v3316, %v2964
      %v3333 = vmul.f32 %v3317, %v2965
      %v3334 = vmul.f32 %v3318, %v2966
      %v3335 = vmul.f32 %v3319, %v2967
      %v3336 = vmul.f32 %v3320, %v2968
      %v3337 = vmul.f32 %v3321, %v2969
      %v3338 = vmul.f32 %v3322, %v2970
      %v3339 = vmul.f32 %v3323, %v2971
      %v3340 = vmul.f32 %v3324, %v2972
      %v3341 = vmul.f32 %v3325, %v2973
      %v3342 = vmul.f32 %v3326, %v2974
      %v3343 = vmul.f32 %v3327, %v2975
      %v3344 = vmul.f32 %v3328, %v2976
      %v3345 = vmul.f32 %v3329, %v2977
      %v3346 = vmul.f32 %v3330, %v2978
      %v3347 = vmul.f32 %v3331, %v2979
      %v3348 = vadd.f32 %v2964, 5.5
      %v3349 = vadd.f32 %v2965, 5.5
      %v3350 = vadd.f32 %v2966, 5.5
      %v3351 = vadd.f32 %v2967, 5.5
      %v3352 = vadd.f32 %v2968, 5.5
      %v3353 = vadd.f32 %v2969, 5.5
      %v3354 = vadd.f32 %v2970, 5.5
      %v3355 = vadd.f32 %v2971, 5.5
      %v3356 = vadd.f32 %v2972, 5.5
      %v3357 = vadd.f32 %v2973, 5.5
      %v3358 = vadd.f32 %v2974, 5.5
      %v3359 = vadd.f32 %v2975, 5.5
      %v3360 = vadd.f32 %v2976, 5.5
      %v3361 = vadd.f32 %v2977, 5.5
      %v3362 = vadd.f32 %v2978, 5.5
      %v3363 = vadd.f32 %v2979, 5.5
      %v3364 = vadd.f32 %v2964, 0.5
      %v3365 = vadd.f32 %v2965, 0.5
      %v3366 = vadd.f32 %v2966, 0.5
      %v3367 = vadd.f32 %v2967, 0.5
      %v3368 = vadd.f32 %v2968, 0.5
      %v3369 = vadd.f32 %v2969, 0.5
      %v3370 = vadd.f32 %v2970, 0.5
      %v3371 = vadd.f32 %v2971, 0.5
      %v3372 = vadd.f32 %v2972, 0.5
      %v3373 = vadd.f32 %v2973, 0.5
      %v3374 = vadd.f32 %v2974, 0.5
      %v3375 = vadd.f32 %v2975, 0.5
      %v3376 = vadd.f32 %v2976, 0.5
      %v3377 = vadd.f32 %v2977, 0.5
      %v3378 = vadd.f32 %v2978, 0.5
      %v3379 = vadd.f32 %v2979, 0.5
      %v3380 = vlog2.pop %v3348
      %v3381 = vmul.f32 %v3380, 0.6931472
      %v3382 = vlog2.pop %v3349
      %v3383 = vmul.f32 %v3382, 0.6931472
      %v3384 = vlog2.pop %v3350
      %v3385 = vmul.f32 %v3384, 0.6931472
      %v3386 = vlog2.pop %v3351
      %v3387 = vmul.f32 %v3386, 0.6931472
      %v3388 = vlog2.pop %v3352
      %v3389 = vmul.f32 %v3388, 0.6931472
      %v3390 = vlog2.pop %v3353
      %v3391 = vmul.f32 %v3390, 0.6931472
      %v3392 = vlog2.pop %v3354
      %v3393 = vmul.f32 %v3392, 0.6931472
      %v3394 = vlog2.pop %v3355
      %v3395 = vmul.f32 %v3394, 0.6931472
      %v3396 = vlog2.pop %v3356
      %v3397 = vmul.f32 %v3396, 0.6931472
      %v3398 = vlog2.pop %v3357
      %v3399 = vmul.f32 %v3398, 0.6931472
      %v3400 = vlog2.pop %v3358
      %v3401 = vmul.f32 %v3400, 0.6931472
      %v3402 = vlog2.pop %v3359
      %v3403 = vmul.f32 %v3402, 0.6931472
      %v3404 = vlog2.pop %v3360
      %v3405 = vmul.f32 %v3404, 0.6931472
      %v3406 = vlog2.pop %v3361
      %v3407 = vmul.f32 %v3406, 0.6931472
      %v3408 = vlog2.pop %v3362
      %v3409 = vmul.f32 %v3408, 0.6931472
      %v3410 = vlog2.pop %v3363
      %v3411 = vmul.f32 %v3410, 0.6931472
      %v3412 = vmul.f32 %v3364, %v3381
      %v3413 = vmul.f32 %v3365, %v3383
      %v3414 = vmul.f32 %v3366, %v3385
      %v3415 = vmul.f32 %v3367, %v3387
      %v3416 = vmul.f32 %v3368, %v3389
      %v3417 = vmul.f32 %v3369, %v3391
      %v3418 = vmul.f32 %v3370, %v3393
      %v3419 = vmul.f32 %v3371, %v3395
      %v3420 = vmul.f32 %v3372, %v3397
      %v3421 = vmul.f32 %v3373, %v3399
      %v3422 = vmul.f32 %v3374, %v3401
      %v3423 = vmul.f32 %v3375, %v3403
      %v3424 = vmul.f32 %v3376, %v3405
      %v3425 = vmul.f32 %v3377, %v3407
      %v3426 = vmul.f32 %v3378, %v3409
      %v3427 = vmul.f32 %v3379, %v3411
      %v3428 = vsub.f32 %v3412, %v3348
      %v3429 = vsub.f32 %v3413, %v3349
      %v3430 = vsub.f32 %v3414, %v3350
      %v3431 = vsub.f32 %v3415, %v3351
      %v3432 = vsub.f32 %v3416, %v3352
      %v3433 = vsub.f32 %v3417, %v3353
      %v3434 = vsub.f32 %v3418, %v3354
      %v3435 = vsub.f32 %v3419, %v3355
      %v3436 = vsub.f32 %v3420, %v3356
      %v3437 = vsub.f32 %v3421, %v3357
      %v3438 = vsub.f32 %v3422, %v3358
      %v3439 = vsub.f32 %v3423, %v3359
      %v3440 = vsub.f32 %v3424, %v3360
      %v3441 = vsub.f32 %v3425, %v3361
      %v3442 = vsub.f32 %v3426, %v3362
      %v3443 = vsub.f32 %v3427, %v3363
      %v3444 = vmul.f32 %v3140, 2.5066283
      %v3445 = vmul.f32 %v3141, 2.5066283
      %v3446 = vmul.f32 %v3142, 2.5066283
      %v3447 = vmul.f32 %v3143, 2.5066283
      %v3448 = vmul.f32 %v3144, 2.5066283
      %v3449 = vmul.f32 %v3145, 2.5066283
      %v3450 = vmul.f32 %v3146, 2.5066283
      %v3451 = vmul.f32 %v3147, 2.5066283
      %v3452 = vmul.f32 %v3148, 2.5066283
      %v3453 = vmul.f32 %v3149, 2.5066283
      %v3454 = vmul.f32 %v3150, 2.5066283
      %v3455 = vmul.f32 %v3151, 2.5066283
      %v3456 = vmul.f32 %v3152, 2.5066283
      %v3457 = vmul.f32 %v3153, 2.5066283
      %v3458 = vmul.f32 %v3154, 2.5066283
      %v3459 = vmul.f32 %v3155, 2.5066283
      %v3460 = vlog2.pop %v3444
      %v3461 = vmul.f32 %v3460, 0.6931472
      %v3462 = vlog2.pop %v3445
      %v3463 = vmul.f32 %v3462, 0.6931472
      %v3464 = vlog2.pop %v3446
      %v3465 = vmul.f32 %v3464, 0.6931472
      %v3466 = vlog2.pop %v3447
      %v3467 = vmul.f32 %v3466, 0.6931472
      %v3468 = vlog2.pop %v3448
      %v3469 = vmul.f32 %v3468, 0.6931472
      %v3470 = vlog2.pop %v3449
      %v3471 = vmul.f32 %v3470, 0.6931472
      %v3472 = vlog2.pop %v3450
      %v3473 = vmul.f32 %v3472, 0.6931472
      %v3474 = vlog2.pop %v3451
      %v3475 = vmul.f32 %v3474, 0.6931472
      %v3476 = vlog2.pop %v3452
      %v3477 = vmul.f32 %v3476, 0.6931472
      %v3478 = vlog2.pop %v3453
      %v3479 = vmul.f32 %v3478, 0.6931472
      %v3480 = vlog2.pop %v3454
      %v3481 = vmul.f32 %v3480, 0.6931472
      %v3482 = vlog2.pop %v3455
      %v3483 = vmul.f32 %v3482, 0.6931472
      %v3484 = vlog2.pop %v3456
      %v3485 = vmul.f32 %v3484, 0.6931472
      %v3486 = vlog2.pop %v3457
      %v3487 = vmul.f32 %v3486, 0.6931472
      %v3488 = vlog2.pop %v3458
      %v3489 = vmul.f32 %v3488, 0.6931472
      %v3490 = vlog2.pop %v3459
      %v3491 = vmul.f32 %v3490, 0.6931472
      %v3492 = vadd.f32 %v3428, %v3461
      %v3493 = vadd.f32 %v3429, %v3463
      %v3494 = vadd.f32 %v3430, %v3465
      %v3495 = vadd.f32 %v3431, %v3467
      %v3496 = vadd.f32 %v3432, %v3469
      %v3497 = vadd.f32 %v3433, %v3471
      %v3498 = vadd.f32 %v3434, %v3473
      %v3499 = vadd.f32 %v3435, %v3475
      %v3500 = vadd.f32 %v3436, %v3477
      %v3501 = vadd.f32 %v3437, %v3479
      %v3502 = vadd.f32 %v3438, %v3481
      %v3503 = vadd.f32 %v3439, %v3483
      %v3504 = vadd.f32 %v3440, %v3485
      %v3505 = vadd.f32 %v3441, %v3487
      %v3506 = vadd.f32 %v3442, %v3489
      %v3507 = vadd.f32 %v3443, %v3491
      %v3508 = vlog2.pop %v3332
      %v3509 = vmul.f32 %v3508, 0.6931472
      %v3510 = vlog2.pop %v3333
      %v3511 = vmul.f32 %v3510, 0.6931472
      %v3512 = vlog2.pop %v3334
      %v3513 = vmul.f32 %v3512, 0.6931472
      %v3514 = vlog2.pop %v3335
      %v3515 = vmul.f32 %v3514, 0.6931472
      %v3516 = vlog2.pop %v3336
      %v3517 = vmul.f32 %v3516, 0.6931472
      %v3518 = vlog2.pop %v3337
      %v3519 = vmul.f32 %v3518, 0.6931472
      %v3520 = vlog2.pop %v3338
      %v3521 = vmul.f32 %v3520, 0.6931472
      %v3522 = vlog2.pop %v3339
      %v3523 = vmul.f32 %v3522, 0.6931472
      %v3524 = vlog2.pop %v3340
      %v3525 = vmul.f32 %v3524, 0.6931472
      %v3526 = vlog2.pop %v3341
      %v3527 = vmul.f32 %v3526, 0.6931472
      %v3528 = vlog2.pop %v3342
      %v3529 = vmul.f32 %v3528, 0.6931472
      %v3530 = vlog2.pop %v3343
      %v3531 = vmul.f32 %v3530, 0.6931472
      %v3532 = vlog2.pop %v3344
      %v3533 = vmul.f32 %v3532, 0.6931472
      %v3534 = vlog2.pop %v3345
      %v3535 = vmul.f32 %v3534, 0.6931472
      %v3536 = vlog2.pop %v3346
      %v3537 = vmul.f32 %v3536, 0.6931472
      %v3538 = vlog2.pop %v3347
      %v3539 = vmul.f32 %v3538, 0.6931472
      %v3540 = vsub.f32 %v3492, %v3509
      %v3541 = vsub.f32 %v3493, %v3511
      %v3542 = vsub.f32 %v3494, %v3513
      %v3543 = vsub.f32 %v3495, %v3515
      %v3544 = vsub.f32 %v3496, %v3517
      %v3545 = vsub.f32 %v3497, %v3519
      %v3546 = vsub.f32 %v3498, %v3521
      %v3547 = vsub.f32 %v3499, %v3523
      %v3548 = vsub.f32 %v3500, %v3525
      %v3549 = vsub.f32 %v3501, %v3527
      %v3550 = vsub.f32 %v3502, %v3529
      %v3551 = vsub.f32 %v3503, %v3531
      %v3552 = vsub.f32 %v3504, %v3533
      %v3553 = vsub.f32 %v3505, %v3535
      %v3554 = vsub.f32 %v3506, %v3537
      %v3555 = vsub.f32 %v3507, %v3539
      %v3556 = vlaneseq
      %v3557 = vshrl.u32 %v3556, 7
      %v3558 = vsub.s32 2, %v3557
      %v3559 = vrot.slane %v2783, %v3558
      %v3560 = vsub.f32 %v3540, %v3559
      %v3561 = vsub.f32 %v3541, %v3559
      %v3562 = vsub.f32 %v3542, %v3559
      %v3563 = vsub.f32 %v3543, %v3559
      %v3564 = vsub.f32 %v3544, %v3559
      %v3565 = vsub.f32 %v3545, %v3559
      %v3566 = vsub.f32 %v3546, %v3559
      %v3567 = vsub.f32 %v3547, %v3559
      %v3568 = vsub.f32 %v3548, %v3559
      %v3569 = vsub.f32 %v3549, %v3559
      %v3570 = vsub.f32 %v3550, %v3559
      %v3571 = vsub.f32 %v3551, %v3559
      %v3572 = vsub.f32 %v3552, %v3559
      %v3573 = vsub.f32 %v3553, %v3559
      %v3574 = vsub.f32 %v3554, %v3559
      %v3575 = vsub.f32 %v3555, %v3559
      %v3576 = vadd.f32 %v599, 33.458332
      %v3577 = vadd.f32 %v600, 33.458332
      %v3578 = vadd.f32 %v601, 33.458332
      %v3579 = vadd.f32 %v602, 33.458332
      %v3580 = vadd.f32 %v603, 33.458332
      %v3581 = vadd.f32 %v604, 33.458332
      %v3582 = vadd.f32 %v605, 33.458332
      %v3583 = vadd.f32 %v606, 33.458332
      %v3584 = vadd.f32 %v607, 33.458332
      %v3585 = vadd.f32 %v608, 33.458332
      %v3586 = vadd.f32 %v609, 33.458332
      %v3587 = vadd.f32 %v610, 33.458332
      %v3588 = vadd.f32 %v611, 33.458332
      %v3589 = vadd.f32 %v612, 33.458332
      %v3590 = vadd.f32 %v613, 33.458332
      %v3591 = vadd.f32 %v614, 33.458332
      %v3592 = vmul.f32 %v3576, %v599
      %v3593 = vmul.f32 %v3577, %v600
      %v3594 = vmul.f32 %v3578, %v601
      %v3595 = vmul.f32 %v3579, %v602
      %v3596 = vmul.f32 %v3580, %v603
      %v3597 = vmul.f32 %v3581, %v604
      %v3598 = vmul.f32 %v3582, %v605
      %v3599 = vmul.f32 %v3583, %v606
      %v3600 = vmul.f32 %v3584, %v607
      %v3601 = vmul.f32 %v3585, %v608
      %v3602 = vmul.f32 %v3586, %v609
      %v3603 = vmul.f32 %v3587, %v610
      %v3604 = vmul.f32 %v3588, %v611
      %v3605 = vmul.f32 %v3589, %v612
      %v3606 = vmul.f32 %v3590, %v613
      %v3607 = vmul.f32 %v3591, %v614
      %v3608 = vadd.f32 %v3592, 466.3342
      %v3609 = vadd.f32 %v3593, 466.3342
      %v3610 = vadd.f32 %v3594, 466.3342
      %v3611 = vadd.f32 %v3595, 466.3342
      %v3612 = vadd.f32 %v3596, 466.3342
      %v3613 = vadd.f32 %v3597, 466.3342
      %v3614 = vadd.f32 %v3598, 466.3342
      %v3615 = vadd.f32 %v3599, 466.3342
      %v3616 = vadd.f32 %v3600, 466.3342
      %v3617 = vadd.f32 %v3601, 466.3342
      %v3618 = vadd.f32 %v3602, 466.3342
      %v3619 = vadd.f32 %v3603, 466.3342
      %v3620 = vadd.f32 %v3604, 466.3342
      %v3621 = vadd.f32 %v3605, 466.3342
      %v3622 = vadd.f32 %v3606, 466.3342
      %v3623 = vadd.f32 %v3607, 466.3342
      %v3624 = vmul.f32 %v3608, %v599
      %v3625 = vmul.f32 %v3609, %v600
      %v3626 = vmul.f32 %v3610, %v601
      %v3627 = vmul.f32 %v3611, %v602
      %v3628 = vmul.f32 %v3612, %v603
      %v3629 = vmul.f32 %v3613, %v604
      %v3630 = vmul.f32 %v3614, %v605
      %v3631 = vmul.f32 %v3615, %v606
      %v3632 = vmul.f32 %v3616, %v607
      %v3633 = vmul.f32 %v3617, %v608
      %v3634 = vmul.f32 %v3618, %v609
      %v3635 = vmul.f32 %v3619, %v610
      %v3636 = vmul.f32 %v3620, %v611
      %v3637 = vmul.f32 %v3621, %v612
      %v3638 = vmul.f32 %v3622, %v613
      %v3639 = vmul.f32 %v3623, %v614
      %v3640 = vadd.f32 %v3624, 3465.7095
      %v3641 = vadd.f32 %v3625, 3465.7095
      %v3642 = vadd.f32 %v3626, 3465.7095
      %v3643 = vadd.f32 %v3627, 3465.7095
      %v3644 = vadd.f32 %v3628, 3465.7095
      %v3645 = vadd.f32 %v3629, 3465.7095
      %v3646 = vadd.f32 %v3630, 3465.7095
      %v3647 = vadd.f32 %v3631, 3465.7095
      %v3648 = vadd.f32 %v3632, 3465.7095
      %v3649 = vadd.f32 %v3633, 3465.7095
      %v3650 = vadd.f32 %v3634, 3465.7095
      %v3651 = vadd.f32 %v3635, 3465.7095
      %v3652 = vadd.f32 %v3636, 3465.7095
      %v3653 = vadd.f32 %v3637, 3465.7095
      %v3654 = vadd.f32 %v3638, 3465.7095
      %v3655 = vadd.f32 %v3639, 3465.7095
      %v3656 = vmul.f32 %v3640, %v599
      %v3657 = vmul.f32 %v3641, %v600
      %v3658 = vmul.f32 %v3642, %v601
      %v3659 = vmul.f32 %v3643, %v602
      %v3660 = vmul.f32 %v3644, %v603
      %v3661 = vmul.f32 %v3645, %v604
      %v3662 = vmul.f32 %v3646, %v605
      %v3663 = vmul.f32 %v3647, %v606
      %v3664 = vmul.f32 %v3648, %v607
      %v3665 = vmul.f32 %v3649, %v608
      %v3666 = vmul.f32 %v3650, %v609
      %v3667 = vmul.f32 %v3651, %v610
      %v3668 = vmul.f32 %v3652, %v611
      %v3669 = vmul.f32 %v3653, %v612
      %v3670 = vmul.f32 %v3654, %v613
      %v3671 = vmul.f32 %v3655, %v614
      %v3672 = vadd.f32 %v3656, 14484.914
      %v3673 = vadd.f32 %v3657, 14484.914
      %v3674 = vadd.f32 %v3658, 14484.914
      %v3675 = vadd.f32 %v3659, 14484.914
      %v3676 = vadd.f32 %v3660, 14484.914
      %v3677 = vadd.f32 %v3661, 14484.914
      %v3678 = vadd.f32 %v3662, 14484.914
      %v3679 = vadd.f32 %v3663, 14484.914
      %v3680 = vadd.f32 %v3664, 14484.914
      %v3681 = vadd.f32 %v3665, 14484.914
      %v3682 = vadd.f32 %v3666, 14484.914
      %v3683 = vadd.f32 %v3667, 14484.914
      %v3684 = vadd.f32 %v3668, 14484.914
      %v3685 = vadd.f32 %v3669, 14484.914
      %v3686 = vadd.f32 %v3670, 14484.914
      %v3687 = vadd.f32 %v3671, 14484.914
      %v3688 = vmul.f32 %v3672, %v599
      %v3689 = vmul.f32 %v3673, %v600
      %v3690 = vmul.f32 %v3674, %v601
      %v3691 = vmul.f32 %v3675, %v602
      %v3692 = vmul.f32 %v3676, %v603
      %v3693 = vmul.f32 %v3677, %v604
      %v3694 = vmul.f32 %v3678, %v605
      %v3695 = vmul.f32 %v3679, %v606
      %v3696 = vmul.f32 %v3680, %v607
      %v3697 = vmul.f32 %v3681, %v608
      %v3698 = vmul.f32 %v3682, %v609
      %v3699 = vmul.f32 %v3683, %v610
      %v3700 = vmul.f32 %v3684, %v611
      %v3701 = vmul.f32 %v3685, %v612
      %v3702 = vmul.f32 %v3686, %v613
      %v3703 = vmul.f32 %v3687, %v614
      %v3704 = vadd.f32 %v3688, 32281.064
      %v3705 = vadd.f32 %v3689, 32281.064
      %v3706 = vadd.f32 %v3690, 32281.064
      %v3707 = vadd.f32 %v3691, 32281.064
      %v3708 = vadd.f32 %v3692, 32281.064
      %v3709 = vadd.f32 %v3693, 32281.064
      %v3710 = vadd.f32 %v3694, 32281.064
      %v3711 = vadd.f32 %v3695, 32281.064
      %v3712 = vadd.f32 %v3696, 32281.064
      %v3713 = vadd.f32 %v3697, 32281.064
      %v3714 = vadd.f32 %v3698, 32281.064
      %v3715 = vadd.f32 %v3699, 32281.064
      %v3716 = vadd.f32 %v3700, 32281.064
      %v3717 = vadd.f32 %v3701, 32281.064
      %v3718 = vadd.f32 %v3702, 32281.064
      %v3719 = vadd.f32 %v3703, 32281.064
      %v3720 = vmul.f32 %v3704, %v599
      %v3721 = vmul.f32 %v3705, %v600
      %v3722 = vmul.f32 %v3706, %v601
      %v3723 = vmul.f32 %v3707, %v602
      %v3724 = vmul.f32 %v3708, %v603
      %v3725 = vmul.f32 %v3709, %v604
      %v3726 = vmul.f32 %v3710, %v605
      %v3727 = vmul.f32 %v3711, %v606
      %v3728 = vmul.f32 %v3712, %v607
      %v3729 = vmul.f32 %v3713, %v608
      %v3730 = vmul.f32 %v3714, %v609
      %v3731 = vmul.f32 %v3715, %v610
      %v3732 = vmul.f32 %v3716, %v611
      %v3733 = vmul.f32 %v3717, %v612
      %v3734 = vmul.f32 %v3718, %v613
      %v3735 = vmul.f32 %v3719, %v614
      %v3736 = vadd.f32 %v3720, 29969.594
      %v3737 = vadd.f32 %v3721, 29969.594
      %v3738 = vadd.f32 %v3722, 29969.594
      %v3739 = vadd.f32 %v3723, 29969.594
      %v3740 = vadd.f32 %v3724, 29969.594
      %v3741 = vadd.f32 %v3725, 29969.594
      %v3742 = vadd.f32 %v3726, 29969.594
      %v3743 = vadd.f32 %v3727, 29969.594
      %v3744 = vadd.f32 %v3728, 29969.594
      %v3745 = vadd.f32 %v3729, 29969.594
      %v3746 = vadd.f32 %v3730, 29969.594
      %v3747 = vadd.f32 %v3731, 29969.594
      %v3748 = vadd.f32 %v3732, 29969.594
      %v3749 = vadd.f32 %v3733, 29969.594
      %v3750 = vadd.f32 %v3734, 29969.594
      %v3751 = vadd.f32 %v3735, 29969.594
      %v3752 = vadd.f32 %v599, 21.0
      %v3753 = vadd.f32 %v600, 21.0
      %v3754 = vadd.f32 %v601, 21.0
      %v3755 = vadd.f32 %v602, 21.0
      %v3756 = vadd.f32 %v603, 21.0
      %v3757 = vadd.f32 %v604, 21.0
      %v3758 = vadd.f32 %v605, 21.0
      %v3759 = vadd.f32 %v606, 21.0
      %v3760 = vadd.f32 %v607, 21.0
      %v3761 = vadd.f32 %v608, 21.0
      %v3762 = vadd.f32 %v609, 21.0
      %v3763 = vadd.f32 %v610, 21.0
      %v3764 = vadd.f32 %v611, 21.0
      %v3765 = vadd.f32 %v612, 21.0
      %v3766 = vadd.f32 %v613, 21.0
      %v3767 = vadd.f32 %v614, 21.0
      %v3768 = vmul.f32 %v3752, %v599
      %v3769 = vmul.f32 %v3753, %v600
      %v3770 = vmul.f32 %v3754, %v601
      %v3771 = vmul.f32 %v3755, %v602
      %v3772 = vmul.f32 %v3756, %v603
      %v3773 = vmul.f32 %v3757, %v604
      %v3774 = vmul.f32 %v3758, %v605
      %v3775 = vmul.f32 %v3759, %v606
      %v3776 = vmul.f32 %v3760, %v607
      %v3777 = vmul.f32 %v3761, %v608
      %v3778 = vmul.f32 %v3762, %v609
      %v3779 = vmul.f32 %v3763, %v610
      %v3780 = vmul.f32 %v3764, %v611
      %v3781 = vmul.f32 %v3765, %v612
      %v3782 = vmul.f32 %v3766, %v613
      %v3783 = vmul.f32 %v3767, %v614
      %v3784 = vadd.f32 %v3768, 175.0
      %v3785 = vadd.f32 %v3769, 175.0
      %v3786 = vadd.f32 %v3770, 175.0
      %v3787 = vadd.f32 %v3771, 175.0
      %v3788 = vadd.f32 %v3772, 175.0
      %v3789 = vadd.f32 %v3773, 175.0
      %v3790 = vadd.f32 %v3774, 175.0
      %v3791 = vadd.f32 %v3775, 175.0
      %v3792 = vadd.f32 %v3776, 175.0
      %v3793 = vadd.f32 %v3777, 175.0
      %v3794 = vadd.f32 %v3778, 175.0
      %v3795 = vadd.f32 %v3779, 175.0
      %v3796 = vadd.f32 %v3780, 175.0
      %v3797 = vadd.f32 %v3781, 175.0
      %v3798 = vadd.f32 %v3782, 175.0
      %v3799 = vadd.f32 %v3783, 175.0
      %v3800 = vmul.f32 %v3784, %v599
      %v3801 = vmul.f32 %v3785, %v600
      %v3802 = vmul.f32 %v3786, %v601
      %v3803 = vmul.f32 %v3787, %v602
      %v3804 = vmul.f32 %v3788, %v603
      %v3805 = vmul.f32 %v3789, %v604
      %v3806 = vmul.f32 %v3790, %v605
      %v3807 = vmul.f32 %v3791, %v606
      %v3808 = vmul.f32 %v3792, %v607
      %v3809 = vmul.f32 %v3793, %v608
      %v3810 = vmul.f32 %v3794, %v609
      %v3811 = vmul.f32 %v3795, %v610
      %v3812 = vmul.f32 %v3796, %v611
      %v3813 = vmul.f32 %v3797, %v612
      %v3814 = vmul.f32 %v3798, %v613
      %v3815 = vmul.f32 %v3799, %v614
      %v3816 = vadd.f32 %v3800, 735.0
      %v3817 = vadd.f32 %v3801, 735.0
      %v3818 = vadd.f32 %v3802, 735.0
      %v3819 = vadd.f32 %v3803, 735.0
      %v3820 = vadd.f32 %v3804, 735.0
      %v3821 = vadd.f32 %v3805, 735.0
      %v3822 = vadd.f32 %v3806, 735.0
      %v3823 = vadd.f32 %v3807, 735.0
      %v3824 = vadd.f32 %v3808, 735.0
      %v3825 = vadd.f32 %v3809, 735.0
      %v3826 = vadd.f32 %v3810, 735.0
      %v3827 = vadd.f32 %v3811, 735.0
      %v3828 = vadd.f32 %v3812, 735.0
      %v3829 = vadd.f32 %v3813, 735.0
      %v3830 = vadd.f32 %v3814, 735.0
      %v3831 = vadd.f32 %v3815, 735.0
      %v3832 = vmul.f32 %v3816, %v599
      %v3833 = vmul.f32 %v3817, %v600
      %v3834 = vmul.f32 %v3818, %v601
      %v3835 = vmul.f32 %v3819, %v602
      %v3836 = vmul.f32 %v3820, %v603
      %v3837 = vmul.f32 %v3821, %v604
      %v3838 = vmul.f32 %v3822, %v605
      %v3839 = vmul.f32 %v3823, %v606
      %v3840 = vmul.f32 %v3824, %v607
      %v3841 = vmul.f32 %v3825, %v608
      %v3842 = vmul.f32 %v3826, %v609
      %v3843 = vmul.f32 %v3827, %v610
      %v3844 = vmul.f32 %v3828, %v611
      %v3845 = vmul.f32 %v3829, %v612
      %v3846 = vmul.f32 %v3830, %v613
      %v3847 = vmul.f32 %v3831, %v614
      %v3848 = vadd.f32 %v3832, 1624.0
      %v3849 = vadd.f32 %v3833, 1624.0
      %v3850 = vadd.f32 %v3834, 1624.0
      %v3851 = vadd.f32 %v3835, 1624.0
      %v3852 = vadd.f32 %v3836, 1624.0
      %v3853 = vadd.f32 %v3837, 1624.0
      %v3854 = vadd.f32 %v3838, 1624.0
      %v3855 = vadd.f32 %v3839, 1624.0
      %v3856 = vadd.f32 %v3840, 1624.0
      %v3857 = vadd.f32 %v3841, 1624.0
      %v3858 = vadd.f32 %v3842, 1624.0
      %v3859 = vadd.f32 %v3843, 1624.0
      %v3860 = vadd.f32 %v3844, 1624.0
      %v3861 = vadd.f32 %v3845, 1624.0
      %v3862 = vadd.f32 %v3846, 1624.0
      %v3863 = vadd.f32 %v3847, 1624.0
      %v3864 = vmul.f32 %v3848, %v599
      %v3865 = vmul.f32 %v3849, %v600
      %v3866 = vmul.f32 %v3850, %v601
      %v3867 = vmul.f32 %v3851, %v602
      %v3868 = vmul.f32 %v3852, %v603
      %v3869 = vmul.f32 %v3853, %v604
      %v3870 = vmul.f32 %v3854, %v605
      %v3871 = vmul.f32 %v3855, %v606
      %v3872 = vmul.f32 %v3856, %v607
      %v3873 = vmul.f32 %v3857, %v608
      %v3874 = vmul.f32 %v3858, %v609
      %v3875 = vmul.f32 %v3859, %v610
      %v3876 = vmul.f32 %v3860, %v611
      %v3877 = vmul.f32 %v3861, %v612
      %v3878 = vmul.f32 %v3862, %v613
      %v3879 = vmul.f32 %v3863, %v614
      %v3880 = vadd.f32 %v3864, 1764.0
      %v3881 = vadd.f32 %v3865, 1764.0
      %v3882 = vadd.f32 %v3866, 1764.0
      %v3883 = vadd.f32 %v3867, 1764.0
      %v3884 = vadd.f32 %v3868, 1764.0
      %v3885 = vadd.f32 %v3869, 1764.0
      %v3886 = vadd.f32 %v3870, 1764.0
      %v3887 = vadd.f32 %v3871, 1764.0
      %v3888 = vadd.f32 %v3872, 1764.0
      %v3889 = vadd.f32 %v3873, 1764.0
      %v3890 = vadd.f32 %v3874, 1764.0
      %v3891 = vadd.f32 %v3875, 1764.0
      %v3892 = vadd.f32 %v3876, 1764.0
      %v3893 = vadd.f32 %v3877, 1764.0
      %v3894 = vadd.f32 %v3878, 1764.0
      %v3895 = vadd.f32 %v3879, 1764.0
      %v3896 = vmul.f32 %v3880, %v599
      %v3897 = vmul.f32 %v3881, %v600
      %v3898 = vmul.f32 %v3882, %v601
      %v3899 = vmul.f32 %v3883, %v602
      %v3900 = vmul.f32 %v3884, %v603
      %v3901 = vmul.f32 %v3885, %v604
      %v3902 = vmul.f32 %v3886, %v605
      %v3903 = vmul.f32 %v3887, %v606
      %v3904 = vmul.f32 %v3888, %v607
      %v3905 = vmul.f32 %v3889, %v608
      %v3906 = vmul.f32 %v3890, %v609
      %v3907 = vmul.f32 %v3891, %v610
      %v3908 = vmul.f32 %v3892, %v611
      %v3909 = vmul.f32 %v3893, %v612
      %v3910 = vmul.f32 %v3894, %v613
      %v3911 = vmul.f32 %v3895, %v614
      %v3912 = vadd.f32 %v3896, 720.0
      %v3913 = vadd.f32 %v3897, 720.0
      %v3914 = vadd.f32 %v3898, 720.0
      %v3915 = vadd.f32 %v3899, 720.0
      %v3916 = vadd.f32 %v3900, 720.0
      %v3917 = vadd.f32 %v3901, 720.0
      %v3918 = vadd.f32 %v3902, 720.0
      %v3919 = vadd.f32 %v3903, 720.0
      %v3920 = vadd.f32 %v3904, 720.0
      %v3921 = vadd.f32 %v3905, 720.0
      %v3922 = vadd.f32 %v3906, 720.0
      %v3923 = vadd.f32 %v3907, 720.0
      %v3924 = vadd.f32 %v3908, 720.0
      %v3925 = vadd.f32 %v3909, 720.0
      %v3926 = vadd.f32 %v3910, 720.0
      %v3927 = vadd.f32 %v3911, 720.0
      %v3928 = vmul.f32 %v3912, %v599
      %v3929 = vmul.f32 %v3913, %v600
      %v3930 = vmul.f32 %v3914, %v601
      %v3931 = vmul.f32 %v3915, %v602
      %v3932 = vmul.f32 %v3916, %v603
      %v3933 = vmul.f32 %v3917, %v604
      %v3934 = vmul.f32 %v3918, %v605
      %v3935 = vmul.f32 %v3919, %v606
      %v3936 = vmul.f32 %v3920, %v607
      %v3937 = vmul.f32 %v3921, %v608
      %v3938 = vmul.f32 %v3922, %v609
      %v3939 = vmul.f32 %v3923, %v610
      %v3940 = vmul.f32 %v3924, %v611
      %v3941 = vmul.f32 %v3925, %v612
      %v3942 = vmul.f32 %v3926, %v613
      %v3943 = vmul.f32 %v3927, %v614
      %v3944 = vadd.f32 %v599, 5.5
      %v3945 = vadd.f32 %v600, 5.5
      %v3946 = vadd.f32 %v601, 5.5
      %v3947 = vadd.f32 %v602, 5.5
      %v3948 = vadd.f32 %v603, 5.5
      %v3949 = vadd.f32 %v604, 5.5
      %v3950 = vadd.f32 %v605, 5.5
      %v3951 = vadd.f32 %v606, 5.5
      %v3952 = vadd.f32 %v607, 5.5
      %v3953 = vadd.f32 %v608, 5.5
      %v3954 = vadd.f32 %v609, 5.5
      %v3955 = vadd.f32 %v610, 5.5
      %v3956 = vadd.f32 %v611, 5.5
      %v3957 = vadd.f32 %v612, 5.5
      %v3958 = vadd.f32 %v613, 5.5
      %v3959 = vadd.f32 %v614, 5.5
      %v3960 = vadd.f32 %v599, 0.5
      %v3961 = vadd.f32 %v600, 0.5
      %v3962 = vadd.f32 %v601, 0.5
      %v3963 = vadd.f32 %v602, 0.5
      %v3964 = vadd.f32 %v603, 0.5
      %v3965 = vadd.f32 %v604, 0.5
      %v3966 = vadd.f32 %v605, 0.5
      %v3967 = vadd.f32 %v606, 0.5
      %v3968 = vadd.f32 %v607, 0.5
      %v3969 = vadd.f32 %v608, 0.5
      %v3970 = vadd.f32 %v609, 0.5
      %v3971 = vadd.f32 %v610, 0.5
      %v3972 = vadd.f32 %v611, 0.5
      %v3973 = vadd.f32 %v612, 0.5
      %v3974 = vadd.f32 %v613, 0.5
      %v3975 = vadd.f32 %v614, 0.5
      %v3976 = vlog2.pop %v3944
      %v3977 = vmul.f32 %v3976, 0.6931472
      %v3978 = vlog2.pop %v3945
      %v3979 = vmul.f32 %v3978, 0.6931472
      %v3980 = vlog2.pop %v3946
      %v3981 = vmul.f32 %v3980, 0.6931472
      %v3982 = vlog2.pop %v3947
      %v3983 = vmul.f32 %v3982, 0.6931472
      %v3984 = vlog2.pop %v3948
      %v3985 = vmul.f32 %v3984, 0.6931472
      %v3986 = vlog2.pop %v3949
      %v3987 = vmul.f32 %v3986, 0.6931472
      %v3988 = vlog2.pop %v3950
      %v3989 = vmul.f32 %v3988, 0.6931472
      %v3990 = vlog2.pop %v3951
      %v3991 = vmul.f32 %v3990, 0.6931472
      %v3992 = vlog2.pop %v3952
      %v3993 = vmul.f32 %v3992, 0.6931472
      %v3994 = vlog2.pop %v3953
      %v3995 = vmul.f32 %v3994, 0.6931472
      %v3996 = vlog2.pop %v3954
      %v3997 = vmul.f32 %v3996, 0.6931472
      %v3998 = vlog2.pop %v3955
      %v3999 = vmul.f32 %v3998, 0.6931472
      %v4000 = vlog2.pop %v3956
      %v4001 = vmul.f32 %v4000, 0.6931472
      %v4002 = vlog2.pop %v3957
      %v4003 = vmul.f32 %v4002, 0.6931472
      %v4004 = vlog2.pop %v3958
      %v4005 = vmul.f32 %v4004, 0.6931472
      %v4006 = vlog2.pop %v3959
      %v4007 = vmul.f32 %v4006, 0.6931472
      %v4008 = vmul.f32 %v3960, %v3977
      %v4009 = vmul.f32 %v3961, %v3979
      %v4010 = vmul.f32 %v3962, %v3981
      %v4011 = vmul.f32 %v3963, %v3983
      %v4012 = vmul.f32 %v3964, %v3985
      %v4013 = vmul.f32 %v3965, %v3987
      %v4014 = vmul.f32 %v3966, %v3989
      %v4015 = vmul.f32 %v3967, %v3991
      %v4016 = vmul.f32 %v3968, %v3993
      %v4017 = vmul.f32 %v3969, %v3995
      %v4018 = vmul.f32 %v3970, %v3997
      %v4019 = vmul.f32 %v3971, %v3999
      %v4020 = vmul.f32 %v3972, %v4001
      %v4021 = vmul.f32 %v3973, %v4003
      %v4022 = vmul.f32 %v3974, %v4005
      %v4023 = vmul.f32 %v3975, %v4007
      %v4024 = vsub.f32 %v4008, %v3944
      %v4025 = vsub.f32 %v4009, %v3945
      %v4026 = vsub.f32 %v4010, %v3946
      %v4027 = vsub.f32 %v4011, %v3947
      %v4028 = vsub.f32 %v4012, %v3948
      %v4029 = vsub.f32 %v4013, %v3949
      %v4030 = vsub.f32 %v4014, %v3950
      %v4031 = vsub.f32 %v4015, %v3951
      %v4032 = vsub.f32 %v4016, %v3952
      %v4033 = vsub.f32 %v4017, %v3953
      %v4034 = vsub.f32 %v4018, %v3954
      %v4035 = vsub.f32 %v4019, %v3955
      %v4036 = vsub.f32 %v4020, %v3956
      %v4037 = vsub.f32 %v4021, %v3957
      %v4038 = vsub.f32 %v4022, %v3958
      %v4039 = vsub.f32 %v4023, %v3959
      %v4040 = vmul.f32 %v3736, 2.5066283
      %v4041 = vmul.f32 %v3737, 2.5066283
      %v4042 = vmul.f32 %v3738, 2.5066283
      %v4043 = vmul.f32 %v3739, 2.5066283
      %v4044 = vmul.f32 %v3740, 2.5066283
      %v4045 = vmul.f32 %v3741, 2.5066283
      %v4046 = vmul.f32 %v3742, 2.5066283
      %v4047 = vmul.f32 %v3743, 2.5066283
      %v4048 = vmul.f32 %v3744, 2.5066283
      %v4049 = vmul.f32 %v3745, 2.5066283
      %v4050 = vmul.f32 %v3746, 2.5066283
      %v4051 = vmul.f32 %v3747, 2.5066283
      %v4052 = vmul.f32 %v3748, 2.5066283
      %v4053 = vmul.f32 %v3749, 2.5066283
      %v4054 = vmul.f32 %v3750, 2.5066283
      %v4055 = vmul.f32 %v3751, 2.5066283
      %v4056 = vlog2.pop %v4040
      %v4057 = vmul.f32 %v4056, 0.6931472
      %v4058 = vlog2.pop %v4041
      %v4059 = vmul.f32 %v4058, 0.6931472
      %v4060 = vlog2.pop %v4042
      %v4061 = vmul.f32 %v4060, 0.6931472
      %v4062 = vlog2.pop %v4043
      %v4063 = vmul.f32 %v4062, 0.6931472
      %v4064 = vlog2.pop %v4044
      %v4065 = vmul.f32 %v4064, 0.6931472
      %v4066 = vlog2.pop %v4045
      %v4067 = vmul.f32 %v4066, 0.6931472
      %v4068 = vlog2.pop %v4046
      %v4069 = vmul.f32 %v4068, 0.6931472
      %v4070 = vlog2.pop %v4047
      %v4071 = vmul.f32 %v4070, 0.6931472
      %v4072 = vlog2.pop %v4048
      %v4073 = vmul.f32 %v4072, 0.6931472
      %v4074 = vlog2.pop %v4049
      %v4075 = vmul.f32 %v4074, 0.6931472
      %v4076 = vlog2.pop %v4050
      %v4077 = vmul.f32 %v4076, 0.6931472
      %v4078 = vlog2.pop %v4051
      %v4079 = vmul.f32 %v4078, 0.6931472
      %v4080 = vlog2.pop %v4052
      %v4081 = vmul.f32 %v4080, 0.6931472
      %v4082 = vlog2.pop %v4053
      %v4083 = vmul.f32 %v4082, 0.6931472
      %v4084 = vlog2.pop %v4054
      %v4085 = vmul.f32 %v4084, 0.6931472
      %v4086 = vlog2.pop %v4055
      %v4087 = vmul.f32 %v4086, 0.6931472
      %v4088 = vadd.f32 %v4024, %v4057
      %v4089 = vadd.f32 %v4025, %v4059
      %v4090 = vadd.f32 %v4026, %v4061
      %v4091 = vadd.f32 %v4027, %v4063
      %v4092 = vadd.f32 %v4028, %v4065
      %v4093 = vadd.f32 %v4029, %v4067
      %v4094 = vadd.f32 %v4030, %v4069
      %v4095 = vadd.f32 %v4031, %v4071
      %v4096 = vadd.f32 %v4032, %v4073
      %v4097 = vadd.f32 %v4033, %v4075
      %v4098 = vadd.f32 %v4034, %v4077
      %v4099 = vadd.f32 %v4035, %v4079
      %v4100 = vadd.f32 %v4036, %v4081
      %v4101 = vadd.f32 %v4037, %v4083
      %v4102 = vadd.f32 %v4038, %v4085
      %v4103 = vadd.f32 %v4039, %v4087
      %v4104 = vlog2.pop %v3928
      %v4105 = vmul.f32 %v4104, 0.6931472
      %v4106 = vlog2.pop %v3929
      %v4107 = vmul.f32 %v4106, 0.6931472
      %v4108 = vlog2.pop %v3930
      %v4109 = vmul.f32 %v4108, 0.6931472
      %v4110 = vlog2.pop %v3931
      %v4111 = vmul.f32 %v4110, 0.6931472
      %v4112 = vlog2.pop %v3932
      %v4113 = vmul.f32 %v4112, 0.6931472
      %v4114 = vlog2.pop %v3933
      %v4115 = vmul.f32 %v4114, 0.6931472
      %v4116 = vlog2.pop %v3934
      %v4117 = vmul.f32 %v4116, 0.6931472
      %v4118 = vlog2.pop %v3935
      %v4119 = vmul.f32 %v4118, 0.6931472
      %v4120 = vlog2.pop %v3936
      %v4121 = vmul.f32 %v4120, 0.6931472
      %v4122 = vlog2.pop %v3937
      %v4123 = vmul.f32 %v4122, 0.6931472
      %v4124 = vlog2.pop %v3938
      %v4125 = vmul.f32 %v4124, 0.6931472
      %v4126 = vlog2.pop %v3939
      %v4127 = vmul.f32 %v4126, 0.6931472
      %v4128 = vlog2.pop %v3940
      %v4129 = vmul.f32 %v4128, 0.6931472
      %v4130 = vlog2.pop %v3941
      %v4131 = vmul.f32 %v4130, 0.6931472
      %v4132 = vlog2.pop %v3942
      %v4133 = vmul.f32 %v4132, 0.6931472
      %v4134 = vlog2.pop %v3943
      %v4135 = vmul.f32 %v4134, 0.6931472
      %v4136 = vsub.f32 %v4088, %v4105
      %v4137 = vsub.f32 %v4089, %v4107
      %v4138 = vsub.f32 %v4090, %v4109
      %v4139 = vsub.f32 %v4091, %v4111
      %v4140 = vsub.f32 %v4092, %v4113
      %v4141 = vsub.f32 %v4093, %v4115
      %v4142 = vsub.f32 %v4094, %v4117
      %v4143 = vsub.f32 %v4095, %v4119
      %v4144 = vsub.f32 %v4096, %v4121
      %v4145 = vsub.f32 %v4097, %v4123
      %v4146 = vsub.f32 %v4098, %v4125
      %v4147 = vsub.f32 %v4099, %v4127
      %v4148 = vsub.f32 %v4100, %v4129
      %v4149 = vsub.f32 %v4101, %v4131
      %v4150 = vsub.f32 %v4102, %v4133
      %v4151 = vsub.f32 %v4103, %v4135
      %v4152 = vsub.f32 %v3560, %v4136
      %v4153 = vsub.f32 %v3561, %v4137
      %v4154 = vsub.f32 %v3562, %v4138
      %v4155 = vsub.f32 %v3563, %v4139
      %v4156 = vsub.f32 %v3564, %v4140
      %v4157 = vsub.f32 %v3565, %v4141
      %v4158 = vsub.f32 %v3566, %v4142
      %v4159 = vsub.f32 %v3567, %v4143
      %v4160 = vsub.f32 %v3568, %v4144
      %v4161 = vsub.f32 %v3569, %v4145
      %v4162 = vsub.f32 %v3570, %v4146
      %v4163 = vsub.f32 %v3571, %v4147
      %v4164 = vsub.f32 %v3572, %v4148
      %v4165 = vsub.f32 %v3573, %v4149
      %v4166 = vsub.f32 %v3574, %v4150
      %v4167 = vsub.f32 %v3575, %v4151
      %v4168 = vlaneseq
      %v4169 = vshrl.u32 %v4168, 7
      %v4170 = vsub.s32 0, %v4169
      %v4171 = vrot.slane %v2783, %v4170
      %v4172 = vsub.f32 %v4171, %v2821
      %v4173 = vsub.f32 %v4171, %v2823
      %v4174 = vsub.f32 %v4171, %v2825
      %v4175 = vsub.f32 %v4171, %v2827
      %v4176 = vsub.f32 %v4171, %v2829
      %v4177 = vsub.f32 %v4171, %v2831
      %v4178 = vsub.f32 %v4171, %v2833
      %v4179 = vsub.f32 %v4171, %v2835
      %v4180 = vsub.f32 %v4171, %v2837
      %v4181 = vsub.f32 %v4171, %v2839
      %v4182 = vsub.f32 %v4171, %v2841
      %v4183 = vsub.f32 %v4171, %v2843
      %v4184 = vsub.f32 %v4171, %v2845
      %v4185 = vsub.f32 %v4171, %v2847
      %v4186 = vsub.f32 %v4171, %v2849
      %v4187 = vsub.f32 %v4171, %v2851
      %v4188 = vmul.f32 %v2787, %v4172
      %v4189 = vmul.f32 %v2787, %v4173
      %v4190 = vmul.f32 %v2787, %v4174
      %v4191 = vmul.f32 %v2787, %v4175
      %v4192 = vmul.f32 %v2787, %v4176
      %v4193 = vmul.f32 %v2787, %v4177
      %v4194 = vmul.f32 %v2787, %v4178
      %v4195 = vmul.f32 %v2787, %v4179
      %v4196 = vmul.f32 %v2787, %v4180
      %v4197 = vmul.f32 %v2787, %v4181
      %v4198 = vmul.f32 %v2787, %v4182
      %v4199 = vmul.f32 %v2787, %v4183
      %v4200 = vmul.f32 %v2787, %v4184
      %v4201 = vmul.f32 %v2787, %v4185
      %v4202 = vmul.f32 %v2787, %v4186
      %v4203 = vmul.f32 %v2787, %v4187
      %v4204 = vsub.f32 %v2607, %v2821
      %v4205 = vsub.f32 %v2608, %v2823
      %v4206 = vsub.f32 %v2609, %v2825
      %v4207 = vsub.f32 %v2610, %v2827
      %v4208 = vsub.f32 %v2611, %v2829
      %v4209 = vsub.f32 %v2612, %v2831
      %v4210 = vsub.f32 %v2613, %v2833
      %v4211 = vsub.f32 %v2614, %v2835
      %v4212 = vsub.f32 %v2615, %v2837
      %v4213 = vsub.f32 %v2616, %v2839
      %v4214 = vsub.f32 %v2617, %v2841
      %v4215 = vsub.f32 %v2618, %v2843
      %v4216 = vsub.f32 %v2619, %v2845
      %v4217 = vsub.f32 %v2620, %v2847
      %v4218 = vsub.f32 %v2621, %v2849
      %v4219 = vsub.f32 %v2622, %v2851
      %v4220 = vmul.f32 %v583, %v4204
      %v4221 = vmul.f32 %v584, %v4205
      %v4222 = vmul.f32 %v585, %v4206
      %v4223 = vmul.f32 %v586, %v4207
      %v4224 = vmul.f32 %v587, %v4208
      %v4225 = vmul.f32 %v588, %v4209
      %v4226 = vmul.f32 %v589, %v4210
      %v4227 = vmul.f32 %v590, %v4211
      %v4228 = vmul.f32 %v591, %v4212
      %v4229 = vmul.f32 %v592, %v4213
      %v4230 = vmul.f32 %v593, %v4214
      %v4231 = vmul.f32 %v594, %v4215
      %v4232 = vmul.f32 %v595, %v4216
      %v4233 = vmul.f32 %v596, %v4217
      %v4234 = vmul.f32 %v597, %v4218
      %v4235 = vmul.f32 %v598, %v4219
      %v4236 = vadd.f32 %v4188, %v4220
      %v4237 = vadd.f32 %v4189, %v4221
      %v4238 = vadd.f32 %v4190, %v4222
      %v4239 = vadd.f32 %v4191, %v4223
      %v4240 = vadd.f32 %v4192, %v4224
      %v4241 = vadd.f32 %v4193, %v4225
      %v4242 = vadd.f32 %v4194, %v4226
      %v4243 = vadd.f32 %v4195, %v4227
      %v4244 = vadd.f32 %v4196, %v4228
      %v4245 = vadd.f32 %v4197, %v4229
      %v4246 = vadd.f32 %v4198, %v4230
      %v4247 = vadd.f32 %v4199, %v4231
      %v4248 = vadd.f32 %v4200, %v4232
      %v4249 = vadd.f32 %v4201, %v4233
      %v4250 = vadd.f32 %v4202, %v4234
      %v4251 = vadd.f32 %v4203, %v4235
      %v4252 = vsub.f32 %v4171, %v2885
      %v4253 = vsub.f32 %v4171, %v2887
      %v4254 = vsub.f32 %v4171, %v2889
      %v4255 = vsub.f32 %v4171, %v2891
      %v4256 = vsub.f32 %v4171, %v2893
      %v4257 = vsub.f32 %v4171, %v2895
      %v4258 = vsub.f32 %v4171, %v2897
      %v4259 = vsub.f32 %v4171, %v2899
      %v4260 = vsub.f32 %v4171, %v2901
      %v4261 = vsub.f32 %v4171, %v2903
      %v4262 = vsub.f32 %v4171, %v2905
      %v4263 = vsub.f32 %v4171, %v2907
      %v4264 = vsub.f32 %v4171, %v2909
      %v4265 = vsub.f32 %v4171, %v2911
      %v4266 = vsub.f32 %v4171, %v2913
      %v4267 = vsub.f32 %v4171, %v2915
      %v4268 = vmul.f32 %v2787, %v4252
      %v4269 = vmul.f32 %v2787, %v4253
      %v4270 = vmul.f32 %v2787, %v4254
      %v4271 = vmul.f32 %v2787, %v4255
      %v4272 = vmul.f32 %v2787, %v4256
      %v4273 = vmul.f32 %v2787, %v4257
      %v4274 = vmul.f32 %v2787, %v4258
      %v4275 = vmul.f32 %v2787, %v4259
      %v4276 = vmul.f32 %v2787, %v4260
      %v4277 = vmul.f32 %v2787, %v4261
      %v4278 = vmul.f32 %v2787, %v4262
      %v4279 = vmul.f32 %v2787, %v4263
      %v4280 = vmul.f32 %v2787, %v4264
      %v4281 = vmul.f32 %v2787, %v4265
      %v4282 = vmul.f32 %v2787, %v4266
      %v4283 = vmul.f32 %v2787, %v4267
      %v4284 = vsub.f32 %v2933, %v2885
      %v4285 = vsub.f32 %v2935, %v2887
      %v4286 = vsub.f32 %v2937, %v2889
      %v4287 = vsub.f32 %v2939, %v2891
      %v4288 = vsub.f32 %v2941, %v2893
      %v4289 = vsub.f32 %v2943, %v2895
      %v4290 = vsub.f32 %v2945, %v2897
      %v4291 = vsub.f32 %v2947, %v2899
      %v4292 = vsub.f32 %v2949, %v2901
      %v4293 = vsub.f32 %v2951, %v2903
      %v4294 = vsub.f32 %v2953, %v2905
      %v4295 = vsub.f32 %v2955, %v2907
      %v4296 = vsub.f32 %v2957, %v2909
      %v4297 = vsub.f32 %v2959, %v2911
      %v4298 = vsub.f32 %v2961, %v2913
      %v4299 = vsub.f32 %v2963, %v2915
      %v4300 = vmul.f32 %v583, %v4284
      %v4301 = vmul.f32 %v584, %v4285
      %v4302 = vmul.f32 %v585, %v4286
      %v4303 = vmul.f32 %v586, %v4287
      %v4304 = vmul.f32 %v587, %v4288
      %v4305 = vmul.f32 %v588, %v4289
      %v4306 = vmul.f32 %v589, %v4290
      %v4307 = vmul.f32 %v590, %v4291
      %v4308 = vmul.f32 %v591, %v4292
      %v4309 = vmul.f32 %v592, %v4293
      %v4310 = vmul.f32 %v593, %v4294
      %v4311 = vmul.f32 %v594, %v4295
      %v4312 = vmul.f32 %v595, %v4296
      %v4313 = vmul.f32 %v596, %v4297
      %v4314 = vmul.f32 %v597, %v4298
      %v4315 = vmul.f32 %v598, %v4299
      %v4316 = vadd.f32 %v4268, %v4300
      %v4317 = vadd.f32 %v4269, %v4301
      %v4318 = vadd.f32 %v4270, %v4302
      %v4319 = vadd.f32 %v4271, %v4303
      %v4320 = vadd.f32 %v4272, %v4304
      %v4321 = vadd.f32 %v4273, %v4305
      %v4322 = vadd.f32 %v4274, %v4306
      %v4323 = vadd.f32 %v4275, %v4307
      %v4324 = vadd.f32 %v4276, %v4308
      %v4325 = vadd.f32 %v4277, %v4309
      %v4326 = vadd.f32 %v4278, %v4310
      %v4327 = vadd.f32 %v4279, %v4311
      %v4328 = vadd.f32 %v4280, %v4312
      %v4329 = vadd.f32 %v4281, %v4313
      %v4330 = vadd.f32 %v4282, %v4314
      %v4331 = vadd.f32 %v4283, %v4315
      %4348 = vrot.lane.b32.xlu0 %v2399, 32
      %v4349 = vpop.permute.xlu0 %4348
      %4350 = vrot.lane.b32.xlu0 %v2400, 32
      %v4351 = vpop.permute.xlu0 %4350
      %4352 = vrot.lane.b32.xlu0 %v2401, 32
      %v4353 = vpop.permute.xlu0 %4352
      %4354 = vrot.lane.b32.xlu0 %v2402, 32
      %v4355 = vpop.permute.xlu0 %4354
      %4356 = vrot.lane.b32.xlu0 %v2403, 32
      %v4357 = vpop.permute.xlu0 %4356
      %4358 = vrot.lane.b32.xlu0 %v2404, 32
      %v4359 = vpop.permute.xlu0 %4358
      %4360 = vrot.lane.b32.xlu0 %v2405, 32
      %v4361 = vpop.permute.xlu0 %4360
      %4362 = vrot.lane.b32.xlu0 %v2406, 32
      %v4363 = vpop.permute.xlu0 %4362
      %4364 = vrot.lane.b32.xlu0 %v2407, 32
      %v4365 = vpop.permute.xlu0 %4364
      %4366 = vrot.lane.b32.xlu0 %v2408, 32
      %v4367 = vpop.permute.xlu0 %4366
      %4368 = vrot.lane.b32.xlu0 %v2409, 32
      %v4369 = vpop.permute.xlu0 %4368
      %4370 = vrot.lane.b32.xlu0 %v2410, 32
      %v4371 = vpop.permute.xlu0 %4370
      %4372 = vrot.lane.b32.xlu0 %v2411, 32
      %v4373 = vpop.permute.xlu0 %4372
      %4374 = vrot.lane.b32.xlu0 %v2412, 32
      %v4375 = vpop.permute.xlu0 %4374
      %4376 = vrot.lane.b32.xlu0 %v2413, 32
      %v4377 = vpop.permute.xlu0 %4376
      %4378 = vrot.lane.b32.xlu0 %v2414, 32
      %v4379 = vpop.permute.xlu0 %4378
      %v4396 = vsub.f32 %v4316, %v4349
      %v4397 = vsub.f32 %v4317, %v4351
      %v4398 = vsub.f32 %v4318, %v4353
      %v4399 = vsub.f32 %v4319, %v4355
      %v4400 = vsub.f32 %v4320, %v4357
      %v4401 = vsub.f32 %v4321, %v4359
      %v4402 = vsub.f32 %v4322, %v4361
      %v4403 = vsub.f32 %v4323, %v4363
      %v4404 = vsub.f32 %v4324, %v4365
      %v4405 = vsub.f32 %v4325, %v4367
      %v4406 = vsub.f32 %v4326, %v4369
      %v4407 = vsub.f32 %v4327, %v4371
      %v4408 = vsub.f32 %v4328, %v4373
      %v4409 = vsub.f32 %v4329, %v4375
      %v4410 = vsub.f32 %v4330, %v4377
      %v4411 = vsub.f32 %v4331, %v4379
      %v4412 = vmax.f32 %v4236, %v4396
      %v4413 = vmax.f32 %v4237, %v4397
      %v4414 = vmax.f32 %v4238, %v4398
      %v4415 = vmax.f32 %v4239, %v4399
      %v4416 = vmax.f32 %v4240, %v4400
      %v4417 = vmax.f32 %v4241, %v4401
      %v4418 = vmax.f32 %v4242, %v4402
      %v4419 = vmax.f32 %v4243, %v4403
      %v4420 = vmax.f32 %v4244, %v4404
      %v4421 = vmax.f32 %v4245, %v4405
      %v4422 = vmax.f32 %v4246, %v4406
      %v4423 = vmax.f32 %v4247, %v4407
      %v4424 = vmax.f32 %v4248, %v4408
      %v4425 = vmax.f32 %v4249, %v4409
      %v4426 = vmax.f32 %v4250, %v4410
      %v4427 = vmax.f32 %v4251, %v4411
      %v4428 = vsub.f32 %v4236, %v4412
      %v4429 = vsub.f32 %v4237, %v4413
      %v4430 = vsub.f32 %v4238, %v4414
      %v4431 = vsub.f32 %v4239, %v4415
      %v4432 = vsub.f32 %v4240, %v4416
      %v4433 = vsub.f32 %v4241, %v4417
      %v4434 = vsub.f32 %v4242, %v4418
      %v4435 = vsub.f32 %v4243, %v4419
      %v4436 = vsub.f32 %v4244, %v4420
      %v4437 = vsub.f32 %v4245, %v4421
      %v4438 = vsub.f32 %v4246, %v4422
      %v4439 = vsub.f32 %v4247, %v4423
      %v4440 = vsub.f32 %v4248, %v4424
      %v4441 = vsub.f32 %v4249, %v4425
      %v4442 = vsub.f32 %v4250, %v4426
      %v4443 = vsub.f32 %v4251, %v4427
      %v4444 = vmul.f32 %v4428, 1.442695
      %v4445 = vpow.pop %v4444
      %v4446 = vmul.f32 %v4429, 1.442695
      %v4447 = vpow.pop %v4446
      %v4448 = vmul.f32 %v4430, 1.442695
      %v4449 = vpow.pop %v4448
      %v4450 = vmul.f32 %v4431, 1.442695
      %v4451 = vpow.pop %v4450
      %v4452 = vmul.f32 %v4432, 1.442695
      %v4453 = vpow.pop %v4452
      %v4454 = vmul.f32 %v4433, 1.442695
      %v4455 = vpow.pop %v4454
      %v4456 = vmul.f32 %v4434, 1.442695
      %v4457 = vpow.pop %v4456
      %v4458 = vmul.f32 %v4435, 1.442695
      %v4459 = vpow.pop %v4458
      %v4460 = vmul.f32 %v4436, 1.442695
      %v4461 = vpow.pop %v4460
      %v4462 = vmul.f32 %v4437, 1.442695
      %v4463 = vpow.pop %v4462
      %v4464 = vmul.f32 %v4438, 1.442695
      %v4465 = vpow.pop %v4464
      %v4466 = vmul.f32 %v4439, 1.442695
      %v4467 = vpow.pop %v4466
      %v4468 = vmul.f32 %v4440, 1.442695
      %v4469 = vpow.pop %v4468
      %v4470 = vmul.f32 %v4441, 1.442695
      %v4471 = vpow.pop %v4470
      %v4472 = vmul.f32 %v4442, 1.442695
      %v4473 = vpow.pop %v4472
      %v4474 = vmul.f32 %v4443, 1.442695
      %v4475 = vpow.pop %v4474
      %v4476 = vsub.f32 %v4396, %v4412
      %v4477 = vsub.f32 %v4397, %v4413
      %v4478 = vsub.f32 %v4398, %v4414
      %v4479 = vsub.f32 %v4399, %v4415
      %v4480 = vsub.f32 %v4400, %v4416
      %v4481 = vsub.f32 %v4401, %v4417
      %v4482 = vsub.f32 %v4402, %v4418
      %v4483 = vsub.f32 %v4403, %v4419
      %v4484 = vsub.f32 %v4404, %v4420
      %v4485 = vsub.f32 %v4405, %v4421
      %v4486 = vsub.f32 %v4406, %v4422
      %v4487 = vsub.f32 %v4407, %v4423
      %v4488 = vsub.f32 %v4408, %v4424
      %v4489 = vsub.f32 %v4409, %v4425
      %v4490 = vsub.f32 %v4410, %v4426
      %v4491 = vsub.f32 %v4411, %v4427
      %v4492 = vmul.f32 %v4476, 1.442695
      %v4493 = vpow.pop %v4492
      %v4494 = vmul.f32 %v4477, 1.442695
      %v4495 = vpow.pop %v4494
      %v4496 = vmul.f32 %v4478, 1.442695
      %v4497 = vpow.pop %v4496
      %v4498 = vmul.f32 %v4479, 1.442695
      %v4499 = vpow.pop %v4498
      %v4500 = vmul.f32 %v4480, 1.442695
      %v4501 = vpow.pop %v4500
      %v4502 = vmul.f32 %v4481, 1.442695
      %v4503 = vpow.pop %v4502
      %v4504 = vmul.f32 %v4482, 1.442695
      %v4505 = vpow.pop %v4504
      %v4506 = vmul.f32 %v4483, 1.442695
      %v4507 = vpow.pop %v4506
      %v4508 = vmul.f32 %v4484, 1.442695
      %v4509 = vpow.pop %v4508
      %v4510 = vmul.f32 %v4485, 1.442695
      %v4511 = vpow.pop %v4510
      %v4512 = vmul.f32 %v4486, 1.442695
      %v4513 = vpow.pop %v4512
      %v4514 = vmul.f32 %v4487, 1.442695
      %v4515 = vpow.pop %v4514
      %v4516 = vmul.f32 %v4488, 1.442695
      %v4517 = vpow.pop %v4516
      %v4518 = vmul.f32 %v4489, 1.442695
      %v4519 = vpow.pop %v4518
      %v4520 = vmul.f32 %v4490, 1.442695
      %v4521 = vpow.pop %v4520
      %v4522 = vmul.f32 %v4491, 1.442695
      %v4523 = vpow.pop %v4522
      %v4524 = vadd.f32 %v4445, %v4493
      %v4525 = vadd.f32 %v4447, %v4495
      %v4526 = vadd.f32 %v4449, %v4497
      %v4527 = vadd.f32 %v4451, %v4499
      %v4528 = vadd.f32 %v4453, %v4501
      %v4529 = vadd.f32 %v4455, %v4503
      %v4530 = vadd.f32 %v4457, %v4505
      %v4531 = vadd.f32 %v4459, %v4507
      %v4532 = vadd.f32 %v4461, %v4509
      %v4533 = vadd.f32 %v4463, %v4511
      %v4534 = vadd.f32 %v4465, %v4513
      %v4535 = vadd.f32 %v4467, %v4515
      %v4536 = vadd.f32 %v4469, %v4517
      %v4537 = vadd.f32 %v4471, %v4519
      %v4538 = vadd.f32 %v4473, %v4521
      %v4539 = vadd.f32 %v4475, %v4523
      %v4540 = vlog2.pop %v4524
      %v4541 = vmul.f32 %v4540, 0.6931472
      %v4542 = vlog2.pop %v4525
      %v4543 = vmul.f32 %v4542, 0.6931472
      %v4544 = vlog2.pop %v4526
      %v4545 = vmul.f32 %v4544, 0.6931472
      %v4546 = vlog2.pop %v4527
      %v4547 = vmul.f32 %v4546, 0.6931472
      %v4548 = vlog2.pop %v4528
      %v4549 = vmul.f32 %v4548, 0.6931472
      %v4550 = vlog2.pop %v4529
      %v4551 = vmul.f32 %v4550, 0.6931472
      %v4552 = vlog2.pop %v4530
      %v4553 = vmul.f32 %v4552, 0.6931472
      %v4554 = vlog2.pop %v4531
      %v4555 = vmul.f32 %v4554, 0.6931472
      %v4556 = vlog2.pop %v4532
      %v4557 = vmul.f32 %v4556, 0.6931472
      %v4558 = vlog2.pop %v4533
      %v4559 = vmul.f32 %v4558, 0.6931472
      %v4560 = vlog2.pop %v4534
      %v4561 = vmul.f32 %v4560, 0.6931472
      %v4562 = vlog2.pop %v4535
      %v4563 = vmul.f32 %v4562, 0.6931472
      %v4564 = vlog2.pop %v4536
      %v4565 = vmul.f32 %v4564, 0.6931472
      %v4566 = vlog2.pop %v4537
      %v4567 = vmul.f32 %v4566, 0.6931472
      %v4568 = vlog2.pop %v4538
      %v4569 = vmul.f32 %v4568, 0.6931472
      %v4570 = vlog2.pop %v4539
      %v4571 = vmul.f32 %v4570, 0.6931472
      %v4572 = vadd.f32 %v4412, %v4541
      %v4573 = vadd.f32 %v4413, %v4543
      %v4574 = vadd.f32 %v4414, %v4545
      %v4575 = vadd.f32 %v4415, %v4547
      %v4576 = vadd.f32 %v4416, %v4549
      %v4577 = vadd.f32 %v4417, %v4551
      %v4578 = vadd.f32 %v4418, %v4553
      %v4579 = vadd.f32 %v4419, %v4555
      %v4580 = vadd.f32 %v4420, %v4557
      %v4581 = vadd.f32 %v4421, %v4559
      %v4582 = vadd.f32 %v4422, %v4561
      %v4583 = vadd.f32 %v4423, %v4563
      %v4584 = vadd.f32 %v4424, %v4565
      %v4585 = vadd.f32 %v4425, %v4567
      %v4586 = vadd.f32 %v4426, %v4569
      %v4587 = vadd.f32 %v4427, %v4571
      %v4588 = vadd.f32 %v4152, %v4572
      %v4589 = vadd.f32 %v4153, %v4573
      %v4590 = vadd.f32 %v4154, %v4574
      %v4591 = vadd.f32 %v4155, %v4575
      %v4592 = vadd.f32 %v4156, %v4576
      %v4593 = vadd.f32 %v4157, %v4577
      %v4594 = vadd.f32 %v4158, %v4578
      %v4595 = vadd.f32 %v4159, %v4579
      %v4596 = vadd.f32 %v4160, %v4580
      %v4597 = vadd.f32 %v4161, %v4581
      %v4598 = vadd.f32 %v4162, %v4582
      %v4599 = vadd.f32 %v4163, %v4583
      %v4600 = vadd.f32 %v4164, %v4584
      %v4601 = vadd.f32 %v4165, %v4585
      %v4602 = vadd.f32 %v4166, %v4586
      %v4603 = vadd.f32 %v4167, %v4587
      %v4604 = vsub.f32 0.0, %v2399
      %v4605 = vsub.f32 0.0, %v2400
      %v4606 = vsub.f32 0.0, %v2401
      %v4607 = vsub.f32 0.0, %v2402
      %v4608 = vsub.f32 0.0, %v2403
      %v4609 = vsub.f32 0.0, %v2404
      %v4610 = vsub.f32 0.0, %v2405
      %v4611 = vsub.f32 0.0, %v2406
      %v4612 = vsub.f32 0.0, %v2407
      %v4613 = vsub.f32 0.0, %v2408
      %v4614 = vsub.f32 0.0, %v2409
      %v4615 = vsub.f32 0.0, %v2410
      %v4616 = vsub.f32 0.0, %v2411
      %v4617 = vsub.f32 0.0, %v2412
      %v4618 = vsub.f32 0.0, %v2413
      %v4619 = vsub.f32 0.0, %v2414
      %v4620 = vmax.f32 %v4604, 0.0
      %v4621 = vmax.f32 %v4605, 0.0
      %v4622 = vmax.f32 %v4606, 0.0
      %v4623 = vmax.f32 %v4607, 0.0
      %v4624 = vmax.f32 %v4608, 0.0
      %v4625 = vmax.f32 %v4609, 0.0
      %v4626 = vmax.f32 %v4610, 0.0
      %v4627 = vmax.f32 %v4611, 0.0
      %v4628 = vmax.f32 %v4612, 0.0
      %v4629 = vmax.f32 %v4613, 0.0
      %v4630 = vmax.f32 %v4614, 0.0
      %v4631 = vmax.f32 %v4615, 0.0
      %v4632 = vmax.f32 %v4616, 0.0
      %v4633 = vmax.f32 %v4617, 0.0
      %v4634 = vmax.f32 %v4618, 0.0
      %v4635 = vmax.f32 %v4619, 0.0
      %v4636 = vand.u32 2147483647, %v4604
      %v4637 = vand.u32 2147483647, %v4605
      %v4638 = vand.u32 2147483647, %v4606
      %v4639 = vand.u32 2147483647, %v4607
      %v4640 = vand.u32 2147483647, %v4608
      %v4641 = vand.u32 2147483647, %v4609
      %v4642 = vand.u32 2147483647, %v4610
      %v4643 = vand.u32 2147483647, %v4611
      %v4644 = vand.u32 2147483647, %v4612
      %v4645 = vand.u32 2147483647, %v4613
      %v4646 = vand.u32 2147483647, %v4614
      %v4647 = vand.u32 2147483647, %v4615
      %v4648 = vand.u32 2147483647, %v4616
      %v4649 = vand.u32 2147483647, %v4617
      %v4650 = vand.u32 2147483647, %v4618
      %v4651 = vand.u32 2147483647, %v4619
      %v4652 = vsub.f32 0.0, %v4636
      %v4653 = vsub.f32 0.0, %v4637
      %v4654 = vsub.f32 0.0, %v4638
      %v4655 = vsub.f32 0.0, %v4639
      %v4656 = vsub.f32 0.0, %v4640
      %v4657 = vsub.f32 0.0, %v4641
      %v4658 = vsub.f32 0.0, %v4642
      %v4659 = vsub.f32 0.0, %v4643
      %v4660 = vsub.f32 0.0, %v4644
      %v4661 = vsub.f32 0.0, %v4645
      %v4662 = vsub.f32 0.0, %v4646
      %v4663 = vsub.f32 0.0, %v4647
      %v4664 = vsub.f32 0.0, %v4648
      %v4665 = vsub.f32 0.0, %v4649
      %v4666 = vsub.f32 0.0, %v4650
      %v4667 = vsub.f32 0.0, %v4651
      %v4668 = vmul.f32 %v4652, 1.442695
      %v4669 = vpow.pop %v4668
      %v4670 = vmul.f32 %v4653, 1.442695
      %v4671 = vpow.pop %v4670
      %v4672 = vmul.f32 %v4654, 1.442695
      %v4673 = vpow.pop %v4672
      %v4674 = vmul.f32 %v4655, 1.442695
      %v4675 = vpow.pop %v4674
      %v4676 = vmul.f32 %v4656, 1.442695
      %v4677 = vpow.pop %v4676
      %v4678 = vmul.f32 %v4657, 1.442695
      %v4679 = vpow.pop %v4678
      %v4680 = vmul.f32 %v4658, 1.442695
      %v4681 = vpow.pop %v4680
      %v4682 = vmul.f32 %v4659, 1.442695
      %v4683 = vpow.pop %v4682
      %v4684 = vmul.f32 %v4660, 1.442695
      %v4685 = vpow.pop %v4684
      %v4686 = vmul.f32 %v4661, 1.442695
      %v4687 = vpow.pop %v4686
      %v4688 = vmul.f32 %v4662, 1.442695
      %v4689 = vpow.pop %v4688
      %v4690 = vmul.f32 %v4663, 1.442695
      %v4691 = vpow.pop %v4690
      %v4692 = vmul.f32 %v4664, 1.442695
      %v4693 = vpow.pop %v4692
      %v4694 = vmul.f32 %v4665, 1.442695
      %v4695 = vpow.pop %v4694
      %v4696 = vmul.f32 %v4666, 1.442695
      %v4697 = vpow.pop %v4696
      %v4698 = vmul.f32 %v4667, 1.442695
      %v4699 = vpow.pop %v4698
      %v4700 = vadd.f32 %v4669, 1.0
      %v4701 = vadd.f32 %v4671, 1.0
      %v4702 = vadd.f32 %v4673, 1.0
      %v4703 = vadd.f32 %v4675, 1.0
      %v4704 = vadd.f32 %v4677, 1.0
      %v4705 = vadd.f32 %v4679, 1.0
      %v4706 = vadd.f32 %v4681, 1.0
      %v4707 = vadd.f32 %v4683, 1.0
      %v4708 = vadd.f32 %v4685, 1.0
      %v4709 = vadd.f32 %v4687, 1.0
      %v4710 = vadd.f32 %v4689, 1.0
      %v4711 = vadd.f32 %v4691, 1.0
      %v4712 = vadd.f32 %v4693, 1.0
      %v4713 = vadd.f32 %v4695, 1.0
      %v4714 = vadd.f32 %v4697, 1.0
      %v4715 = vadd.f32 %v4699, 1.0
      %v4716 = vlog2.pop %v4700
      %v4717 = vmul.f32 %v4716, 0.6931472
      %v4718 = vlog2.pop %v4701
      %v4719 = vmul.f32 %v4718, 0.6931472
      %v4720 = vlog2.pop %v4702
      %v4721 = vmul.f32 %v4720, 0.6931472
      %v4722 = vlog2.pop %v4703
      %v4723 = vmul.f32 %v4722, 0.6931472
      %v4724 = vlog2.pop %v4704
      %v4725 = vmul.f32 %v4724, 0.6931472
      %v4726 = vlog2.pop %v4705
      %v4727 = vmul.f32 %v4726, 0.6931472
      %v4728 = vlog2.pop %v4706
      %v4729 = vmul.f32 %v4728, 0.6931472
      %v4730 = vlog2.pop %v4707
      %v4731 = vmul.f32 %v4730, 0.6931472
      %v4732 = vlog2.pop %v4708
      %v4733 = vmul.f32 %v4732, 0.6931472
      %v4734 = vlog2.pop %v4709
      %v4735 = vmul.f32 %v4734, 0.6931472
      %v4736 = vlog2.pop %v4710
      %v4737 = vmul.f32 %v4736, 0.6931472
      %v4738 = vlog2.pop %v4711
      %v4739 = vmul.f32 %v4738, 0.6931472
      %v4740 = vlog2.pop %v4712
      %v4741 = vmul.f32 %v4740, 0.6931472
      %v4742 = vlog2.pop %v4713
      %v4743 = vmul.f32 %v4742, 0.6931472
      %v4744 = vlog2.pop %v4714
      %v4745 = vmul.f32 %v4744, 0.6931472
      %v4746 = vlog2.pop %v4715
      %v4747 = vmul.f32 %v4746, 0.6931472
      %v4748 = vadd.f32 %v4620, %v4717
      %v4749 = vadd.f32 %v4621, %v4719
      %v4750 = vadd.f32 %v4622, %v4721
      %v4751 = vadd.f32 %v4623, %v4723
      %v4752 = vadd.f32 %v4624, %v4725
      %v4753 = vadd.f32 %v4625, %v4727
      %v4754 = vadd.f32 %v4626, %v4729
      %v4755 = vadd.f32 %v4627, %v4731
      %v4756 = vadd.f32 %v4628, %v4733
      %v4757 = vadd.f32 %v4629, %v4735
      %v4758 = vadd.f32 %v4630, %v4737
      %v4759 = vadd.f32 %v4631, %v4739
      %v4760 = vadd.f32 %v4632, %v4741
      %v4761 = vadd.f32 %v4633, %v4743
      %v4762 = vadd.f32 %v4634, %v4745
      %v4763 = vadd.f32 %v4635, %v4747
      %4780 = vrot.lane.b32.xlu0 %v4748, 32
      %v4781 = vpop.permute.xlu0 %4780
      %4782 = vrot.lane.b32.xlu0 %v4749, 32
      %v4783 = vpop.permute.xlu0 %4782
      %4784 = vrot.lane.b32.xlu0 %v4750, 32
      %v4785 = vpop.permute.xlu0 %4784
      %4786 = vrot.lane.b32.xlu0 %v4751, 32
      %v4787 = vpop.permute.xlu0 %4786
      %4788 = vrot.lane.b32.xlu0 %v4752, 32
      %v4789 = vpop.permute.xlu0 %4788
      %4790 = vrot.lane.b32.xlu0 %v4753, 32
      %v4791 = vpop.permute.xlu0 %4790
      %4792 = vrot.lane.b32.xlu0 %v4754, 32
      %v4793 = vpop.permute.xlu0 %4792
      %4794 = vrot.lane.b32.xlu0 %v4755, 32
      %v4795 = vpop.permute.xlu0 %4794
      %4796 = vrot.lane.b32.xlu0 %v4756, 32
      %v4797 = vpop.permute.xlu0 %4796
      %4798 = vrot.lane.b32.xlu0 %v4757, 32
      %v4799 = vpop.permute.xlu0 %4798
      %4800 = vrot.lane.b32.xlu0 %v4758, 32
      %v4801 = vpop.permute.xlu0 %4800
      %4802 = vrot.lane.b32.xlu0 %v4759, 32
      %v4803 = vpop.permute.xlu0 %4802
      %4804 = vrot.lane.b32.xlu0 %v4760, 32
      %v4805 = vpop.permute.xlu0 %4804
      %4806 = vrot.lane.b32.xlu0 %v4761, 32
      %v4807 = vpop.permute.xlu0 %4806
      %4808 = vrot.lane.b32.xlu0 %v4762, 32
      %v4809 = vpop.permute.xlu0 %4808
      %4810 = vrot.lane.b32.xlu0 %v4763, 32
      %v4811 = vpop.permute.xlu0 %4810
      %v4828 = vsub.f32 %v4588, %v4781
      %v4829 = vsub.f32 %v4589, %v4783
      %v4830 = vsub.f32 %v4590, %v4785
      %v4831 = vsub.f32 %v4591, %v4787
      %v4832 = vsub.f32 %v4592, %v4789
      %v4833 = vsub.f32 %v4593, %v4791
      %v4834 = vsub.f32 %v4594, %v4793
      %v4835 = vsub.f32 %v4595, %v4795
      %v4836 = vsub.f32 %v4596, %v4797
      %v4837 = vsub.f32 %v4597, %v4799
      %v4838 = vsub.f32 %v4598, %v4801
      %v4839 = vsub.f32 %v4599, %v4803
      %v4840 = vsub.f32 %v4600, %v4805
      %v4841 = vsub.f32 %v4601, %v4807
      %v4842 = vsub.f32 %v4602, %v4809
      %v4843 = vsub.f32 %v4603, %v4811
      %v4844 = vsub.f32 0.0, %v4828
      %v4845 = vsub.f32 0.0, %v4829
      %v4846 = vsub.f32 0.0, %v4830
      %v4847 = vsub.f32 0.0, %v4831
      %v4848 = vsub.f32 0.0, %v4832
      %v4849 = vsub.f32 0.0, %v4833
      %v4850 = vsub.f32 0.0, %v4834
      %v4851 = vsub.f32 0.0, %v4835
      %v4852 = vsub.f32 0.0, %v4836
      %v4853 = vsub.f32 0.0, %v4837
      %v4854 = vsub.f32 0.0, %v4838
      %v4855 = vsub.f32 0.0, %v4839
      %v4856 = vsub.f32 0.0, %v4840
      %v4857 = vsub.f32 0.0, %v4841
      %v4858 = vsub.f32 0.0, %v4842
      %v4859 = vsub.f32 0.0, %v4843
      %v4860 = vsel %vm658, %v4844, 0.0
      %4861 = vadd.xlane.f32.xlu0 %v4860
      %v4862 = vpop.xlane.xlu0 %4861
      %v4863 = vsel %vm658, %v4845, 0.0
      %4864 = vadd.xlane.f32.xlu0 %v4863
      %v4865 = vpop.xlane.xlu0 %4864
      %v4866 = vsel %vm658, %v4846, 0.0
      %4867 = vadd.xlane.f32.xlu0 %v4866
      %v4868 = vpop.xlane.xlu0 %4867
      %v4869 = vsel %vm658, %v4847, 0.0
      %4870 = vadd.xlane.f32.xlu0 %v4869
      %v4871 = vpop.xlane.xlu0 %4870
      %v4872 = vsel %vm658, %v4848, 0.0
      %4873 = vadd.xlane.f32.xlu0 %v4872
      %v4874 = vpop.xlane.xlu0 %4873
      %v4875 = vsel %vm658, %v4849, 0.0
      %4876 = vadd.xlane.f32.xlu0 %v4875
      %v4877 = vpop.xlane.xlu0 %4876
      %v4878 = vsel %vm658, %v4850, 0.0
      %4879 = vadd.xlane.f32.xlu0 %v4878
      %v4880 = vpop.xlane.xlu0 %4879
      %v4881 = vsel %vm658, %v4851, 0.0
      %4882 = vadd.xlane.f32.xlu0 %v4881
      %v4883 = vpop.xlane.xlu0 %4882
      %v4884 = vsel %vm658, %v4852, 0.0
      %4885 = vadd.xlane.f32.xlu0 %v4884
      %v4886 = vpop.xlane.xlu0 %4885
      %v4887 = vsel %vm658, %v4853, 0.0
      %4888 = vadd.xlane.f32.xlu0 %v4887
      %v4889 = vpop.xlane.xlu0 %4888
      %v4890 = vsel %vm658, %v4854, 0.0
      %4891 = vadd.xlane.f32.xlu0 %v4890
      %v4892 = vpop.xlane.xlu0 %4891
      %v4893 = vsel %vm658, %v4855, 0.0
      %4894 = vadd.xlane.f32.xlu0 %v4893
      %v4895 = vpop.xlane.xlu0 %4894
      %v4896 = vsel %vm658, %v4856, 0.0
      %4897 = vadd.xlane.f32.xlu0 %v4896
      %v4898 = vpop.xlane.xlu0 %4897
      %v4899 = vsel %vm658, %v4857, 0.0
      %4900 = vadd.xlane.f32.xlu0 %v4899
      %v4901 = vpop.xlane.xlu0 %4900
      %v4902 = vsel %vm658, %v4858, 0.0
      %4903 = vadd.xlane.f32.xlu0 %v4902
      %v4904 = vpop.xlane.xlu0 %4903
      %v4905 = vsel %vm658, %v4859, 0.0
      %4906 = vadd.xlane.f32.xlu0 %v4905
      %v4907 = vpop.xlane.xlu0 %4906
      %v4908 = vmul.f32 %v1214, %v1214
      %v4909 = vmul.f32 %v1219, %v1219
      %v4910 = vmul.f32 %v1224, %v1224
      %v4911 = vmul.f32 %v1229, %v1229
      %v4912 = vmul.f32 %v1234, %v1234
      %v4913 = vmul.f32 %v1239, %v1239
      %v4914 = vmul.f32 %v1244, %v1244
      %v4915 = vmul.f32 %v1249, %v1249
      %v4916 = vmul.f32 %v1254, %v1254
      %v4917 = vmul.f32 %v1259, %v1259
      %v4918 = vmul.f32 %v1264, %v1264
      %v4919 = vmul.f32 %v1269, %v1269
      %v4920 = vmul.f32 %v1274, %v1274
      %v4921 = vmul.f32 %v1279, %v1279
      %v4922 = vmul.f32 %v1284, %v1284
      %v4923 = vmul.f32 %v1289, %v1289
      %4940 = vrot.lane.b32.xlu0 %v4908, 16
      %v4941 = vpop.permute.xlu0 %4940
      %4942 = vrot.lane.b32.xlu0 %v4909, 16
      %v4943 = vpop.permute.xlu0 %4942
      %4944 = vrot.lane.b32.xlu0 %v4910, 16
      %v4945 = vpop.permute.xlu0 %4944
      %4946 = vrot.lane.b32.xlu0 %v4911, 16
      %v4947 = vpop.permute.xlu0 %4946
      %4948 = vrot.lane.b32.xlu0 %v4912, 16
      %v4949 = vpop.permute.xlu0 %4948
      %4950 = vrot.lane.b32.xlu0 %v4913, 16
      %v4951 = vpop.permute.xlu0 %4950
      %4952 = vrot.lane.b32.xlu0 %v4914, 16
      %v4953 = vpop.permute.xlu0 %4952
      %4954 = vrot.lane.b32.xlu0 %v4915, 16
      %v4955 = vpop.permute.xlu0 %4954
      %4956 = vrot.lane.b32.xlu0 %v4916, 16
      %v4957 = vpop.permute.xlu0 %4956
      %4958 = vrot.lane.b32.xlu0 %v4917, 16
      %v4959 = vpop.permute.xlu0 %4958
      %4960 = vrot.lane.b32.xlu0 %v4918, 16
      %v4961 = vpop.permute.xlu0 %4960
      %4962 = vrot.lane.b32.xlu0 %v4919, 16
      %v4963 = vpop.permute.xlu0 %4962
      %4964 = vrot.lane.b32.xlu0 %v4920, 16
      %v4965 = vpop.permute.xlu0 %4964
      %4966 = vrot.lane.b32.xlu0 %v4921, 16
      %v4967 = vpop.permute.xlu0 %4966
      %4968 = vrot.lane.b32.xlu0 %v4922, 16
      %v4969 = vpop.permute.xlu0 %4968
      %4970 = vrot.lane.b32.xlu0 %v4923, 16
      %v4971 = vpop.permute.xlu0 %4970
      %v4988 = vadd.f32 %v1324, %v4941
      %v4989 = vadd.f32 %v1325, %v4943
      %v4990 = vadd.f32 %v1326, %v4945
      %v4991 = vadd.f32 %v1327, %v4947
      %v4992 = vadd.f32 %v1328, %v4949
      %v4993 = vadd.f32 %v1329, %v4951
      %v4994 = vadd.f32 %v1330, %v4953
      %v4995 = vadd.f32 %v1331, %v4955
      %v4996 = vadd.f32 %v1332, %v4957
      %v4997 = vadd.f32 %v1333, %v4959
      %v4998 = vadd.f32 %v1334, %v4961
      %v4999 = vadd.f32 %v1335, %v4963
      %v5000 = vadd.f32 %v1336, %v4965
      %v5001 = vadd.f32 %v1337, %v4967
      %v5002 = vadd.f32 %v1338, %v4969
      %v5003 = vadd.f32 %v1339, %v4971
      %v5004 = vsub.f32 %v4988, 1.0
      %v5005 = vsub.f32 %v4989, 1.0
      %v5006 = vsub.f32 %v4990, 1.0
      %v5007 = vsub.f32 %v4991, 1.0
      %v5008 = vsub.f32 %v4992, 1.0
      %v5009 = vsub.f32 %v4993, 1.0
      %v5010 = vsub.f32 %v4994, 1.0
      %v5011 = vsub.f32 %v4995, 1.0
      %v5012 = vsub.f32 %v4996, 1.0
      %v5013 = vsub.f32 %v4997, 1.0
      %v5014 = vsub.f32 %v4998, 1.0
      %v5015 = vsub.f32 %v4999, 1.0
      %v5016 = vsub.f32 %v5000, 1.0
      %v5017 = vsub.f32 %v5001, 1.0
      %v5018 = vsub.f32 %v5002, 1.0
      %v5019 = vsub.f32 %v5003, 1.0
      %v5020 = vlog2.pop %v1324
      %v5021 = vmul.f32 %v5020, 0.6931472
      %v5022 = vlog2.pop %v1325
      %v5023 = vmul.f32 %v5022, 0.6931472
      %v5024 = vlog2.pop %v1326
      %v5025 = vmul.f32 %v5024, 0.6931472
      %v5026 = vlog2.pop %v1327
      %v5027 = vmul.f32 %v5026, 0.6931472
      %v5028 = vlog2.pop %v1328
      %v5029 = vmul.f32 %v5028, 0.6931472
      %v5030 = vlog2.pop %v1329
      %v5031 = vmul.f32 %v5030, 0.6931472
      %v5032 = vlog2.pop %v1330
      %v5033 = vmul.f32 %v5032, 0.6931472
      %v5034 = vlog2.pop %v1331
      %v5035 = vmul.f32 %v5034, 0.6931472
      %v5036 = vlog2.pop %v1332
      %v5037 = vmul.f32 %v5036, 0.6931472
      %v5038 = vlog2.pop %v1333
      %v5039 = vmul.f32 %v5038, 0.6931472
      %v5040 = vlog2.pop %v1334
      %v5041 = vmul.f32 %v5040, 0.6931472
      %v5042 = vlog2.pop %v1335
      %v5043 = vmul.f32 %v5042, 0.6931472
      %v5044 = vlog2.pop %v1336
      %v5045 = vmul.f32 %v5044, 0.6931472
      %v5046 = vlog2.pop %v1337
      %v5047 = vmul.f32 %v5046, 0.6931472
      %v5048 = vlog2.pop %v1338
      %v5049 = vmul.f32 %v5048, 0.6931472
      %v5050 = vlog2.pop %v1339
      %v5051 = vmul.f32 %v5050, 0.6931472
      %v5052 = vsub.f32 %v5004, %v5021
      %v5053 = vsub.f32 %v5005, %v5023
      %v5054 = vsub.f32 %v5006, %v5025
      %v5055 = vsub.f32 %v5007, %v5027
      %v5056 = vsub.f32 %v5008, %v5029
      %v5057 = vsub.f32 %v5009, %v5031
      %v5058 = vsub.f32 %v5010, %v5033
      %v5059 = vsub.f32 %v5011, %v5035
      %v5060 = vsub.f32 %v5012, %v5037
      %v5061 = vsub.f32 %v5013, %v5039
      %v5062 = vsub.f32 %v5014, %v5041
      %v5063 = vsub.f32 %v5015, %v5043
      %v5064 = vsub.f32 %v5016, %v5045
      %v5065 = vsub.f32 %v5017, %v5047
      %v5066 = vsub.f32 %v5018, %v5049
      %v5067 = vsub.f32 %v5019, %v5051
      %v5068 = vmul.f32 %v5052, 0.5
      %v5069 = vmul.f32 %v5053, 0.5
      %v5070 = vmul.f32 %v5054, 0.5
      %v5071 = vmul.f32 %v5055, 0.5
      %v5072 = vmul.f32 %v5056, 0.5
      %v5073 = vmul.f32 %v5057, 0.5
      %v5074 = vmul.f32 %v5058, 0.5
      %v5075 = vmul.f32 %v5059, 0.5
      %v5076 = vmul.f32 %v5060, 0.5
      %v5077 = vmul.f32 %v5061, 0.5
      %v5078 = vmul.f32 %v5062, 0.5
      %v5079 = vmul.f32 %v5063, 0.5
      %v5080 = vmul.f32 %v5064, 0.5
      %v5081 = vmul.f32 %v5065, 0.5
      %v5082 = vmul.f32 %v5066, 0.5
      %v5083 = vmul.f32 %v5067, 0.5
      %5100 = vrot.lane.b32.xlu0 %v5068, 112
      %v5101 = vpop.permute.xlu0 %5100
      %5102 = vrot.lane.b32.xlu0 %v5069, 112
      %v5103 = vpop.permute.xlu0 %5102
      %5104 = vrot.lane.b32.xlu0 %v5070, 112
      %v5105 = vpop.permute.xlu0 %5104
      %5106 = vrot.lane.b32.xlu0 %v5071, 112
      %v5107 = vpop.permute.xlu0 %5106
      %5108 = vrot.lane.b32.xlu0 %v5072, 112
      %v5109 = vpop.permute.xlu0 %5108
      %5110 = vrot.lane.b32.xlu0 %v5073, 112
      %v5111 = vpop.permute.xlu0 %5110
      %5112 = vrot.lane.b32.xlu0 %v5074, 112
      %v5113 = vpop.permute.xlu0 %5112
      %5114 = vrot.lane.b32.xlu0 %v5075, 112
      %v5115 = vpop.permute.xlu0 %5114
      %5116 = vrot.lane.b32.xlu0 %v5076, 112
      %v5117 = vpop.permute.xlu0 %5116
      %5118 = vrot.lane.b32.xlu0 %v5077, 112
      %v5119 = vpop.permute.xlu0 %5118
      %5120 = vrot.lane.b32.xlu0 %v5078, 112
      %v5121 = vpop.permute.xlu0 %5120
      %5122 = vrot.lane.b32.xlu0 %v5079, 112
      %v5123 = vpop.permute.xlu0 %5122
      %5124 = vrot.lane.b32.xlu0 %v5080, 112
      %v5125 = vpop.permute.xlu0 %5124
      %5126 = vrot.lane.b32.xlu0 %v5081, 112
      %v5127 = vpop.permute.xlu0 %5126
      %5128 = vrot.lane.b32.xlu0 %v5082, 112
      %v5129 = vpop.permute.xlu0 %5128
      %5130 = vrot.lane.b32.xlu0 %v5083, 112
      %v5131 = vpop.permute.xlu0 %5130
      %v5148 = vsel %vm1628, %v5101, 0.0
      %5149 = vadd.xlane.f32.xlu0 %v5148
      %v5150 = vpop.xlane.xlu0 %5149
      %v5151 = vsel %vm1628, %v5103, 0.0
      %5152 = vadd.xlane.f32.xlu0 %v5151
      %v5153 = vpop.xlane.xlu0 %5152
      %v5154 = vsel %vm1628, %v5105, 0.0
      %5155 = vadd.xlane.f32.xlu0 %v5154
      %v5156 = vpop.xlane.xlu0 %5155
      %v5157 = vsel %vm1628, %v5107, 0.0
      %5158 = vadd.xlane.f32.xlu0 %v5157
      %v5159 = vpop.xlane.xlu0 %5158
      %v5160 = vsel %vm1628, %v5109, 0.0
      %5161 = vadd.xlane.f32.xlu0 %v5160
      %v5162 = vpop.xlane.xlu0 %5161
      %v5163 = vsel %vm1628, %v5111, 0.0
      %5164 = vadd.xlane.f32.xlu0 %v5163
      %v5165 = vpop.xlane.xlu0 %5164
      %v5166 = vsel %vm1628, %v5113, 0.0
      %5167 = vadd.xlane.f32.xlu0 %v5166
      %v5168 = vpop.xlane.xlu0 %5167
      %v5169 = vsel %vm1628, %v5115, 0.0
      %5170 = vadd.xlane.f32.xlu0 %v5169
      %v5171 = vpop.xlane.xlu0 %5170
      %v5172 = vsel %vm1628, %v5117, 0.0
      %5173 = vadd.xlane.f32.xlu0 %v5172
      %v5174 = vpop.xlane.xlu0 %5173
      %v5175 = vsel %vm1628, %v5119, 0.0
      %5176 = vadd.xlane.f32.xlu0 %v5175
      %v5177 = vpop.xlane.xlu0 %5176
      %v5178 = vsel %vm1628, %v5121, 0.0
      %5179 = vadd.xlane.f32.xlu0 %v5178
      %v5180 = vpop.xlane.xlu0 %5179
      %v5181 = vsel %vm1628, %v5123, 0.0
      %5182 = vadd.xlane.f32.xlu0 %v5181
      %v5183 = vpop.xlane.xlu0 %5182
      %v5184 = vsel %vm1628, %v5125, 0.0
      %5185 = vadd.xlane.f32.xlu0 %v5184
      %v5186 = vpop.xlane.xlu0 %5185
      %v5187 = vsel %vm1628, %v5127, 0.0
      %5188 = vadd.xlane.f32.xlu0 %v5187
      %v5189 = vpop.xlane.xlu0 %5188
      %v5190 = vsel %vm1628, %v5129, 0.0
      %5191 = vadd.xlane.f32.xlu0 %v5190
      %v5192 = vpop.xlane.xlu0 %5191
      %v5193 = vsel %vm1628, %v5131, 0.0
      %5194 = vadd.xlane.f32.xlu0 %v5193
      %v5195 = vpop.xlane.xlu0 %5194
      %v5196 = vlaneseq
      %v5197 = vshrl.u32 %v5196, 7
      %v5198 = vsub.s32 5, %v5197
      %v5199 = vrot.slane %v2783, %v5198
      %5201 = vrot.lane.b32.xlu0 %v5199, 32
      %v5202 = vpop.permute.xlu0 %5201
      %v5204 = vmul.f32 %v2416, %v5202
      %v5205 = vmul.f32 %v2418, %v5202
      %v5206 = vmul.f32 %v2420, %v5202
      %v5207 = vmul.f32 %v2422, %v5202
      %v5208 = vmul.f32 %v2424, %v5202
      %v5209 = vmul.f32 %v2426, %v5202
      %v5210 = vmul.f32 %v2428, %v5202
      %v5211 = vmul.f32 %v2430, %v5202
      %v5212 = vmul.f32 %v2432, %v5202
      %v5213 = vmul.f32 %v2434, %v5202
      %v5214 = vmul.f32 %v2436, %v5202
      %v5215 = vmul.f32 %v2438, %v5202
      %v5216 = vmul.f32 %v2440, %v5202
      %v5217 = vmul.f32 %v2442, %v5202
      %v5218 = vmul.f32 %v2444, %v5202
      %v5219 = vmul.f32 %v2446, %v5202
      %v5220 = vlaneseq
      %v5221 = vshrl.u32 %v5220, 7
      %v5222 = vsub.s32 3, %v5221
      %v5223 = vrot.slane %v2783, %v5222
      %v5224 = vsub.f32 %v2399, %v5223
      %v5225 = vsub.f32 %v2400, %v5223
      %v5226 = vsub.f32 %v2401, %v5223
      %v5227 = vsub.f32 %v2402, %v5223
      %v5228 = vsub.f32 %v2403, %v5223
      %v5229 = vsub.f32 %v2404, %v5223
      %v5230 = vsub.f32 %v2405, %v5223
      %v5231 = vsub.f32 %v2406, %v5223
      %v5232 = vsub.f32 %v2407, %v5223
      %v5233 = vsub.f32 %v2408, %v5223
      %v5234 = vsub.f32 %v2409, %v5223
      %v5235 = vsub.f32 %v2410, %v5223
      %v5236 = vsub.f32 %v2411, %v5223
      %v5237 = vsub.f32 %v2412, %v5223
      %v5238 = vsub.f32 %v2413, %v5223
      %v5239 = vsub.f32 %v2414, %v5223
      %v5240 = vmul.f32 %v5224, %v5199
      %v5241 = vmul.f32 %v5225, %v5199
      %v5242 = vmul.f32 %v5226, %v5199
      %v5243 = vmul.f32 %v5227, %v5199
      %v5244 = vmul.f32 %v5228, %v5199
      %v5245 = vmul.f32 %v5229, %v5199
      %v5246 = vmul.f32 %v5230, %v5199
      %v5247 = vmul.f32 %v5231, %v5199
      %v5248 = vmul.f32 %v5232, %v5199
      %v5249 = vmul.f32 %v5233, %v5199
      %v5250 = vmul.f32 %v5234, %v5199
      %v5251 = vmul.f32 %v5235, %v5199
      %v5252 = vmul.f32 %v5236, %v5199
      %v5253 = vmul.f32 %v5237, %v5199
      %v5254 = vmul.f32 %v5238, %v5199
      %v5255 = vmul.f32 %v5239, %v5199
      %v5256 = vmul.f32 %v5204, %v5204
      %v5257 = vmul.f32 %v5205, %v5205
      %v5258 = vmul.f32 %v5206, %v5206
      %v5259 = vmul.f32 %v5207, %v5207
      %v5260 = vmul.f32 %v5208, %v5208
      %v5261 = vmul.f32 %v5209, %v5209
      %v5262 = vmul.f32 %v5210, %v5210
      %v5263 = vmul.f32 %v5211, %v5211
      %v5264 = vmul.f32 %v5212, %v5212
      %v5265 = vmul.f32 %v5213, %v5213
      %v5266 = vmul.f32 %v5214, %v5214
      %v5267 = vmul.f32 %v5215, %v5215
      %v5268 = vmul.f32 %v5216, %v5216
      %v5269 = vmul.f32 %v5217, %v5217
      %v5270 = vmul.f32 %v5218, %v5218
      %v5271 = vmul.f32 %v5219, %v5219
      %v5272 = vmul.f32 %v5240, %v5240
      %v5273 = vmul.f32 %v5241, %v5241
      %v5274 = vmul.f32 %v5242, %v5242
      %v5275 = vmul.f32 %v5243, %v5243
      %v5276 = vmul.f32 %v5244, %v5244
      %v5277 = vmul.f32 %v5245, %v5245
      %v5278 = vmul.f32 %v5246, %v5246
      %v5279 = vmul.f32 %v5247, %v5247
      %v5280 = vmul.f32 %v5248, %v5248
      %v5281 = vmul.f32 %v5249, %v5249
      %v5282 = vmul.f32 %v5250, %v5250
      %v5283 = vmul.f32 %v5251, %v5251
      %v5284 = vmul.f32 %v5252, %v5252
      %v5285 = vmul.f32 %v5253, %v5253
      %v5286 = vmul.f32 %v5254, %v5254
      %v5287 = vmul.f32 %v5255, %v5255
      %5304 = vrot.lane.b32.xlu0 %v5272, 32
      %v5305 = vpop.permute.xlu0 %5304
      %5306 = vrot.lane.b32.xlu0 %v5273, 32
      %v5307 = vpop.permute.xlu0 %5306
      %5308 = vrot.lane.b32.xlu0 %v5274, 32
      %v5309 = vpop.permute.xlu0 %5308
      %5310 = vrot.lane.b32.xlu0 %v5275, 32
      %v5311 = vpop.permute.xlu0 %5310
      %5312 = vrot.lane.b32.xlu0 %v5276, 32
      %v5313 = vpop.permute.xlu0 %5312
      %5314 = vrot.lane.b32.xlu0 %v5277, 32
      %v5315 = vpop.permute.xlu0 %5314
      %5316 = vrot.lane.b32.xlu0 %v5278, 32
      %v5317 = vpop.permute.xlu0 %5316
      %5318 = vrot.lane.b32.xlu0 %v5279, 32
      %v5319 = vpop.permute.xlu0 %5318
      %5320 = vrot.lane.b32.xlu0 %v5280, 32
      %v5321 = vpop.permute.xlu0 %5320
      %5322 = vrot.lane.b32.xlu0 %v5281, 32
      %v5323 = vpop.permute.xlu0 %5322
      %5324 = vrot.lane.b32.xlu0 %v5282, 32
      %v5325 = vpop.permute.xlu0 %5324
      %5326 = vrot.lane.b32.xlu0 %v5283, 32
      %v5327 = vpop.permute.xlu0 %5326
      %5328 = vrot.lane.b32.xlu0 %v5284, 32
      %v5329 = vpop.permute.xlu0 %5328
      %5330 = vrot.lane.b32.xlu0 %v5285, 32
      %v5331 = vpop.permute.xlu0 %5330
      %5332 = vrot.lane.b32.xlu0 %v5286, 32
      %v5333 = vpop.permute.xlu0 %5332
      %5334 = vrot.lane.b32.xlu0 %v5287, 32
      %v5335 = vpop.permute.xlu0 %5334
      %v5352 = vadd.f32 %v5256, %v5305
      %v5353 = vadd.f32 %v5257, %v5307
      %v5354 = vadd.f32 %v5258, %v5309
      %v5355 = vadd.f32 %v5259, %v5311
      %v5356 = vadd.f32 %v5260, %v5313
      %v5357 = vadd.f32 %v5261, %v5315
      %v5358 = vadd.f32 %v5262, %v5317
      %v5359 = vadd.f32 %v5263, %v5319
      %v5360 = vadd.f32 %v5264, %v5321
      %v5361 = vadd.f32 %v5265, %v5323
      %v5362 = vadd.f32 %v5266, %v5325
      %v5363 = vadd.f32 %v5267, %v5327
      %v5364 = vadd.f32 %v5268, %v5329
      %v5365 = vadd.f32 %v5269, %v5331
      %v5366 = vadd.f32 %v5270, %v5333
      %v5367 = vadd.f32 %v5271, %v5335
      %v5368 = vsub.f32 %v5352, 1.0
      %v5369 = vsub.f32 %v5353, 1.0
      %v5370 = vsub.f32 %v5354, 1.0
      %v5371 = vsub.f32 %v5355, 1.0
      %v5372 = vsub.f32 %v5356, 1.0
      %v5373 = vsub.f32 %v5357, 1.0
      %v5374 = vsub.f32 %v5358, 1.0
      %v5375 = vsub.f32 %v5359, 1.0
      %v5376 = vsub.f32 %v5360, 1.0
      %v5377 = vsub.f32 %v5361, 1.0
      %v5378 = vsub.f32 %v5362, 1.0
      %v5379 = vsub.f32 %v5363, 1.0
      %v5380 = vsub.f32 %v5364, 1.0
      %v5381 = vsub.f32 %v5365, 1.0
      %v5382 = vsub.f32 %v5366, 1.0
      %v5383 = vsub.f32 %v5367, 1.0
      %v5384 = vmul.f32 %v5368, 0.5
      %v5385 = vmul.f32 %v5369, 0.5
      %v5386 = vmul.f32 %v5370, 0.5
      %v5387 = vmul.f32 %v5371, 0.5
      %v5388 = vmul.f32 %v5372, 0.5
      %v5389 = vmul.f32 %v5373, 0.5
      %v5390 = vmul.f32 %v5374, 0.5
      %v5391 = vmul.f32 %v5375, 0.5
      %v5392 = vmul.f32 %v5376, 0.5
      %v5393 = vmul.f32 %v5377, 0.5
      %v5394 = vmul.f32 %v5378, 0.5
      %v5395 = vmul.f32 %v5379, 0.5
      %v5396 = vmul.f32 %v5380, 0.5
      %v5397 = vmul.f32 %v5381, 0.5
      %v5398 = vmul.f32 %v5382, 0.5
      %v5399 = vmul.f32 %v5383, 0.5
      %v5400 = vlaneseq
      %v5401 = vshrl.u32 %v5400, 7
      %v5402 = vsub.s32 6, %v5401
      %v5403 = vrot.slane %v2783, %v5402
      %5405 = vrot.lane.b32.xlu0 %v5403, 32
      %v5406 = vpop.permute.xlu0 %5405
      %v5408 = vsub.f32 %v2399, %v5406
      %v5409 = vsub.f32 %v2400, %v5406
      %v5410 = vsub.f32 %v2401, %v5406
      %v5411 = vsub.f32 %v2402, %v5406
      %v5412 = vsub.f32 %v2403, %v5406
      %v5413 = vsub.f32 %v2404, %v5406
      %v5414 = vsub.f32 %v2405, %v5406
      %v5415 = vsub.f32 %v2406, %v5406
      %v5416 = vsub.f32 %v2407, %v5406
      %v5417 = vsub.f32 %v2408, %v5406
      %v5418 = vsub.f32 %v2409, %v5406
      %v5419 = vsub.f32 %v2410, %v5406
      %v5420 = vsub.f32 %v2411, %v5406
      %v5421 = vsub.f32 %v2412, %v5406
      %v5422 = vsub.f32 %v2413, %v5406
      %v5423 = vsub.f32 %v2414, %v5406
      %v5424 = vsub.f32 %v5384, %v5408
      %v5425 = vsub.f32 %v5385, %v5409
      %v5426 = vsub.f32 %v5386, %v5410
      %v5427 = vsub.f32 %v5387, %v5411
      %v5428 = vsub.f32 %v5388, %v5412
      %v5429 = vsub.f32 %v5389, %v5413
      %v5430 = vsub.f32 %v5390, %v5414
      %v5431 = vsub.f32 %v5391, %v5415
      %v5432 = vsub.f32 %v5392, %v5416
      %v5433 = vsub.f32 %v5393, %v5417
      %v5434 = vsub.f32 %v5394, %v5418
      %v5435 = vsub.f32 %v5395, %v5419
      %v5436 = vsub.f32 %v5396, %v5420
      %v5437 = vsub.f32 %v5397, %v5421
      %v5438 = vsub.f32 %v5398, %v5422
      %v5439 = vsub.f32 %v5399, %v5423
      %5456 = vrot.lane.b32.xlu0 %v5424, 96
      %v5457 = vpop.permute.xlu0 %5456
      %5458 = vrot.lane.b32.xlu0 %v5425, 96
      %v5459 = vpop.permute.xlu0 %5458
      %5460 = vrot.lane.b32.xlu0 %v5426, 96
      %v5461 = vpop.permute.xlu0 %5460
      %5462 = vrot.lane.b32.xlu0 %v5427, 96
      %v5463 = vpop.permute.xlu0 %5462
      %5464 = vrot.lane.b32.xlu0 %v5428, 96
      %v5465 = vpop.permute.xlu0 %5464
      %5466 = vrot.lane.b32.xlu0 %v5429, 96
      %v5467 = vpop.permute.xlu0 %5466
      %5468 = vrot.lane.b32.xlu0 %v5430, 96
      %v5469 = vpop.permute.xlu0 %5468
      %5470 = vrot.lane.b32.xlu0 %v5431, 96
      %v5471 = vpop.permute.xlu0 %5470
      %5472 = vrot.lane.b32.xlu0 %v5432, 96
      %v5473 = vpop.permute.xlu0 %5472
      %5474 = vrot.lane.b32.xlu0 %v5433, 96
      %v5475 = vpop.permute.xlu0 %5474
      %5476 = vrot.lane.b32.xlu0 %v5434, 96
      %v5477 = vpop.permute.xlu0 %5476
      %5478 = vrot.lane.b32.xlu0 %v5435, 96
      %v5479 = vpop.permute.xlu0 %5478
      %5480 = vrot.lane.b32.xlu0 %v5436, 96
      %v5481 = vpop.permute.xlu0 %5480
      %5482 = vrot.lane.b32.xlu0 %v5437, 96
      %v5483 = vpop.permute.xlu0 %5482
      %5484 = vrot.lane.b32.xlu0 %v5438, 96
      %v5485 = vpop.permute.xlu0 %5484
      %5486 = vrot.lane.b32.xlu0 %v5439, 96
      %v5487 = vpop.permute.xlu0 %5486
      %v5504 = vsel %vm658, %v5457, 0.0
      %5505 = vadd.xlane.f32.xlu0 %v5504
      %v5506 = vpop.xlane.xlu0 %5505
      %v5507 = vsel %vm658, %v5459, 0.0
      %5508 = vadd.xlane.f32.xlu0 %v5507
      %v5509 = vpop.xlane.xlu0 %5508
      %v5510 = vsel %vm658, %v5461, 0.0
      %5511 = vadd.xlane.f32.xlu0 %v5510
      %v5512 = vpop.xlane.xlu0 %5511
      %v5513 = vsel %vm658, %v5463, 0.0
      %5514 = vadd.xlane.f32.xlu0 %v5513
      %v5515 = vpop.xlane.xlu0 %5514
      %v5516 = vsel %vm658, %v5465, 0.0
      %5517 = vadd.xlane.f32.xlu0 %v5516
      %v5518 = vpop.xlane.xlu0 %5517
      %v5519 = vsel %vm658, %v5467, 0.0
      %5520 = vadd.xlane.f32.xlu0 %v5519
      %v5521 = vpop.xlane.xlu0 %5520
      %v5522 = vsel %vm658, %v5469, 0.0
      %5523 = vadd.xlane.f32.xlu0 %v5522
      %v5524 = vpop.xlane.xlu0 %5523
      %v5525 = vsel %vm658, %v5471, 0.0
      %5526 = vadd.xlane.f32.xlu0 %v5525
      %v5527 = vpop.xlane.xlu0 %5526
      %v5528 = vsel %vm658, %v5473, 0.0
      %5529 = vadd.xlane.f32.xlu0 %v5528
      %v5530 = vpop.xlane.xlu0 %5529
      %v5531 = vsel %vm658, %v5475, 0.0
      %5532 = vadd.xlane.f32.xlu0 %v5531
      %v5533 = vpop.xlane.xlu0 %5532
      %v5534 = vsel %vm658, %v5477, 0.0
      %5535 = vadd.xlane.f32.xlu0 %v5534
      %v5536 = vpop.xlane.xlu0 %5535
      %v5537 = vsel %vm658, %v5479, 0.0
      %5538 = vadd.xlane.f32.xlu0 %v5537
      %v5539 = vpop.xlane.xlu0 %5538
      %v5540 = vsel %vm658, %v5481, 0.0
      %5541 = vadd.xlane.f32.xlu0 %v5540
      %v5542 = vpop.xlane.xlu0 %5541
      %v5543 = vsel %vm658, %v5483, 0.0
      %5544 = vadd.xlane.f32.xlu0 %v5543
      %v5545 = vpop.xlane.xlu0 %5544
      %v5546 = vsel %vm658, %v5485, 0.0
      %5547 = vadd.xlane.f32.xlu0 %v5546
      %v5548 = vpop.xlane.xlu0 %5547
      %v5549 = vsel %vm658, %v5487, 0.0
      %5550 = vadd.xlane.f32.xlu0 %v5549
      %v5551 = vpop.xlane.xlu0 %5550
      %vm5552 = vcmask 7168
      %v5553 = vsel %vm5552, %v4862, %v5150
      %v5554 = vsel %vm5552, %v4865, %v5153
      %v5555 = vsel %vm5552, %v4868, %v5156
      %v5556 = vsel %vm5552, %v4871, %v5159
      %v5557 = vsel %vm5552, %v4874, %v5162
      %v5558 = vsel %vm5552, %v4877, %v5165
      %v5559 = vsel %vm5552, %v4880, %v5168
      %v5560 = vsel %vm5552, %v4883, %v5171
      %v5561 = vsel %vm5552, %v4886, %v5174
      %v5562 = vsel %vm5552, %v4889, %v5177
      %v5563 = vsel %vm5552, %v4892, %v5180
      %v5564 = vsel %vm5552, %v4895, %v5183
      %v5565 = vsel %vm5552, %v4898, %v5186
      %v5566 = vsel %vm5552, %v4901, %v5189
      %v5567 = vsel %vm5552, %v4904, %v5192
      %v5568 = vsel %vm5552, %v4907, %v5195
      %vm5569 = vcmask 15360
      %v5570 = vsel %vm5569, %v5553, %v5506
      %v5571 = vsel %vm5569, %v5554, %v5509
      %v5572 = vsel %vm5569, %v5555, %v5512
      %v5573 = vsel %vm5569, %v5556, %v5515
      %v5574 = vsel %vm5569, %v5557, %v5518
      %v5575 = vsel %vm5569, %v5558, %v5521
      %v5576 = vsel %vm5569, %v5559, %v5524
      %v5577 = vsel %vm5569, %v5560, %v5527
      %v5578 = vsel %vm5569, %v5561, %v5530
      %v5579 = vsel %vm5569, %v5562, %v5533
      %v5580 = vsel %vm5569, %v5563, %v5536
      %v5581 = vsel %vm5569, %v5564, %v5539
      %v5582 = vsel %vm5569, %v5565, %v5542
      %v5583 = vsel %vm5569, %v5566, %v5545
      %v5584 = vsel %vm5569, %v5567, %v5548
      %v5585 = vsel %vm5569, %v5568, %v5551
      %vm5586 = vcmask 23552
      %v5587 = vsel %vm5586, %v5570, 0.0
      %v5588 = vsel %vm5586, %v5571, 0.0
      %v5589 = vsel %vm5586, %v5572, 0.0
      %v5590 = vsel %vm5586, %v5573, 0.0
      %v5591 = vsel %vm5586, %v5574, 0.0
      %v5592 = vsel %vm5586, %v5575, 0.0
      %v5593 = vsel %vm5586, %v5576, 0.0
      %v5594 = vsel %vm5586, %v5577, 0.0
      %v5595 = vsel %vm5586, %v5578, 0.0
      %v5596 = vsel %vm5586, %v5579, 0.0
      %v5597 = vsel %vm5586, %v5580, 0.0
      %v5598 = vsel %vm5586, %v5581, 0.0
      %v5599 = vsel %vm5586, %v5582, 0.0
      %v5600 = vsel %vm5586, %v5583, 0.0
      %v5601 = vsel %vm5586, %v5584, 0.0
      %v5602 = vsel %vm5586, %v5585, 0.0
      %vm5603 = vcmask 64512
      %5604 = vst.msk [vmem:[%s575] sm:$0xff] %vm5603, %v5587
      %5605 = vst.msk [vmem:[%s575 + $0x8] sm:$0xff] %vm5603, %v5588
      %5606 = vst.msk [vmem:[%s575 + $0x10] sm:$0xff] %vm5603, %v5589
      %5607 = vst.msk [vmem:[%s575 + $0x18] sm:$0xff] %vm5603, %v5590
      %5608 = vst.msk [vmem:[%s575 + $0x20] sm:$0xff] %vm5603, %v5591
      %5609 = vst.msk [vmem:[%s575 + $0x28] sm:$0xff] %vm5603, %v5592
      %5610 = vst.msk [vmem:[%s575 + $0x30] sm:$0xff] %vm5603, %v5593
      %5611 = vst.msk [vmem:[%s575 + $0x38] sm:$0xff] %vm5603, %v5594
      %5612 = vst.msk [vmem:[%s575 + $0x40] sm:$0xff] %vm5603, %v5595
      %5613 = vst.msk [vmem:[%s575 + $0x48] sm:$0xff] %vm5603, %v5596
      %5614 = vst.msk [vmem:[%s575 + $0x50] sm:$0xff] %vm5603, %v5597
      %5615 = vst.msk [vmem:[%s575 + $0x58] sm:$0xff] %vm5603, %v5598
      %5616 = vst.msk [vmem:[%s575 + $0x60] sm:$0xff] %vm5603, %v5599
      %5617 = vst.msk [vmem:[%s575 + $0x68] sm:$0xff] %vm5603, %v5600
      %5618 = vst.msk [vmem:[%s575 + $0x70] sm:$0xff] %vm5603, %v5601
      %5619 = vst.msk [vmem:[%s575 + $0x78] sm:$0xff] %vm5603, %v5602
      %s5620 = smul.u32 16, %s28
      %p5621 = scmp.lt.s32.totalorder %s5620, 31
      %s5622 = scalar_select %p5621, %s5620, 31
      %s5623 = smul.addr %s5622, 8
      %s5624 = scalar_lea.vmem %s15, %s5623
      %s5625 = smul.u32 16, %s28
      %p5626 = scmp.lt.s32.totalorder %s5625, 31
      %s5627 = scalar_select %p5626, %s5625, 31
      %s5628 = smul.addr %s5627, 8
      %s5629 = scalar_lea.vmem %s16, %s5628
      // Predicated region
      $region81: #{tpu_custom_call.1} parent=79 // pred_check
        %p5630 = pneg %p376
      $region82: #{tpu_custom_call.1} parent=79 // pred_check_branch
        %5632 = sbr.rel (%p5630) target = $region84
      $region83: #{tpu_custom_call.1} parent=79 // pred_region
        %s5633 = smul.u32 16, %s28
      $region84: #{tpu_custom_call.1} parent=79 // pred_fallthru
        _
      // Predicated region
      $region85: #{tpu_custom_call.1} parent=79 // pred_check
        %p5634 = pneg %p402
      $region86: #{tpu_custom_call.1} parent=79 // pred_check_branch
        %5636 = sbr.rel (%p5634) target = $region88
      $region87: #{tpu_custom_call.1} parent=79 // pred_region
        %s5637 = smul.u32 16, %s28
      $region88: #{tpu_custom_call.1} parent=79 // pred_fallthru
        _
    $region80: #{tpu_custom_call.1} parent=5 // pred_fallthru
      _
    %p5638 = scmp.le.s32.totalorder 2, %s23
    // Predicated region
    $region89: #{tpu_custom_call.1} parent=5 // pred_check
      %p5639 = pneg %p5638
    $region90: #{tpu_custom_call.1} parent=5 // pred_check_branch
      %5641 = sbr.rel (%p5639) target = $region92
    $region91: #{tpu_custom_call.1} parent=5 // pred_region
      %s5642 = ssub.s32 %s23, 2
      // Predicated region
      $region93: #{tpu_custom_call.1} parent=91 // pred_check
        %p5643 = pneg %p382
      $region94: #{tpu_custom_call.1} parent=91 // pred_check_branch
        %5645 = sbr.rel (%p5643) target = $region96
      $region95: #{tpu_custom_call.1} parent=91 // pred_region
        %s5646 = smul.u32 16, %s29
        %p5647 = scmp.lt.s32.totalorder %s5646, 31
        %s5648 = scalar_select %p5647, %s5646, 31
        %s5649 = smul.addr %s5648, 8
        %s5650 = scalar_lea.vmem %s15, %s5649
      $region96: #{tpu_custom_call.1} parent=91 // pred_fallthru
        _
      // Predicated region
      $region97: #{tpu_custom_call.1} parent=91 // pred_check
        %p5651 = pneg %p408
      $region98: #{tpu_custom_call.1} parent=91 // pred_check_branch
        %5653 = sbr.rel (%p5651) target = $region100
      $region99: #{tpu_custom_call.1} parent=91 // pred_region
        %s5654 = smul.u32 16, %s29
        %p5655 = scmp.lt.s32.totalorder %s5654, 31
        %s5656 = scalar_select %p5655, %s5654, 31
        %s5657 = smul.addr %s5656, 8
        %s5658 = scalar_lea.vmem %s16, %s5657
      $region100: #{tpu_custom_call.1} parent=91 // pred_fallthru
        _
    $region92: #{tpu_custom_call.1} parent=5 // pred_fallthru
      _
  $region6: #{tpu_custom_call.1} parent=0 // loop_footer
    %s27 = sadd.s32 1, %s23
  $region7: #{tpu_custom_call.1} parent=0 // loop_footer_branch
    %22 = sbr.rel target = $region3
  $region8: #{tpu_custom_call.1} parent=0 // loop_exit
    _

</llo_original>
